<compile_context>
chip_gen: v6e
topology: v6e:2x2x1
jax: 0.10.0
libtpu: 0.0.40
codegen_flags: <defaults>
</compile_context>

<pallas_src>
import jax
import jax.numpy as jnp
from jax.experimental import pallas as pl
from jax.experimental.pallas import tpu as pltpu

EMBED = 768
NUM_FILTERS = 256
KERNEL_SIZES = (2, 3, 4)
NUM_CLASSES = 4
FEAT_DIM = NUM_FILTERS * len(KERNEL_SIZES)          # 768
TOTAL_COLS = NUM_FILTERS * sum(KERNEL_SIZES)        # 2304


def _round_up(x, m):
    return ((x + m - 1) // m) * m


def _choose_b_tile(B, Lp):
    """Pick a batch tile that keeps the per-step VMEM footprint modest (~12 MiB)."""
    per_row = Lp * (2 * EMBED * 2           # x tile, bf16, double-buffered
                    + TOTAL_COLS * 4        # y slab, f32
                    + 4 * NUM_FILTERS * 4)  # shift-add temporaries, f32
    budget = 12 * (1 << 20)
    bt = max(1, budget // per_row)
    if bt >= B:
        return int(B)                       # single batch block (== full dim)
    return int(max(8, (bt // 8) * 8))       # multiple of 8 (output sublane constraint)


def _make_kernel(t_valid):
    """t_valid: static tuple of valid conv-output lengths (L - k + 1) per kernel size."""

    def kernel(x_ref, wslab_ref, bconv_ref, wfc_ref, bfc_ref, out_ref):
        Bt, Lp, E = x_ref.shape

        # One big MXU matmul: (Bt*Lp, 768) @ (768, 2304), bf16 in, f32 accumulate.
        x2d = x_ref[...].reshape(Bt * Lp, E)
        y = jnp.dot(x2d, wslab_ref[...], preferred_element_type=jnp.float32)
        y = y.reshape(Bt, Lp, TOTAL_COLS)

        bconv = bconv_ref[...]              # (1, 768)  f32
        wfc = wfc_ref[...]                  # (768, 4)  f32
        logits = bfc_ref[...]               # (1, 4)    f32 (broadcasts over Bt)

        col = 0
        for ki, k in enumerate(KERNEL_SIZES):
            T = t_valid[ki]
            # Shift-add the per-offset partial products: conv output for window size k.
            acc = y[:, 0:T, col:col + NUM_FILTERS]
            for dk in range(1, k):
                acc = acc + y[:, dk:dk + T,
                              col + dk * NUM_FILTERS: col + (dk + 1) * NUM_FILTERS]
            col += k * NUM_FILTERS

            acc = acc + bconv[:, ki * NUM_FILTERS:(ki + 1) * NUM_FILTERS][:, None, :]
            acc = jnp.maximum(acc, 0.0)                       # ReLU (f32, VPU)
            pooled = jnp.max(acc, axis=1)                     # global max-pool -> (Bt, 256)

            # FC as a row-slice dot (avoids in-kernel concat of the pooled features).
            logits = logits + jnp.dot(
                pooled, wfc[ki * NUM_FILTERS:(ki + 1) * NUM_FILTERS, :],
                preferred_element_type=jnp.float32)

        # Softmax over classes (f32).
        m = jnp.max(logits, axis=1, keepdims=True)
        e = jnp.exp(logits - m)
        out_ref[...] = (e / jnp.sum(e, axis=1, keepdims=True)).astype(out_ref.dtype)

    return kernel


def init_params(key):
    """Deterministic init mimicking PyTorch default uniform(-1/sqrt(fan_in), ...)."""
    params = {'convs': [], 'fc': None}
    for k in KERNEL_SIZES:
        key, k1, k2 = jax.random.split(key, 3)
        fan_in = 1 * k * EMBED
        bound = 1.0 / float(fan_in) ** 0.5
        w = jax.random.uniform(k1, (NUM_FILTERS, 1, k, EMBED), jnp.float32,
                               minval=-bound, maxval=bound)
        b = jax.random.uniform(k2, (NUM_FILTERS,), jnp.float32,
                               minval=-bound, maxval=bound)
        params['convs'].append((w, b))
    key, k1, k2 = jax.random.split(key, 3)
    fan_in = FEAT_DIM
    bound = 1.0 / float(fan_in) ** 0.5
    wfc = jax.random.uniform(k1, (NUM_CLASSES, fan_in), jnp.float32,
                             minval=-bound, maxval=bound)
    bfc = jax.random.uniform(k2, (NUM_CLASSES,), jnp.float32,
                             minval=-bound, maxval=bound)
    params['fc'] = (wfc, bfc)
    return params


def textcnn_forward(x, params):
    """x: (B, L, 768) float32 (== the PyTorch input BEFORE .unsqueeze(1))."""
    B, L, E = x.shape
    assert E == EMBED and L >= max(KERNEL_SIZES)

    # --- one-time weight prep (pure-JAX glue) ---
    # W_slab columns grouped [k][dk], each 256 wide:
    #   y[b, t, grp(k,dk)*256 + c] = sum_e x[b, t, e] * W_k[c, 0, dk, e]
    slabs, biases = [], []
    for k, (w, b) in zip(KERNEL_SIZES, params['convs']):
        for dk in range(k):
            slabs.append(jnp.transpose(w[:, 0, dk, :]))          # (E, C)
        biases.append(b)
    w_slab = jnp.concatenate(slabs, axis=1).astype(jnp.bfloat16)  # (768, 2304)
    b_conv = jnp.concatenate(biases).reshape(1, FEAT_DIM).astype(jnp.float32)

    wfc, bfc = params['fc']
    wfc_t = jnp.transpose(wfc).astype(jnp.float32)                # (768, 4)
    bfc_r = bfc.reshape(1, NUM_CLASSES).astype(jnp.float32)

    # --- activation prep: bf16, pad L to sublane multiple, tile/pad the batch ---
    Lp = _round_up(L, 8)
    x_bf = x.astype(jnp.bfloat16)
    if Lp != L:
        x_bf = jnp.pad(x_bf, ((0, 0), (0, Lp - L), (0, 0)))

    B_tile = _choose_b_tile(B, Lp)
    B_pad = _round_up(B, B_tile)
    if B_pad != B:
        x_bf = jnp.pad(x_bf, ((0, B_pad - B), (0, 0), (0, 0)))

    grid = (B_pad // B_tile,)
    t_valid = tuple(L - k + 1 for k in KERNEL_SIZES)

    # VMEM budget: activation tile (x2 buffers) + resident weights + f32 intermediates.
    vmem_est = (2 * B_tile * Lp * EMBED * 2
                + 2 * EMBED * TOTAL_COLS * 2
                + B_tile * Lp * TOTAL_COLS * 4
                + 4 * B_tile * Lp * NUM_FILTERS * 4)
    vmem_limit = int(min(48 * (1 << 20), max(24 * (1 << 20), 2 * vmem_est)))

    out = pl.pallas_call(
        _make_kernel(t_valid),
        out_shape=jax.ShapeDtypeStruct((B_pad, NUM_CLASSES), jnp.float32),
        grid=grid,
        in_specs=[
            pl.BlockSpec((B_tile, Lp, EMBED), lambda i: (i, 0, 0)),   # activation tile
            pl.BlockSpec((EMBED, TOTAL_COLS), lambda i: (0, 0)),      # conv weight slab (resident)
            pl.BlockSpec((1, FEAT_DIM), lambda i: (0, 0)),            # conv biases   (resident)
            pl.BlockSpec((FEAT_DIM, NUM_CLASSES), lambda i: (0, 0)),  # FC weight     (resident)
            pl.BlockSpec((1, NUM_CLASSES), lambda i: (0, 0)),         # FC bias       (resident)
        ],
        out_specs=pl.BlockSpec((B_tile, NUM_CLASSES), lambda i: (i, 0)),
        compiler_params=pltpu.CompilerParams(
            dimension_semantics=("parallel",),
            vmem_limit_bytes=vmem_limit),
    )(x_bf, w_slab, b_conv, wfc_t, bfc_r)

    return out[:B]


def reference_forward(x, params):
    """Pure-JAX f32 reference matching the PyTorch module."""
    B, L, _ = x.shape
    feats = []
    for k, (w, b) in zip(KERNEL_SIZES, params['convs']):
        T = L - k + 1
        w2 = w[:, 0].reshape(NUM_FILTERS, k * EMBED)                 # (C, k*E)
        win = jnp.stack([x[:, dk:dk + T] for dk in range(k)], axis=2)
        win = win.reshape(B, T, k * EMBED)
        y = jnp.einsum('btk,ck->btc', win, w2) + b
        y = jnp.maximum(y, 0.0)
        feats.append(jnp.max(y, axis=1))
    feat = jnp.concatenate(feats, axis=1)
    wfc, bfc = params['fc']
    logits = feat @ wfc.T + bfc
    return jax.nn.softmax(logits, axis=1)


if __name__ == "__main__":
    key = jax.random.PRNGKey(0)
    pkey, xkey = jax.random.split(key)
    params = init_params(pkey)

    B, L = 2, 8                                          # small seq length, embed fixed at 768
    x = jax.random.normal(xkey, (B, L, EMBED), jnp.float32)

    out = jax.block_until_ready(textcnn_forward(x, params))
    assert out.shape == (B, NUM_CLASSES)
    assert bool(jnp.all(jnp.isfinite(out)))

    ref = jax.block_until_ready(reference_forward(x, params))
    assert bool(jnp.allclose(out, ref, atol=5e-2, rtol=5e-2)), "mismatch vs f32 reference"

    print("KERNEL_OK")
</pallas_src>

<mosaic_0001>
module attributes {stable_mosaic.version = 11 : i64} {
  func.func @kernel(%arg0: i32, %arg1: memref<2x8x768xbf16, #tpu.memory_space<vmem>>, %arg2: memref<768x2304xbf16, #tpu.memory_space<vmem>>, %arg3: memref<1x768xf32, #tpu.memory_space<vmem>>, %arg4: memref<768x4xf32, #tpu.memory_space<vmem>>, %arg5: memref<1x4xf32, #tpu.memory_space<vmem>>, %arg6: memref<2x4xf32, #tpu.memory_space<vmem>>) attributes {dimension_semantics = [#tpu.dimension_semantics<parallel>], iteration_bounds = array<i64: 1>, scalar_prefetch = 0 : i64, scratch_operands = 0 : i64, tpu.core_type = #tpu.core_type<tc>, window_params = [{transform_indices = @transform_0, window_bounds = array<i64: 2, 8, 768>}, {pipeline_mode = #tpu.pipeline_mode<synchronous>, transform_indices = @transform_1, window_bounds = array<i64: 768, 2304>}, {pipeline_mode = #tpu.pipeline_mode<synchronous>, transform_indices = @transform_2, window_bounds = array<i64: 1, 768>}, {pipeline_mode = #tpu.pipeline_mode<synchronous>, transform_indices = @transform_3, window_bounds = array<i64: 768, 4>}, {pipeline_mode = #tpu.pipeline_mode<synchronous>, transform_indices = @transform_4, window_bounds = array<i64: 1, 4>}, {transform_indices = @transform_5, window_bounds = array<i64: 2, 4>}]} {
    %c0 = arith.constant 0 : index
    %c0_0 = arith.constant 0 : index
    %c0_1 = arith.constant 0 : index
    %0 = vector.load %arg1[%c0, %c0_0, %c0_1] : memref<2x8x768xbf16, #tpu.memory_space<vmem>>, vector<2x8x768xbf16>
    %1 = vector.shape_cast %0 : vector<2x8x768xbf16> to vector<16x768xbf16>
    %c0_2 = arith.constant 0 : index
    %c0_3 = arith.constant 0 : index
    %2 = vector.load %arg2[%c0_2, %c0_3] : memref<768x2304xbf16, #tpu.memory_space<vmem>>, vector<768x2304xbf16>
    %cst = arith.constant dense<0.000000e+00> : vector<16x2304xf32>
    %3 = tpu.matmul %1, %2, %cst {dimension_numbers = #tpu.dot_dimension_numbers<[1], [0], [0], [1], [0, 0, 1, 1], [], []>} : vector<16x768xbf16>, vector<768x2304xbf16>, vector<16x2304xf32> -> vector<16x2304xf32>
    %4 = vector.shape_cast %3 : vector<16x2304xf32> to vector<2x8x2304xf32>
    %c0_4 = arith.constant 0 : index
    %c0_5 = arith.constant 0 : index
    %5 = vector.load %arg3[%c0_4, %c0_5] : memref<1x768xf32, #tpu.memory_space<vmem>>, vector<1x768xf32>
    %c0_6 = arith.constant 0 : index
    %c0_7 = arith.constant 0 : index
    %6 = vector.load %arg4[%c0_6, %c0_7] : memref<768x4xf32, #tpu.memory_space<vmem>>, vector<768x4xf32>
    %c0_8 = arith.constant 0 : index
    %c0_9 = arith.constant 0 : index
    %7 = vector.load %arg5[%c0_8, %c0_9] : memref<1x4xf32, #tpu.memory_space<vmem>>, vector<1x4xf32>
    %8 = vector.extract_strided_slice %4 {offsets = [0, 0, 0], sizes = [2, 7, 256], strides = [1, 1, 1]} : vector<2x8x2304xf32> to vector<2x7x256xf32>
    %9 = vector.extract_strided_slice %4 {offsets = [0, 1, 256], sizes = [2, 7, 256], strides = [1, 1, 1]} : vector<2x8x2304xf32> to vector<2x7x256xf32>
    %10 = arith.addf %8, %9 : vector<2x7x256xf32>
    %11 = vector.extract_strided_slice %5 {offsets = [0, 0], sizes = [1, 256], strides = [1, 1]} : vector<1x768xf32> to vector<1x256xf32>
    %12 = vector.shape_cast %11 : vector<1x256xf32> to vector<1x1x256xf32>
    %13 = vector.broadcast %12 : vector<1x1x256xf32> to vector<2x7x256xf32>
    %14 = arith.addf %10, %13 : vector<2x7x256xf32>
    %cst_10 = arith.constant 0.000000e+00 : f32
    %15 = vector.broadcast %cst_10 : f32 to vector<2x7x256xf32>
    %16 = arith.maximumf %14, %15 : vector<2x7x256xf32>
    %cst_11 = arith.constant dense<0xFF800000> : vector<2x256xf32>
    %17 = vector.multi_reduction <maximumf>, %16, %cst_11 [1] : vector<2x7x256xf32> to vector<2x256xf32>
    %18 = vector.extract_strided_slice %6 {offsets = [0, 0], sizes = [256, 4], strides = [1, 1]} : vector<768x4xf32> to vector<256x4xf32>
    %cst_12 = arith.constant dense<0.000000e+00> : vector<2x4xf32>
    %19 = tpu.matmul %17, %18, %cst_12 {dimension_numbers = #tpu.dot_dimension_numbers<[1], [0], [0], [1], [0, 0, 1, 1], [], []>} : vector<2x256xf32>, vector<256x4xf32>, vector<2x4xf32> -> vector<2x4xf32>
    %20 = vector.broadcast %7 : vector<1x4xf32> to vector<2x4xf32>
    %21 = arith.addf %20, %19 : vector<2x4xf32>
    %22 = vector.extract_strided_slice %4 {offsets = [0, 0, 512], sizes = [2, 6, 256], strides = [1, 1, 1]} : vector<2x8x2304xf32> to vector<2x6x256xf32>
    %23 = vector.extract_strided_slice %4 {offsets = [0, 1, 768], sizes = [2, 6, 256], strides = [1, 1, 1]} : vector<2x8x2304xf32> to vector<2x6x256xf32>
    %24 = arith.addf %22, %23 : vector<2x6x256xf32>
    %25 = vector.extract_strided_slice %4 {offsets = [0, 2, 1024], sizes = [2, 6, 256], strides = [1, 1, 1]} : vector<2x8x2304xf32> to vector<2x6x256xf32>
    %26 = arith.addf %24, %25 : vector<2x6x256xf32>
    %27 = vector.extract_strided_slice %5 {offsets = [0, 256], sizes = [1, 256], strides = [1, 1]} : vector<1x768xf32> to vector<1x256xf32>
    %28 = vector.shape_cast %27 : vector<1x256xf32> to vector<1x1x256xf32>
    %29 = vector.broadcast %28 : vector<1x1x256xf32> to vector<2x6x256xf32>
    %30 = arith.addf %26, %29 : vector<2x6x256xf32>
    %cst_13 = arith.constant 0.000000e+00 : f32
    %31 = vector.broadcast %cst_13 : f32 to vector<2x6x256xf32>
    %32 = arith.maximumf %30, %31 : vector<2x6x256xf32>
    %cst_14 = arith.constant dense<0xFF800000> : vector<2x256xf32>
    %33 = vector.multi_reduction <maximumf>, %32, %cst_14 [1] : vector<2x6x256xf32> to vector<2x256xf32>
    %34 = vector.extract_strided_slice %6 {offsets = [256, 0], sizes = [256, 4], strides = [1, 1]} : vector<768x4xf32> to vector<256x4xf32>
    %cst_15 = arith.constant dense<0.000000e+00> : vector<2x4xf32>
    %35 = tpu.matmul %33, %34, %cst_15 {dimension_numbers = #tpu.dot_dimension_numbers<[1], [0], [0], [1], [0, 0, 1, 1], [], []>} : vector<2x256xf32>, vector<256x4xf32>, vector<2x4xf32> -> vector<2x4xf32>
    %36 = arith.addf %21, %35 : vector<2x4xf32>
    %37 = vector.extract_strided_slice %4 {offsets = [0, 0, 1280], sizes = [2, 5, 256], strides = [1, 1, 1]} : vector<2x8x2304xf32> to vector<2x5x256xf32>
    %38 = vector.extract_strided_slice %4 {offsets = [0, 1, 1536], sizes = [2, 5, 256], strides = [1, 1, 1]} : vector<2x8x2304xf32> to vector<2x5x256xf32>
    %39 = arith.addf %37, %38 : vector<2x5x256xf32>
    %40 = vector.extract_strided_slice %4 {offsets = [0, 2, 1792], sizes = [2, 5, 256], strides = [1, 1, 1]} : vector<2x8x2304xf32> to vector<2x5x256xf32>
    %41 = arith.addf %39, %40 : vector<2x5x256xf32>
    %42 = vector.extract_strided_slice %4 {offsets = [0, 3, 2048], sizes = [2, 5, 256], strides = [1, 1, 1]} : vector<2x8x2304xf32> to vector<2x5x256xf32>
    %43 = arith.addf %41, %42 : vector<2x5x256xf32>
    %44 = vector.extract_strided_slice %5 {offsets = [0, 512], sizes = [1, 256], strides = [1, 1]} : vector<1x768xf32> to vector<1x256xf32>
    %45 = vector.shape_cast %44 : vector<1x256xf32> to vector<1x1x256xf32>
    %46 = vector.broadcast %45 : vector<1x1x256xf32> to vector<2x5x256xf32>
    %47 = arith.addf %43, %46 : vector<2x5x256xf32>
    %cst_16 = arith.constant 0.000000e+00 : f32
    %48 = vector.broadcast %cst_16 : f32 to vector<2x5x256xf32>
    %49 = arith.maximumf %47, %48 : vector<2x5x256xf32>
    %cst_17 = arith.constant dense<0xFF800000> : vector<2x256xf32>
    %50 = vector.multi_reduction <maximumf>, %49, %cst_17 [1] : vector<2x5x256xf32> to vector<2x256xf32>
    %51 = vector.extract_strided_slice %6 {offsets = [512, 0], sizes = [256, 4], strides = [1, 1]} : vector<768x4xf32> to vector<256x4xf32>
    %cst_18 = arith.constant dense<0.000000e+00> : vector<2x4xf32>
    %52 = tpu.matmul %50, %51, %cst_18 {dimension_numbers = #tpu.dot_dimension_numbers<[1], [0], [0], [1], [0, 0, 1, 1], [], []>} : vector<2x256xf32>, vector<256x4xf32>, vector<2x4xf32> -> vector<2x4xf32>
    %53 = arith.addf %36, %52 : vector<2x4xf32>
    %cst_19 = arith.constant dense<0xFF800000> : vector<2xf32>
    %54 = vector.multi_reduction <maximumf>, %53, %cst_19 [1] : vector<2x4xf32> to vector<2xf32>
    %55 = vector.shape_cast %54 : vector<2xf32> to vector<2x1xf32>
    %56 = vector.broadcast %55 : vector<2x1xf32> to vector<2x4xf32>
    %57 = arith.subf %53, %56 : vector<2x4xf32>
    %58 = math.exp %57 : vector<2x4xf32>
    %cst_20 = arith.constant dense<0.000000e+00> : vector<2xf32>
    %59 = vector.multi_reduction <add>, %58, %cst_20 [1] : vector<2x4xf32> to vector<2xf32>
    %60 = vector.shape_cast %59 : vector<2xf32> to vector<2x1xf32>
    %61 = vector.broadcast %60 : vector<2x1xf32> to vector<2x4xf32>
    %62 = arith.divf %58, %61 : vector<2x4xf32>
    %c0_21 = arith.constant 0 : index
    %c0_22 = arith.constant 0 : index
    %63 = vector.load %arg6[%c0_21, %c0_22] : memref<2x4xf32, #tpu.memory_space<vmem>>, vector<2x4xf32>
    tpu.vector_store %arg6[%c0_21, %c0_22], %62 {strides = array<i32>} : memref<2x4xf32, #tpu.memory_space<vmem>>, vector<2x4xf32>,
    return
  }
  func.func @transform_0(%arg0: i32) -> (i32, i32, i32) {
    %c0_i32 = arith.constant 0 : i32
    %c0_i32_0 = arith.constant 0 : i32
    %c0_i32_1 = arith.constant 0 : i32
    return %arg0, %c0_i32, %c0_i32_0 : i32, i32, i32
  }
  func.func @transform_1(%arg0: i32) -> (i32, i32) {
    %c0_i32 = arith.constant 0 : i32
    %c0_i32_0 = arith.constant 0 : i32
    %c0_i32_1 = arith.constant 0 : i32
    return %c0_i32, %c0_i32_0 : i32, i32
  }
  func.func @transform_2(%arg0: i32) -> (i32, i32) {
    %c0_i32 = arith.constant 0 : i32
    %c0_i32_0 = arith.constant 0 : i32
    %c0_i32_1 = arith.constant 0 : i32
    return %c0_i32, %c0_i32_0 : i32, i32
  }
  func.func @transform_3(%arg0: i32) -> (i32, i32) {
    %c0_i32 = arith.constant 0 : i32
    %c0_i32_0 = arith.constant 0 : i32
    %c0_i32_1 = arith.constant 0 : i32
    return %c0_i32, %c0_i32_0 : i32, i32
  }
  func.func @transform_4(%arg0: i32) -> (i32, i32) {
    %c0_i32 = arith.constant 0 : i32
    %c0_i32_0 = arith.constant 0 : i32
    %c0_i32_1 = arith.constant 0 : i32
    return %c0_i32, %c0_i32_0 : i32, i32
  }
  func.func @transform_5(%arg0: i32) -> (i32, i32) {
    %c0_i32 = arith.constant 0 : i32
    %c0_i32_0 = arith.constant 0 : i32
    return %arg0, %c0_i32 : i32, i32
  }
}

</mosaic_0001>

<llo_original>
// kernel: tpu_custom_call.1
$region0: #{tpu_custom_call.1}
  #allocation0 [shape = 'u32[]', space=smem, size = 0x4, offset = 0x4, fixed_abs, tag = 'smem constant byte address 0x4 - core index']
  #allocation1 [shape = 'u32[144,128]{1,0:T(1,128)}', space=vmem, size = 0x12000, scoped, tag = 'internal scratch']
  %s0 = inlined_call_operand.hbm [shape: bf16[2,8,768], index: 0, kind: input, shape index: {}]
  %s1 = inlined_call_operand.hbm [shape: bf16[768,2304], index: 1, kind: input, shape index: {}]
  %s2 = inlined_call_operand.hbm [shape: f32[1,768], index: 2, kind: input, shape index: {}]
  %s3 = inlined_call_operand.vmem [shape: f32[768,4], index: 3, kind: input, shape index: {}]
  %s4 = inlined_call_operand.hbm [shape: f32[1,4], index: 4, kind: input, shape index: {}]
  %s5 = inlined_call_operand.hbm [shape: f32[2,4], index: 5, kind: output, shape index: {}]
  %s6 = sld [smem:[#allocation0]]
  $region46: #{tpu_custom_call.1} parent=0
    _
  %s8 = ssub.s32 1, %s6
  %s9 = scalar_select 0, %s8, %s6
  $region1: #{tpu_custom_call.1} parent=0
    #allocation2 [shape = 'u8[24576]{0}', space=vmem, size = 0x6000, scoped, tag = 'input window, operand 0, single buffered']
    #allocation3 [shape = 's32[1]{0}', space=sflag, size = 0x4, scoped, tag = 'scoped memory for tpu_custom_call.1']
    #allocation4 [shape = 's32[1]{0}', space=sflag, size = 0x4, scoped, tag = 'scoped memory for tpu_custom_call.1']
    #allocation5 [shape = 'u8[3538944]{0}', space=vmem, size = 0x360000, scoped, tag = 'input window, operand 1, single buffered']
    #allocation6 [shape = 's32[1]{0}', space=sflag, size = 0x4, scoped, tag = 'scoped memory for tpu_custom_call.1']
    #allocation7 [shape = 'u8[3072]{0}', space=vmem, size = 0xc00, scoped, tag = 'input window, operand 2, single buffered']
    #allocation8 [shape = 'u8[512]{0}', space=vmem, size = 0x400, scoped, tag = 'input window, operand 4, single buffered']
    #allocation9 [shape = 's32[1]{0}', space=sflag, size = 0x4, scoped, tag = 'scoped memory for tpu_custom_call.1']
    #allocation10 [shape = 'u8[1024]{0}', space=vmem, size = 0x400, scoped, tag = 'output window, operand 0, single buffered']
    %10 = vsyncpa [#allocation3], 0
    %11 = vsyncpa [#allocation6], 0
    %12 = vsyncpa [#allocation9], 0
    %13 = vsyncpa [#allocation4], 0
    // Predicated region
    $region2: #{tpu_custom_call.1} parent=1 // pred_check
      _
    $region3: #{tpu_custom_call.1} parent=1 // pred_check_branch
      %15 = sbr.rel (0) target = $region5
    $region4: #{tpu_custom_call.1} parent=1 // pred_region
      %s17 = ssub.s32 768, 768
      %18 = vsyncadd [#allocation3], %s17
      %s19 = sshll.u32 [#allocation2], 4
      %s20 = int_to_ptr.vmem [resolvable:$true] %s19
      %25 = dma.hbm_to_vmem [thread:$0]  %s0, 768, %s20, [#allocation3], 384, 384, 24
    $region5: #{tpu_custom_call.1} parent=1 // pred_fallthru
      _
    // Predicated region
    $region6: #{tpu_custom_call.1} parent=1 // pred_check
      _
    $region7: #{tpu_custom_call.1} parent=1 // pred_check_branch
      %27 = sbr.rel (0) target = $region9
    $region8: #{tpu_custom_call.1} parent=1 // pred_region
      %s29 = ssub.s32 110592, 110592
      %30 = vsyncadd [#allocation6], %s29
      %s31 = sshll.u32 [#allocation5], 4
      %s32 = int_to_ptr.vmem [resolvable:$true] %s31
      %37 = dma.hbm_to_vmem [thread:$0]  %s1, 110592, %s32, [#allocation6], 1152, 1152, 72
    $region9: #{tpu_custom_call.1} parent=1 // pred_fallthru
      _
    // Predicated region
    $region10: #{tpu_custom_call.1} parent=1 // pred_check
      _
    $region11: #{tpu_custom_call.1} parent=1 // pred_check_branch
      %39 = sbr.rel (0) target = $region13
    $region12: #{tpu_custom_call.1} parent=1 // pred_region
      %s41 = ssub.s32 96, 96
      %42 = vsyncadd [#allocation6], %s41
      %s44 = sshll.u32 [#allocation7], 4
      %s45 = int_to_ptr.vmem [resolvable:$true] %s44
      %47 = dma.hbm_to_vmem [thread:$0]  %s2, 96, %s45, [#allocation6]
    $region13: #{tpu_custom_call.1} parent=1 // pred_fallthru
      _
    // Predicated region
    $region14: #{tpu_custom_call.1} parent=1 // pred_check
      _
    $region15: #{tpu_custom_call.1} parent=1 // pred_check_branch
      %49 = sbr.rel (0) target = $region17
    $region16: #{tpu_custom_call.1} parent=1 // pred_region
      _
    $region17: #{tpu_custom_call.1} parent=1 // pred_fallthru
      _
    // Predicated region
    $region18: #{tpu_custom_call.1} parent=1 // pred_check
      _
    $region19: #{tpu_custom_call.1} parent=1 // pred_check_branch
      %51 = sbr.rel (0) target = $region21
    $region20: #{tpu_custom_call.1} parent=1 // pred_region
      %s53 = ssub.s32 16, 16
      %54 = vsyncadd [#allocation9], %s53
      %s56 = sshll.u32 [#allocation8], 4
      %s57 = int_to_ptr.vmem [resolvable:$true] %s56
      %59 = dma.hbm_to_vmem [thread:$0]  %s4, 16, %s57, [#allocation9]
    $region21: #{tpu_custom_call.1} parent=1 // pred_fallthru
      _
    // Predicated region
    $region22: #{tpu_custom_call.1} parent=1 // pred_check
      _
    $region23: #{tpu_custom_call.1} parent=1 // pred_check_branch
      %61 = sbr.rel (0) target = $region25
    $region24: #{tpu_custom_call.1} parent=1 // pred_region
      %62 = dma.done [#allocation3], 768
    $region25: #{tpu_custom_call.1} parent=1 // pred_fallthru
      _
    // Predicated region
    $region26: #{tpu_custom_call.1} parent=1 // pred_check
      _
    $region27: #{tpu_custom_call.1} parent=1 // pred_check_branch
      %64 = sbr.rel (0) target = $region29
    $region28: #{tpu_custom_call.1} parent=1 // pred_region
      %65 = dma.done [#allocation6], 110592
    $region29: #{tpu_custom_call.1} parent=1 // pred_fallthru
      _
    // Predicated region
    $region30: #{tpu_custom_call.1} parent=1 // pred_check
      _
    $region31: #{tpu_custom_call.1} parent=1 // pred_check_branch
      %67 = sbr.rel (0) target = $region33
    $region32: #{tpu_custom_call.1} parent=1 // pred_region
      %68 = dma.done [#allocation6], 96
    $region33: #{tpu_custom_call.1} parent=1 // pred_fallthru
      _
    // Predicated region
    $region34: #{tpu_custom_call.1} parent=1 // pred_check
      _
    $region35: #{tpu_custom_call.1} parent=1 // pred_check_branch
      %70 = sbr.rel (0) target = $region37
    $region36: #{tpu_custom_call.1} parent=1 // pred_region
      %71 = dma.done [#allocation9], 16
    $region37: #{tpu_custom_call.1} parent=1 // pred_fallthru
      _
    %v72 = vld [vmem:[#allocation2] sm:$0xff]
    %v73 = vld [vmem:[#allocation2 + $0x8] sm:$0xff]
    %v74 = vld [vmem:[#allocation2 + $0x10] sm:$0xff]
    %v75 = vld [vmem:[#allocation2 + $0x18] sm:$0xff]
    %v76 = vld [vmem:[#allocation2 + $0x20] sm:$0xff]
    %v77 = vld [vmem:[#allocation2 + $0x28] sm:$0xff]
    %v78 = vld [vmem:[#allocation5] sm:$0xff]
    %v79 = vld [vmem:[#allocation5 + $0x8] sm:$0xff]
    %v80 = vld [vmem:[#allocation5 + $0x10] sm:$0xff]
    %v81 = vld [vmem:[#allocation5 + $0x18] sm:$0xff]
    %v82 = vld [vmem:[#allocation5 + $0x20] sm:$0xff]
    %v83 = vld [vmem:[#allocation5 + $0x28] sm:$0xff]
    %v84 = vld [vmem:[#allocation5 + $0x30] sm:$0xff]
    %v85 = vld [vmem:[#allocation5 + $0x38] sm:$0xff]
    %v86 = vld [vmem:[#allocation5 + $0x40] sm:$0xff]
    %v87 = vld [vmem:[#allocation5 + $0x48] sm:$0xff]
    %v88 = vld [vmem:[#allocation5 + $0x50] sm:$0xff]
    %v89 = vld [vmem:[#allocation5 + $0x58] sm:$0xff]
    %v90 = vld [vmem:[#allocation5 + $0x60] sm:$0xff]
    %v91 = vld [vmem:[#allocation5 + $0x68] sm:$0xff]
    %v92 = vld [vmem:[#allocation5 + $0x70] sm:$0xff]
    %v93 = vld [vmem:[#allocation5 + $0x78] sm:$0xff]
    %v94 = vld [vmem:[#allocation5 + $0x80] sm:$0xff]
    %v95 = vld [vmem:[#allocation5 + $0x88] sm:$0xff]
    %v96 = vld [vmem:[#allocation5 + $0x90] sm:$0xff]
    %v97 = vld [vmem:[#allocation5 + $0x98] sm:$0xff]
    %v98 = vld [vmem:[#allocation5 + $0xa0] sm:$0xff]
    %v99 = vld [vmem:[#allocation5 + $0xa8] sm:$0xff]
    %v100 = vld [vmem:[#allocation5 + $0xb0] sm:$0xff]
    %v101 = vld [vmem:[#allocation5 + $0xb8] sm:$0xff]
    %v102 = vld [vmem:[#allocation5 + $0xc0] sm:$0xff]
    %v103 = vld [vmem:[#allocation5 + $0xc8] sm:$0xff]
    %v104 = vld [vmem:[#allocation5 + $0xd0] sm:$0xff]
    %v105 = vld [vmem:[#allocation5 + $0xd8] sm:$0xff]
    %v106 = vld [vmem:[#allocation5 + $0xe0] sm:$0xff]
    %v107 = vld [vmem:[#allocation5 + $0xe8] sm:$0xff]
    %v108 = vld [vmem:[#allocation5 + $0xf0] sm:$0xff]
    %v109 = vld [vmem:[#allocation5 + $0xf8] sm:$0xff]
    %v110 = vld [vmem:[#allocation5 + $0x100] sm:$0xff]
    %v111 = vld [vmem:[#allocation5 + $0x108] sm:$0xff]
    %v112 = vld [vmem:[#allocation5 + $0x110] sm:$0xff]
    %v113 = vld [vmem:[#allocation5 + $0x118] sm:$0xff]
    %v114 = vld [vmem:[#allocation5 + $0x120] sm:$0xff]
    %v115 = vld [vmem:[#allocation5 + $0x128] sm:$0xff]
    %v116 = vld [vmem:[#allocation5 + $0x130] sm:$0xff]
    %v117 = vld [vmem:[#allocation5 + $0x138] sm:$0xff]
    %v118 = vld [vmem:[#allocation5 + $0x140] sm:$0xff]
    %v119 = vld [vmem:[#allocation5 + $0x148] sm:$0xff]
    %v120 = vld [vmem:[#allocation5 + $0x150] sm:$0xff]
    %v121 = vld [vmem:[#allocation5 + $0x158] sm:$0xff]
    %v122 = vld [vmem:[#allocation5 + $0x160] sm:$0xff]
    %v123 = vld [vmem:[#allocation5 + $0x168] sm:$0xff]
    %v124 = vld [vmem:[#allocation5 + $0x170] sm:$0xff]
    %v125 = vld [vmem:[#allocation5 + $0x178] sm:$0xff]
    %v126 = vld [vmem:[#allocation5 + $0x180] sm:$0xff]
    %v127 = vld [vmem:[#allocation5 + $0x188] sm:$0xff]
    %v128 = vld [vmem:[#allocation5 + $0x190] sm:$0xff]
    %v129 = vld [vmem:[#allocation5 + $0x198] sm:$0xff]
    %v130 = vld [vmem:[#allocation5 + $0x1a0] sm:$0xff]
    %v131 = vld [vmem:[#allocation5 + $0x1a8] sm:$0xff]
    %v132 = vld [vmem:[#allocation5 + $0x1b0] sm:$0xff]
    %v133 = vld [vmem:[#allocation5 + $0x1b8] sm:$0xff]
    %v134 = vld [vmem:[#allocation5 + $0x1c0] sm:$0xff]
    %v135 = vld [vmem:[#allocation5 + $0x1c8] sm:$0xff]
    %v136 = vld [vmem:[#allocation5 + $0x1d0] sm:$0xff]
    %v137 = vld [vmem:[#allocation5 + $0x1d8] sm:$0xff]
    %v138 = vld [vmem:[#allocation5 + $0x1e0] sm:$0xff]
    %v139 = vld [vmem:[#allocation5 + $0x1e8] sm:$0xff]
    %v140 = vld [vmem:[#allocation5 + $0x1f0] sm:$0xff]
    %v141 = vld [vmem:[#allocation5 + $0x1f8] sm:$0xff]
    %v142 = vld [vmem:[#allocation5 + $0x200] sm:$0xff]
    %v143 = vld [vmem:[#allocation5 + $0x208] sm:$0xff]
    %v144 = vld [vmem:[#allocation5 + $0x210] sm:$0xff]
    %v145 = vld [vmem:[#allocation5 + $0x218] sm:$0xff]
    %v146 = vld [vmem:[#allocation5 + $0x220] sm:$0xff]
    %v147 = vld [vmem:[#allocation5 + $0x228] sm:$0xff]
    %v148 = vld [vmem:[#allocation5 + $0x230] sm:$0xff]
    %v149 = vld [vmem:[#allocation5 + $0x238] sm:$0xff]
    %v150 = vld [vmem:[#allocation5 + $0x240] sm:$0xff]
    %v151 = vld [vmem:[#allocation5 + $0x248] sm:$0xff]
    %v152 = vld [vmem:[#allocation5 + $0x250] sm:$0xff]
    %v153 = vld [vmem:[#allocation5 + $0x258] sm:$0xff]
    %v154 = vld [vmem:[#allocation5 + $0x260] sm:$0xff]
    %v155 = vld [vmem:[#allocation5 + $0x268] sm:$0xff]
    %v156 = vld [vmem:[#allocation5 + $0x270] sm:$0xff]
    %v157 = vld [vmem:[#allocation5 + $0x278] sm:$0xff]
    %v158 = vld [vmem:[#allocation5 + $0x280] sm:$0xff]
    %v159 = vld [vmem:[#allocation5 + $0x288] sm:$0xff]
    %v160 = vld [vmem:[#allocation5 + $0x290] sm:$0xff]
    %v161 = vld [vmem:[#allocation5 + $0x298] sm:$0xff]
    %v162 = vld [vmem:[#allocation5 + $0x2a0] sm:$0xff]
    %v163 = vld [vmem:[#allocation5 + $0x2a8] sm:$0xff]
    %v164 = vld [vmem:[#allocation5 + $0x2b0] sm:$0xff]
    %v165 = vld [vmem:[#allocation5 + $0x2b8] sm:$0xff]
    %v166 = vld [vmem:[#allocation5 + $0x2c0] sm:$0xff]
    %v167 = vld [vmem:[#allocation5 + $0x2c8] sm:$0xff]
    %v168 = vld [vmem:[#allocation5 + $0x2d0] sm:$0xff]
    %v169 = vld [vmem:[#allocation5 + $0x2d8] sm:$0xff]
    %v170 = vld [vmem:[#allocation5 + $0x2e0] sm:$0xff]
    %v171 = vld [vmem:[#allocation5 + $0x2e8] sm:$0xff]
    %v172 = vld [vmem:[#allocation5 + $0x2f0] sm:$0xff]
    %v173 = vld [vmem:[#allocation5 + $0x2f8] sm:$0xff]
    %v174 = vld [vmem:[#allocation5 + $0x300] sm:$0xff]
    %v175 = vld [vmem:[#allocation5 + $0x308] sm:$0xff]
    %v176 = vld [vmem:[#allocation5 + $0x310] sm:$0xff]
    %v177 = vld [vmem:[#allocation5 + $0x318] sm:$0xff]
    %v178 = vld [vmem:[#allocation5 + $0x320] sm:$0xff]
    %v179 = vld [vmem:[#allocation5 + $0x328] sm:$0xff]
    %v180 = vld [vmem:[#allocation5 + $0x330] sm:$0xff]
    %v181 = vld [vmem:[#allocation5 + $0x338] sm:$0xff]
    %v182 = vld [vmem:[#allocation5 + $0x340] sm:$0xff]
    %v183 = vld [vmem:[#allocation5 + $0x348] sm:$0xff]
    %v184 = vld [vmem:[#allocation5 + $0x350] sm:$0xff]
    %v185 = vld [vmem:[#allocation5 + $0x358] sm:$0xff]
    %v186 = vld [vmem:[#allocation5 + $0x360] sm:$0xff]
    %v187 = vld [vmem:[#allocation5 + $0x368] sm:$0xff]
    %v188 = vld [vmem:[#allocation5 + $0x370] sm:$0xff]
    %v189 = vld [vmem:[#allocation5 + $0x378] sm:$0xff]
    %v190 = vld [vmem:[#allocation5 + $0x380] sm:$0xff]
    %v191 = vld [vmem:[#allocation5 + $0x388] sm:$0xff]
    %v192 = vld [vmem:[#allocation5 + $0x390] sm:$0xff]
    %v193 = vld [vmem:[#allocation5 + $0x398] sm:$0xff]
    %v194 = vld [vmem:[#allocation5 + $0x3a0] sm:$0xff]
    %v195 = vld [vmem:[#allocation5 + $0x3a8] sm:$0xff]
    %v196 = vld [vmem:[#allocation5 + $0x3b0] sm:$0xff]
    %v197 = vld [vmem:[#allocation5 + $0x3b8] sm:$0xff]
    %v198 = vld [vmem:[#allocation5 + $0x3c0] sm:$0xff]
    %v199 = vld [vmem:[#allocation5 + $0x3c8] sm:$0xff]
    %v200 = vld [vmem:[#allocation5 + $0x3d0] sm:$0xff]
    %v201 = vld [vmem:[#allocation5 + $0x3d8] sm:$0xff]
    %v202 = vld [vmem:[#allocation5 + $0x3e0] sm:$0xff]
    %v203 = vld [vmem:[#allocation5 + $0x3e8] sm:$0xff]
    %v204 = vld [vmem:[#allocation5 + $0x3f0] sm:$0xff]
    %v205 = vld [vmem:[#allocation5 + $0x3f8] sm:$0xff]
    %v206 = vld [vmem:[#allocation5 + $0x400] sm:$0xff]
    %v207 = vld [vmem:[#allocation5 + $0x408] sm:$0xff]
    %v208 = vld [vmem:[#allocation5 + $0x410] sm:$0xff]
    %v209 = vld [vmem:[#allocation5 + $0x418] sm:$0xff]
    %v210 = vld [vmem:[#allocation5 + $0x420] sm:$0xff]
    %v211 = vld [vmem:[#allocation5 + $0x428] sm:$0xff]
    %v212 = vld [vmem:[#allocation5 + $0x430] sm:$0xff]
    %v213 = vld [vmem:[#allocation5 + $0x438] sm:$0xff]
    %v214 = vld [vmem:[#allocation5 + $0x440] sm:$0xff]
    %v215 = vld [vmem:[#allocation5 + $0x448] sm:$0xff]
    %v216 = vld [vmem:[#allocation5 + $0x450] sm:$0xff]
    %v217 = vld [vmem:[#allocation5 + $0x458] sm:$0xff]
    %v218 = vld [vmem:[#allocation5 + $0x460] sm:$0xff]
    %v219 = vld [vmem:[#allocation5 + $0x468] sm:$0xff]
    %v220 = vld [vmem:[#allocation5 + $0x470] sm:$0xff]
    %v221 = vld [vmem:[#allocation5 + $0x478] sm:$0xff]
    %v222 = vld [vmem:[#allocation5 + $0x480] sm:$0xff]
    %v223 = vld [vmem:[#allocation5 + $0x488] sm:$0xff]
    %v224 = vld [vmem:[#allocation5 + $0x490] sm:$0xff]
    %v225 = vld [vmem:[#allocation5 + $0x498] sm:$0xff]
    %v226 = vld [vmem:[#allocation5 + $0x4a0] sm:$0xff]
    %v227 = vld [vmem:[#allocation5 + $0x4a8] sm:$0xff]
    %v228 = vld [vmem:[#allocation5 + $0x4b0] sm:$0xff]
    %v229 = vld [vmem:[#allocation5 + $0x4b8] sm:$0xff]
    %v230 = vld [vmem:[#allocation5 + $0x4c0] sm:$0xff]
    %v231 = vld [vmem:[#allocation5 + $0x4c8] sm:$0xff]
    %v232 = vld [vmem:[#allocation5 + $0x4d0] sm:$0xff]
    %v233 = vld [vmem:[#allocation5 + $0x4d8] sm:$0xff]
    %v234 = vld [vmem:[#allocation5 + $0x4e0] sm:$0xff]
    %v235 = vld [vmem:[#allocation5 + $0x4e8] sm:$0xff]
    %v236 = vld [vmem:[#allocation5 + $0x4f0] sm:$0xff]
    %v237 = vld [vmem:[#allocation5 + $0x4f8] sm:$0xff]
    %v238 = vld [vmem:[#allocation5 + $0x500] sm:$0xff]
    %v239 = vld [vmem:[#allocation5 + $0x508] sm:$0xff]
    %v240 = vld [vmem:[#allocation5 + $0x510] sm:$0xff]
    %v241 = vld [vmem:[#allocation5 + $0x518] sm:$0xff]
    %v242 = vld [vmem:[#allocation5 + $0x520] sm:$0xff]
    %v243 = vld [vmem:[#allocation5 + $0x528] sm:$0xff]
    %v244 = vld [vmem:[#allocation5 + $0x530] sm:$0xff]
    %v245 = vld [vmem:[#allocation5 + $0x538] sm:$0xff]
    %v246 = vld [vmem:[#allocation5 + $0x540] sm:$0xff]
    %v247 = vld [vmem:[#allocation5 + $0x548] sm:$0xff]
    %v248 = vld [vmem:[#allocation5 + $0x550] sm:$0xff]
    %v249 = vld [vmem:[#allocation5 + $0x558] sm:$0xff]
    %v250 = vld [vmem:[#allocation5 + $0x560] sm:$0xff]
    %v251 = vld [vmem:[#allocation5 + $0x568] sm:$0xff]
    %v252 = vld [vmem:[#allocation5 + $0x570] sm:$0xff]
    %v253 = vld [vmem:[#allocation5 + $0x578] sm:$0xff]
    %v254 = vld [vmem:[#allocation5 + $0x580] sm:$0xff]
    %v255 = vld [vmem:[#allocation5 + $0x588] sm:$0xff]
    %v256 = vld [vmem:[#allocation5 + $0x590] sm:$0xff]
    %v257 = vld [vmem:[#allocation5 + $0x598] sm:$0xff]
    %v258 = vld [vmem:[#allocation5 + $0x5a0] sm:$0xff]
    %v259 = vld [vmem:[#allocation5 + $0x5a8] sm:$0xff]
    %v260 = vld [vmem:[#allocation5 + $0x5b0] sm:$0xff]
    %v261 = vld [vmem:[#allocation5 + $0x5b8] sm:$0xff]
    %v262 = vld [vmem:[#allocation5 + $0x5c0] sm:$0xff]
    %v263 = vld [vmem:[#allocation5 + $0x5c8] sm:$0xff]
    %v264 = vld [vmem:[#allocation5 + $0x5d0] sm:$0xff]
    %v265 = vld [vmem:[#allocation5 + $0x5d8] sm:$0xff]
    %v266 = vld [vmem:[#allocation5 + $0x5e0] sm:$0xff]
    %v267 = vld [vmem:[#allocation5 + $0x5e8] sm:$0xff]
    %v268 = vld [vmem:[#allocation5 + $0x5f0] sm:$0xff]
    %v269 = vld [vmem:[#allocation5 + $0x5f8] sm:$0xff]
    %v270 = vld [vmem:[#allocation5 + $0x600] sm:$0xff]
    %v271 = vld [vmem:[#allocation5 + $0x608] sm:$0xff]
    %v272 = vld [vmem:[#allocation5 + $0x610] sm:$0xff]
    %v273 = vld [vmem:[#allocation5 + $0x618] sm:$0xff]
    %v274 = vld [vmem:[#allocation5 + $0x620] sm:$0xff]
    %v275 = vld [vmem:[#allocation5 + $0x628] sm:$0xff]
    %v276 = vld [vmem:[#allocation5 + $0x630] sm:$0xff]
    %v277 = vld [vmem:[#allocation5 + $0x638] sm:$0xff]
    %v278 = vld [vmem:[#allocation5 + $0x640] sm:$0xff]
    %v279 = vld [vmem:[#allocation5 + $0x648] sm:$0xff]
    %v280 = vld [vmem:[#allocation5 + $0x650] sm:$0xff]
    %v281 = vld [vmem:[#allocation5 + $0x658] sm:$0xff]
    %v282 = vld [vmem:[#allocation5 + $0x660] sm:$0xff]
    %v283 = vld [vmem:[#allocation5 + $0x668] sm:$0xff]
    %v284 = vld [vmem:[#allocation5 + $0x670] sm:$0xff]
    %v285 = vld [vmem:[#allocation5 + $0x678] sm:$0xff]
    %v286 = vld [vmem:[#allocation5 + $0x680] sm:$0xff]
    %v287 = vld [vmem:[#allocation5 + $0x688] sm:$0xff]
    %v288 = vld [vmem:[#allocation5 + $0x690] sm:$0xff]
    %v289 = vld [vmem:[#allocation5 + $0x698] sm:$0xff]
    %v290 = vld [vmem:[#allocation5 + $0x6a0] sm:$0xff]
    %v291 = vld [vmem:[#allocation5 + $0x6a8] sm:$0xff]
    %v292 = vld [vmem:[#allocation5 + $0x6b0] sm:$0xff]
    %v293 = vld [vmem:[#allocation5 + $0x6b8] sm:$0xff]
    %v294 = vld [vmem:[#allocation5 + $0x6c0] sm:$0xff]
    %v295 = vld [vmem:[#allocation5 + $0x6c8] sm:$0xff]
    %v296 = vld [vmem:[#allocation5 + $0x6d0] sm:$0xff]
    %v297 = vld [vmem:[#allocation5 + $0x6d8] sm:$0xff]
    %v298 = vld [vmem:[#allocation5 + $0x6e0] sm:$0xff]
    %v299 = vld [vmem:[#allocation5 + $0x6e8] sm:$0xff]
    %v300 = vld [vmem:[#allocation5 + $0x6f0] sm:$0xff]
    %v301 = vld [vmem:[#allocation5 + $0x6f8] sm:$0xff]
    %v302 = vld [vmem:[#allocation5 + $0x700] sm:$0xff]
    %v303 = vld [vmem:[#allocation5 + $0x708] sm:$0xff]
    %v304 = vld [vmem:[#allocation5 + $0x710] sm:$0xff]
    %v305 = vld [vmem:[#allocation5 + $0x718] sm:$0xff]
    %v306 = vld [vmem:[#allocation5 + $0x720] sm:$0xff]
    %v307 = vld [vmem:[#allocation5 + $0x728] sm:$0xff]
    %v308 = vld [vmem:[#allocation5 + $0x730] sm:$0xff]
    %v309 = vld [vmem:[#allocation5 + $0x738] sm:$0xff]
    %v310 = vld [vmem:[#allocation5 + $0x740] sm:$0xff]
    %v311 = vld [vmem:[#allocation5 + $0x748] sm:$0xff]
    %v312 = vld [vmem:[#allocation5 + $0x750] sm:$0xff]
    %v313 = vld [vmem:[#allocation5 + $0x758] sm:$0xff]
    %v314 = vld [vmem:[#allocation5 + $0x760] sm:$0xff]
    %v315 = vld [vmem:[#allocation5 + $0x768] sm:$0xff]
    %v316 = vld [vmem:[#allocation5 + $0x770] sm:$0xff]
    %v317 = vld [vmem:[#allocation5 + $0x778] sm:$0xff]
    %v318 = vld [vmem:[#allocation5 + $0x780] sm:$0xff]
    %v319 = vld [vmem:[#allocation5 + $0x788] sm:$0xff]
    %v320 = vld [vmem:[#allocation5 + $0x790] sm:$0xff]
    %v321 = vld [vmem:[#allocation5 + $0x798] sm:$0xff]
    %v322 = vld [vmem:[#allocation5 + $0x7a0] sm:$0xff]
    %v323 = vld [vmem:[#allocation5 + $0x7a8] sm:$0xff]
    %v324 = vld [vmem:[#allocation5 + $0x7b0] sm:$0xff]
    %v325 = vld [vmem:[#allocation5 + $0x7b8] sm:$0xff]
    %v326 = vld [vmem:[#allocation5 + $0x7c0] sm:$0xff]
    %v327 = vld [vmem:[#allocation5 + $0x7c8] sm:$0xff]
    %v328 = vld [vmem:[#allocation5 + $0x7d0] sm:$0xff]
    %v329 = vld [vmem:[#allocation5 + $0x7d8] sm:$0xff]
    %v330 = vld [vmem:[#allocation5 + $0x7e0] sm:$0xff]
    %v331 = vld [vmem:[#allocation5 + $0x7e8] sm:$0xff]
    %v332 = vld [vmem:[#allocation5 + $0x7f0] sm:$0xff]
    %v333 = vld [vmem:[#allocation5 + $0x7f8] sm:$0xff]
    %v334 = vld [vmem:[#allocation5 + $0x800] sm:$0xff]
    %v335 = vld [vmem:[#allocation5 + $0x808] sm:$0xff]
    %v336 = vld [vmem:[#allocation5 + $0x810] sm:$0xff]
    %v337 = vld [vmem:[#allocation5 + $0x818] sm:$0xff]
    %v338 = vld [vmem:[#allocation5 + $0x820] sm:$0xff]
    %v339 = vld [vmem:[#allocation5 + $0x828] sm:$0xff]
    %v340 = vld [vmem:[#allocation5 + $0x830] sm:$0xff]
    %v341 = vld [vmem:[#allocation5 + $0x838] sm:$0xff]
    %v342 = vld [vmem:[#allocation5 + $0x840] sm:$0xff]
    %v343 = vld [vmem:[#allocation5 + $0x848] sm:$0xff]
    %v344 = vld [vmem:[#allocation5 + $0x850] sm:$0xff]
    %v345 = vld [vmem:[#allocation5 + $0x858] sm:$0xff]
    %v346 = vld [vmem:[#allocation5 + $0x860] sm:$0xff]
    %v347 = vld [vmem:[#allocation5 + $0x868] sm:$0xff]
    %v348 = vld [vmem:[#allocation5 + $0x870] sm:$0xff]
    %v349 = vld [vmem:[#allocation5 + $0x878] sm:$0xff]
    %v350 = vld [vmem:[#allocation5 + $0x880] sm:$0xff]
    %v351 = vld [vmem:[#allocation5 + $0x888] sm:$0xff]
    %v352 = vld [vmem:[#allocation5 + $0x890] sm:$0xff]
    %v353 = vld [vmem:[#allocation5 + $0x898] sm:$0xff]
    %v354 = vld [vmem:[#allocation5 + $0x8a0] sm:$0xff]
    %v355 = vld [vmem:[#allocation5 + $0x8a8] sm:$0xff]
    %v356 = vld [vmem:[#allocation5 + $0x8b0] sm:$0xff]
    %v357 = vld [vmem:[#allocation5 + $0x8b8] sm:$0xff]
    %v358 = vld [vmem:[#allocation5 + $0x8c0] sm:$0xff]
    %v359 = vld [vmem:[#allocation5 + $0x8c8] sm:$0xff]
    %v360 = vld [vmem:[#allocation5 + $0x8d0] sm:$0xff]
    %v361 = vld [vmem:[#allocation5 + $0x8d8] sm:$0xff]
    %v362 = vld [vmem:[#allocation5 + $0x8e0] sm:$0xff]
    %v363 = vld [vmem:[#allocation5 + $0x8e8] sm:$0xff]
    %v364 = vld [vmem:[#allocation5 + $0x8f0] sm:$0xff]
    %v365 = vld [vmem:[#allocation5 + $0x8f8] sm:$0xff]
    %v366 = vld [vmem:[#allocation5 + $0x900] sm:$0xff]
    %v367 = vld [vmem:[#allocation5 + $0x908] sm:$0xff]
    %v368 = vld [vmem:[#allocation5 + $0x910] sm:$0xff]
    %v369 = vld [vmem:[#allocation5 + $0x918] sm:$0xff]
    %v370 = vld [vmem:[#allocation5 + $0x920] sm:$0xff]
    %v371 = vld [vmem:[#allocation5 + $0x928] sm:$0xff]
    %v372 = vld [vmem:[#allocation5 + $0x930] sm:$0xff]
    %v373 = vld [vmem:[#allocation5 + $0x938] sm:$0xff]
    %v374 = vld [vmem:[#allocation5 + $0x940] sm:$0xff]
    %v375 = vld [vmem:[#allocation5 + $0x948] sm:$0xff]
    %v376 = vld [vmem:[#allocation5 + $0x950] sm:$0xff]
    %v377 = vld [vmem:[#allocation5 + $0x958] sm:$0xff]
    %v378 = vld [vmem:[#allocation5 + $0x960] sm:$0xff]
    %v379 = vld [vmem:[#allocation5 + $0x968] sm:$0xff]
    %v380 = vld [vmem:[#allocation5 + $0x970] sm:$0xff]
    %v381 = vld [vmem:[#allocation5 + $0x978] sm:$0xff]
    %v382 = vld [vmem:[#allocation5 + $0x980] sm:$0xff]
    %v383 = vld [vmem:[#allocation5 + $0x988] sm:$0xff]
    %v384 = vld [vmem:[#allocation5 + $0x990] sm:$0xff]
    %v385 = vld [vmem:[#allocation5 + $0x998] sm:$0xff]
    %v386 = vld [vmem:[#allocation5 + $0x9a0] sm:$0xff]
    %v387 = vld [vmem:[#allocation5 + $0x9a8] sm:$0xff]
    %v388 = vld [vmem:[#allocation5 + $0x9b0] sm:$0xff]
    %v389 = vld [vmem:[#allocation5 + $0x9b8] sm:$0xff]
    %v390 = vld [vmem:[#allocation5 + $0x9c0] sm:$0xff]
    %v391 = vld [vmem:[#allocation5 + $0x9c8] sm:$0xff]
    %v392 = vld [vmem:[#allocation5 + $0x9d0] sm:$0xff]
    %v393 = vld [vmem:[#allocation5 + $0x9d8] sm:$0xff]
    %v394 = vld [vmem:[#allocation5 + $0x9e0] sm:$0xff]
    %v395 = vld [vmem:[#allocation5 + $0x9e8] sm:$0xff]
    %v396 = vld [vmem:[#allocation5 + $0x9f0] sm:$0xff]
    %v397 = vld [vmem:[#allocation5 + $0x9f8] sm:$0xff]
    %v398 = vld [vmem:[#allocation5 + $0xa00] sm:$0xff]
    %v399 = vld [vmem:[#allocation5 + $0xa08] sm:$0xff]
    %v400 = vld [vmem:[#allocation5 + $0xa10] sm:$0xff]
    %v401 = vld [vmem:[#allocation5 + $0xa18] sm:$0xff]
    %v402 = vld [vmem:[#allocation5 + $0xa20] sm:$0xff]
    %v403 = vld [vmem:[#allocation5 + $0xa28] sm:$0xff]
    %v404 = vld [vmem:[#allocation5 + $0xa30] sm:$0xff]
    %v405 = vld [vmem:[#allocation5 + $0xa38] sm:$0xff]
    %v406 = vld [vmem:[#allocation5 + $0xa40] sm:$0xff]
    %v407 = vld [vmem:[#allocation5 + $0xa48] sm:$0xff]
    %v408 = vld [vmem:[#allocation5 + $0xa50] sm:$0xff]
    %v409 = vld [vmem:[#allocation5 + $0xa58] sm:$0xff]
    %v410 = vld [vmem:[#allocation5 + $0xa60] sm:$0xff]
    %v411 = vld [vmem:[#allocation5 + $0xa68] sm:$0xff]
    %v412 = vld [vmem:[#allocation5 + $0xa70] sm:$0xff]
    %v413 = vld [vmem:[#allocation5 + $0xa78] sm:$0xff]
    %v414 = vld [vmem:[#allocation5 + $0xa80] sm:$0xff]
    %v415 = vld [vmem:[#allocation5 + $0xa88] sm:$0xff]
    %v416 = vld [vmem:[#allocation5 + $0xa90] sm:$0xff]
    %v417 = vld [vmem:[#allocation5 + $0xa98] sm:$0xff]
    %v418 = vld [vmem:[#allocation5 + $0xaa0] sm:$0xff]
    %v419 = vld [vmem:[#allocation5 + $0xaa8] sm:$0xff]
    %v420 = vld [vmem:[#allocation5 + $0xab0] sm:$0xff]
    %v421 = vld [vmem:[#allocation5 + $0xab8] sm:$0xff]
    %v422 = vld [vmem:[#allocation5 + $0xac0] sm:$0xff]
    %v423 = vld [vmem:[#allocation5 + $0xac8] sm:$0xff]
    %v424 = vld [vmem:[#allocation5 + $0xad0] sm:$0xff]
    %v425 = vld [vmem:[#allocation5 + $0xad8] sm:$0xff]
    %v426 = vld [vmem:[#allocation5 + $0xae0] sm:$0xff]
    %v427 = vld [vmem:[#allocation5 + $0xae8] sm:$0xff]
    %v428 = vld [vmem:[#allocation5 + $0xaf0] sm:$0xff]
    %v429 = vld [vmem:[#allocation5 + $0xaf8] sm:$0xff]
    %v430 = vld [vmem:[#allocation5 + $0xb00] sm:$0xff]
    %v431 = vld [vmem:[#allocation5 + $0xb08] sm:$0xff]
    %v432 = vld [vmem:[#allocation5 + $0xb10] sm:$0xff]
    %v433 = vld [vmem:[#allocation5 + $0xb18] sm:$0xff]
    %v434 = vld [vmem:[#allocation5 + $0xb20] sm:$0xff]
    %v435 = vld [vmem:[#allocation5 + $0xb28] sm:$0xff]
    %v436 = vld [vmem:[#allocation5 + $0xb30] sm:$0xff]
    %v437 = vld [vmem:[#allocation5 + $0xb38] sm:$0xff]
    %v438 = vld [vmem:[#allocation5 + $0xb40] sm:$0xff]
    %v439 = vld [vmem:[#allocation5 + $0xb48] sm:$0xff]
    %v440 = vld [vmem:[#allocation5 + $0xb50] sm:$0xff]
    %v441 = vld [vmem:[#allocation5 + $0xb58] sm:$0xff]
    %v442 = vld [vmem:[#allocation5 + $0xb60] sm:$0xff]
    %v443 = vld [vmem:[#allocation5 + $0xb68] sm:$0xff]
    %v444 = vld [vmem:[#allocation5 + $0xb70] sm:$0xff]
    %v445 = vld [vmem:[#allocation5 + $0xb78] sm:$0xff]
    %v446 = vld [vmem:[#allocation5 + $0xb80] sm:$0xff]
    %v447 = vld [vmem:[#allocation5 + $0xb88] sm:$0xff]
    %v448 = vld [vmem:[#allocation5 + $0xb90] sm:$0xff]
    %v449 = vld [vmem:[#allocation5 + $0xb98] sm:$0xff]
    %v450 = vld [vmem:[#allocation5 + $0xba0] sm:$0xff]
    %v451 = vld [vmem:[#allocation5 + $0xba8] sm:$0xff]
    %v452 = vld [vmem:[#allocation5 + $0xbb0] sm:$0xff]
    %v453 = vld [vmem:[#allocation5 + $0xbb8] sm:$0xff]
    %v454 = vld [vmem:[#allocation5 + $0xbc0] sm:$0xff]
    %v455 = vld [vmem:[#allocation5 + $0xbc8] sm:$0xff]
    %v456 = vld [vmem:[#allocation5 + $0xbd0] sm:$0xff]
    %v457 = vld [vmem:[#allocation5 + $0xbd8] sm:$0xff]
    %v458 = vld [vmem:[#allocation5 + $0xbe0] sm:$0xff]
    %v459 = vld [vmem:[#allocation5 + $0xbe8] sm:$0xff]
    %v460 = vld [vmem:[#allocation5 + $0xbf0] sm:$0xff]
    %v461 = vld [vmem:[#allocation5 + $0xbf8] sm:$0xff]
    %v462 = vld [vmem:[#allocation5 + $0xc00] sm:$0xff]
    %v463 = vld [vmem:[#allocation5 + $0xc08] sm:$0xff]
    %v464 = vld [vmem:[#allocation5 + $0xc10] sm:$0xff]
    %v465 = vld [vmem:[#allocation5 + $0xc18] sm:$0xff]
    %v466 = vld [vmem:[#allocation5 + $0xc20] sm:$0xff]
    %v467 = vld [vmem:[#allocation5 + $0xc28] sm:$0xff]
    %v468 = vld [vmem:[#allocation5 + $0xc30] sm:$0xff]
    %v469 = vld [vmem:[#allocation5 + $0xc38] sm:$0xff]
    %v470 = vld [vmem:[#allocation5 + $0xc40] sm:$0xff]
    %v471 = vld [vmem:[#allocation5 + $0xc48] sm:$0xff]
    %v472 = vld [vmem:[#allocation5 + $0xc50] sm:$0xff]
    %v473 = vld [vmem:[#allocation5 + $0xc58] sm:$0xff]
    %v474 = vld [vmem:[#allocation5 + $0xc60] sm:$0xff]
    %v475 = vld [vmem:[#allocation5 + $0xc68] sm:$0xff]
    %v476 = vld [vmem:[#allocation5 + $0xc70] sm:$0xff]
    %v477 = vld [vmem:[#allocation5 + $0xc78] sm:$0xff]
    %v478 = vld [vmem:[#allocation5 + $0xc80] sm:$0xff]
    %v479 = vld [vmem:[#allocation5 + $0xc88] sm:$0xff]
    %v480 = vld [vmem:[#allocation5 + $0xc90] sm:$0xff]
    %v481 = vld [vmem:[#allocation5 + $0xc98] sm:$0xff]
    %v482 = vld [vmem:[#allocation5 + $0xca0] sm:$0xff]
    %v483 = vld [vmem:[#allocation5 + $0xca8] sm:$0xff]
    %v484 = vld [vmem:[#allocation5 + $0xcb0] sm:$0xff]
    %v485 = vld [vmem:[#allocation5 + $0xcb8] sm:$0xff]
    %v486 = vld [vmem:[#allocation5 + $0xcc0] sm:$0xff]
    %v487 = vld [vmem:[#allocation5 + $0xcc8] sm:$0xff]
    %v488 = vld [vmem:[#allocation5 + $0xcd0] sm:$0xff]
    %v489 = vld [vmem:[#allocation5 + $0xcd8] sm:$0xff]
    %v490 = vld [vmem:[#allocation5 + $0xce0] sm:$0xff]
    %v491 = vld [vmem:[#allocation5 + $0xce8] sm:$0xff]
    %v492 = vld [vmem:[#allocation5 + $0xcf0] sm:$0xff]
    %v493 = vld [vmem:[#allocation5 + $0xcf8] sm:$0xff]
    %v494 = vld [vmem:[#allocation5 + $0xd00] sm:$0xff]
    %v495 = vld [vmem:[#allocation5 + $0xd08] sm:$0xff]
    %v496 = vld [vmem:[#allocation5 + $0xd10] sm:$0xff]
    %v497 = vld [vmem:[#allocation5 + $0xd18] sm:$0xff]
    %v498 = vld [vmem:[#allocation5 + $0xd20] sm:$0xff]
    %v499 = vld [vmem:[#allocation5 + $0xd28] sm:$0xff]
    %v500 = vld [vmem:[#allocation5 + $0xd30] sm:$0xff]
    %v501 = vld [vmem:[#allocation5 + $0xd38] sm:$0xff]
    %v502 = vld [vmem:[#allocation5 + $0xd40] sm:$0xff]
    %v503 = vld [vmem:[#allocation5 + $0xd48] sm:$0xff]
    %v504 = vld [vmem:[#allocation5 + $0xd50] sm:$0xff]
    %v505 = vld [vmem:[#allocation5 + $0xd58] sm:$0xff]
    %v506 = vld [vmem:[#allocation5 + $0xd60] sm:$0xff]
    %v507 = vld [vmem:[#allocation5 + $0xd68] sm:$0xff]
    %v508 = vld [vmem:[#allocation5 + $0xd70] sm:$0xff]
    %v509 = vld [vmem:[#allocation5 + $0xd78] sm:$0xff]
    %v510 = vld [vmem:[#allocation5 + $0xd80] sm:$0xff]
    %v511 = vld [vmem:[#allocation5 + $0xd88] sm:$0xff]
    %v512 = vld [vmem:[#allocation5 + $0xd90] sm:$0xff]
    %v513 = vld [vmem:[#allocation5 + $0xd98] sm:$0xff]
    %v514 = vld [vmem:[#allocation5 + $0xda0] sm:$0xff]
    %v515 = vld [vmem:[#allocation5 + $0xda8] sm:$0xff]
    %v516 = vld [vmem:[#allocation5 + $0xdb0] sm:$0xff]
    %v517 = vld [vmem:[#allocation5 + $0xdb8] sm:$0xff]
    %v518 = vld [vmem:[#allocation5 + $0xdc0] sm:$0xff]
    %v519 = vld [vmem:[#allocation5 + $0xdc8] sm:$0xff]
    %v520 = vld [vmem:[#allocation5 + $0xdd0] sm:$0xff]
    %v521 = vld [vmem:[#allocation5 + $0xdd8] sm:$0xff]
    %v522 = vld [vmem:[#allocation5 + $0xde0] sm:$0xff]
    %v523 = vld [vmem:[#allocation5 + $0xde8] sm:$0xff]
    %v524 = vld [vmem:[#allocation5 + $0xdf0] sm:$0xff]
    %v525 = vld [vmem:[#allocation5 + $0xdf8] sm:$0xff]
    %v526 = vld [vmem:[#allocation5 + $0xe00] sm:$0xff]
    %v527 = vld [vmem:[#allocation5 + $0xe08] sm:$0xff]
    %v528 = vld [vmem:[#allocation5 + $0xe10] sm:$0xff]
    %v529 = vld [vmem:[#allocation5 + $0xe18] sm:$0xff]
    %v530 = vld [vmem:[#allocation5 + $0xe20] sm:$0xff]
    %v531 = vld [vmem:[#allocation5 + $0xe28] sm:$0xff]
    %v532 = vld [vmem:[#allocation5 + $0xe30] sm:$0xff]
    %v533 = vld [vmem:[#allocation5 + $0xe38] sm:$0xff]
    %v534 = vld [vmem:[#allocation5 + $0xe40] sm:$0xff]
    %v535 = vld [vmem:[#allocation5 + $0xe48] sm:$0xff]
    %v536 = vld [vmem:[#allocation5 + $0xe50] sm:$0xff]
    %v537 = vld [vmem:[#allocation5 + $0xe58] sm:$0xff]
    %v538 = vld [vmem:[#allocation5 + $0xe60] sm:$0xff]
    %v539 = vld [vmem:[#allocation5 + $0xe68] sm:$0xff]
    %v540 = vld [vmem:[#allocation5 + $0xe70] sm:$0xff]
    %v541 = vld [vmem:[#allocation5 + $0xe78] sm:$0xff]
    %v542 = vld [vmem:[#allocation5 + $0xe80] sm:$0xff]
    %v543 = vld [vmem:[#allocation5 + $0xe88] sm:$0xff]
    %v544 = vld [vmem:[#allocation5 + $0xe90] sm:$0xff]
    %v545 = vld [vmem:[#allocation5 + $0xe98] sm:$0xff]
    %v546 = vld [vmem:[#allocation5 + $0xea0] sm:$0xff]
    %v547 = vld [vmem:[#allocation5 + $0xea8] sm:$0xff]
    %v548 = vld [vmem:[#allocation5 + $0xeb0] sm:$0xff]
    %v549 = vld [vmem:[#allocation5 + $0xeb8] sm:$0xff]
    %v550 = vld [vmem:[#allocation5 + $0xec0] sm:$0xff]
    %v551 = vld [vmem:[#allocation5 + $0xec8] sm:$0xff]
    %v552 = vld [vmem:[#allocation5 + $0xed0] sm:$0xff]
    %v553 = vld [vmem:[#allocation5 + $0xed8] sm:$0xff]
    %v554 = vld [vmem:[#allocation5 + $0xee0] sm:$0xff]
    %v555 = vld [vmem:[#allocation5 + $0xee8] sm:$0xff]
    %v556 = vld [vmem:[#allocation5 + $0xef0] sm:$0xff]
    %v557 = vld [vmem:[#allocation5 + $0xef8] sm:$0xff]
    %v558 = vld [vmem:[#allocation5 + $0xf00] sm:$0xff]
    %v559 = vld [vmem:[#allocation5 + $0xf08] sm:$0xff]
    %v560 = vld [vmem:[#allocation5 + $0xf10] sm:$0xff]
    %v561 = vld [vmem:[#allocation5 + $0xf18] sm:$0xff]
    %v562 = vld [vmem:[#allocation5 + $0xf20] sm:$0xff]
    %v563 = vld [vmem:[#allocation5 + $0xf28] sm:$0xff]
    %v564 = vld [vmem:[#allocation5 + $0xf30] sm:$0xff]
    %v565 = vld [vmem:[#allocation5 + $0xf38] sm:$0xff]
    %v566 = vld [vmem:[#allocation5 + $0xf40] sm:$0xff]
    %v567 = vld [vmem:[#allocation5 + $0xf48] sm:$0xff]
    %v568 = vld [vmem:[#allocation5 + $0xf50] sm:$0xff]
    %v569 = vld [vmem:[#allocation5 + $0xf58] sm:$0xff]
    %v570 = vld [vmem:[#allocation5 + $0xf60] sm:$0xff]
    %v571 = vld [vmem:[#allocation5 + $0xf68] sm:$0xff]
    %v572 = vld [vmem:[#allocation5 + $0xf70] sm:$0xff]
    %v573 = vld [vmem:[#allocation5 + $0xf78] sm:$0xff]
    %v574 = vld [vmem:[#allocation5 + $0xf80] sm:$0xff]
    %v575 = vld [vmem:[#allocation5 + $0xf88] sm:$0xff]
    %v576 = vld [vmem:[#allocation5 + $0xf90] sm:$0xff]
    %v577 = vld [vmem:[#allocation5 + $0xf98] sm:$0xff]
    %v578 = vld [vmem:[#allocation5 + $0xfa0] sm:$0xff]
    %v579 = vld [vmem:[#allocation5 + $0xfa8] sm:$0xff]
    %v580 = vld [vmem:[#allocation5 + $0xfb0] sm:$0xff]
    %v581 = vld [vmem:[#allocation5 + $0xfb8] sm:$0xff]
    %v582 = vld [vmem:[#allocation5 + $0xfc0] sm:$0xff]
    %v583 = vld [vmem:[#allocation5 + $0xfc8] sm:$0xff]
    %v584 = vld [vmem:[#allocation5 + $0xfd0] sm:$0xff]
    %v585 = vld [vmem:[#allocation5 + $0xfd8] sm:$0xff]
    %v586 = vld [vmem:[#allocation5 + $0xfe0] sm:$0xff]
    %v587 = vld [vmem:[#allocation5 + $0xfe8] sm:$0xff]
    %v588 = vld [vmem:[#allocation5 + $0xff0] sm:$0xff]
    %v589 = vld [vmem:[#allocation5 + $0xff8] sm:$0xff]
    %v590 = vld [vmem:[#allocation5 + $0x1000] sm:$0xff]
    %v591 = vld [vmem:[#allocation5 + $0x1008] sm:$0xff]
    %v592 = vld [vmem:[#allocation5 + $0x1010] sm:$0xff]
    %v593 = vld [vmem:[#allocation5 + $0x1018] sm:$0xff]
    %v594 = vld [vmem:[#allocation5 + $0x1020] sm:$0xff]
    %v595 = vld [vmem:[#allocation5 + $0x1028] sm:$0xff]
    %v596 = vld [vmem:[#allocation5 + $0x1030] sm:$0xff]
    %v597 = vld [vmem:[#allocation5 + $0x1038] sm:$0xff]
    %v598 = vld [vmem:[#allocation5 + $0x1040] sm:$0xff]
    %v599 = vld [vmem:[#allocation5 + $0x1048] sm:$0xff]
    %v600 = vld [vmem:[#allocation5 + $0x1050] sm:$0xff]
    %v601 = vld [vmem:[#allocation5 + $0x1058] sm:$0xff]
    %v602 = vld [vmem:[#allocation5 + $0x1060] sm:$0xff]
    %v603 = vld [vmem:[#allocation5 + $0x1068] sm:$0xff]
    %v604 = vld [vmem:[#allocation5 + $0x1070] sm:$0xff]
    %v605 = vld [vmem:[#allocation5 + $0x1078] sm:$0xff]
    %v606 = vld [vmem:[#allocation5 + $0x1080] sm:$0xff]
    %v607 = vld [vmem:[#allocation5 + $0x1088] sm:$0xff]
    %v608 = vld [vmem:[#allocation5 + $0x1090] sm:$0xff]
    %v609 = vld [vmem:[#allocation5 + $0x1098] sm:$0xff]
    %v610 = vld [vmem:[#allocation5 + $0x10a0] sm:$0xff]
    %v611 = vld [vmem:[#allocation5 + $0x10a8] sm:$0xff]
    %v612 = vld [vmem:[#allocation5 + $0x10b0] sm:$0xff]
    %v613 = vld [vmem:[#allocation5 + $0x10b8] sm:$0xff]
    %v614 = vld [vmem:[#allocation5 + $0x10c0] sm:$0xff]
    %v615 = vld [vmem:[#allocation5 + $0x10c8] sm:$0xff]
    %v616 = vld [vmem:[#allocation5 + $0x10d0] sm:$0xff]
    %v617 = vld [vmem:[#allocation5 + $0x10d8] sm:$0xff]
    %v618 = vld [vmem:[#allocation5 + $0x10e0] sm:$0xff]
    %v619 = vld [vmem:[#allocation5 + $0x10e8] sm:$0xff]
    %v620 = vld [vmem:[#allocation5 + $0x10f0] sm:$0xff]
    %v621 = vld [vmem:[#allocation5 + $0x10f8] sm:$0xff]
    %v622 = vld [vmem:[#allocation5 + $0x1100] sm:$0xff]
    %v623 = vld [vmem:[#allocation5 + $0x1108] sm:$0xff]
    %v624 = vld [vmem:[#allocation5 + $0x1110] sm:$0xff]
    %v625 = vld [vmem:[#allocation5 + $0x1118] sm:$0xff]
    %v626 = vld [vmem:[#allocation5 + $0x1120] sm:$0xff]
    %v627 = vld [vmem:[#allocation5 + $0x1128] sm:$0xff]
    %v628 = vld [vmem:[#allocation5 + $0x1130] sm:$0xff]
    %v629 = vld [vmem:[#allocation5 + $0x1138] sm:$0xff]
    %v630 = vld [vmem:[#allocation5 + $0x1140] sm:$0xff]
    %v631 = vld [vmem:[#allocation5 + $0x1148] sm:$0xff]
    %v632 = vld [vmem:[#allocation5 + $0x1150] sm:$0xff]
    %v633 = vld [vmem:[#allocation5 + $0x1158] sm:$0xff]
    %v634 = vld [vmem:[#allocation5 + $0x1160] sm:$0xff]
    %v635 = vld [vmem:[#allocation5 + $0x1168] sm:$0xff]
    %v636 = vld [vmem:[#allocation5 + $0x1170] sm:$0xff]
    %v637 = vld [vmem:[#allocation5 + $0x1178] sm:$0xff]
    %v638 = vld [vmem:[#allocation5 + $0x1180] sm:$0xff]
    %v639 = vld [vmem:[#allocation5 + $0x1188] sm:$0xff]
    %v640 = vld [vmem:[#allocation5 + $0x1190] sm:$0xff]
    %v641 = vld [vmem:[#allocation5 + $0x1198] sm:$0xff]
    %v642 = vld [vmem:[#allocation5 + $0x11a0] sm:$0xff]
    %v643 = vld [vmem:[#allocation5 + $0x11a8] sm:$0xff]
    %v644 = vld [vmem:[#allocation5 + $0x11b0] sm:$0xff]
    %v645 = vld [vmem:[#allocation5 + $0x11b8] sm:$0xff]
    %v646 = vld [vmem:[#allocation5 + $0x11c0] sm:$0xff]
    %v647 = vld [vmem:[#allocation5 + $0x11c8] sm:$0xff]
    %v648 = vld [vmem:[#allocation5 + $0x11d0] sm:$0xff]
    %v649 = vld [vmem:[#allocation5 + $0x11d8] sm:$0xff]
    %v650 = vld [vmem:[#allocation5 + $0x11e0] sm:$0xff]
    %v651 = vld [vmem:[#allocation5 + $0x11e8] sm:$0xff]
    %v652 = vld [vmem:[#allocation5 + $0x11f0] sm:$0xff]
    %v653 = vld [vmem:[#allocation5 + $0x11f8] sm:$0xff]
    %v654 = vld [vmem:[#allocation5 + $0x1200] sm:$0xff]
    %v655 = vld [vmem:[#allocation5 + $0x1208] sm:$0xff]
    %v656 = vld [vmem:[#allocation5 + $0x1210] sm:$0xff]
    %v657 = vld [vmem:[#allocation5 + $0x1218] sm:$0xff]
    %v658 = vld [vmem:[#allocation5 + $0x1220] sm:$0xff]
    %v659 = vld [vmem:[#allocation5 + $0x1228] sm:$0xff]
    %v660 = vld [vmem:[#allocation5 + $0x1230] sm:$0xff]
    %v661 = vld [vmem:[#allocation5 + $0x1238] sm:$0xff]
    %v662 = vld [vmem:[#allocation5 + $0x1240] sm:$0xff]
    %v663 = vld [vmem:[#allocation5 + $0x1248] sm:$0xff]
    %v664 = vld [vmem:[#allocation5 + $0x1250] sm:$0xff]
    %v665 = vld [vmem:[#allocation5 + $0x1258] sm:$0xff]
    %v666 = vld [vmem:[#allocation5 + $0x1260] sm:$0xff]
    %v667 = vld [vmem:[#allocation5 + $0x1268] sm:$0xff]
    %v668 = vld [vmem:[#allocation5 + $0x1270] sm:$0xff]
    %v669 = vld [vmem:[#allocation5 + $0x1278] sm:$0xff]
    %v670 = vld [vmem:[#allocation5 + $0x1280] sm:$0xff]
    %v671 = vld [vmem:[#allocation5 + $0x1288] sm:$0xff]
    %v672 = vld [vmem:[#allocation5 + $0x1290] sm:$0xff]
    %v673 = vld [vmem:[#allocation5 + $0x1298] sm:$0xff]
    %v674 = vld [vmem:[#allocation5 + $0x12a0] sm:$0xff]
    %v675 = vld [vmem:[#allocation5 + $0x12a8] sm:$0xff]
    %v676 = vld [vmem:[#allocation5 + $0x12b0] sm:$0xff]
    %v677 = vld [vmem:[#allocation5 + $0x12b8] sm:$0xff]
    %v678 = vld [vmem:[#allocation5 + $0x12c0] sm:$0xff]
    %v679 = vld [vmem:[#allocation5 + $0x12c8] sm:$0xff]
    %v680 = vld [vmem:[#allocation5 + $0x12d0] sm:$0xff]
    %v681 = vld [vmem:[#allocation5 + $0x12d8] sm:$0xff]
    %v682 = vld [vmem:[#allocation5 + $0x12e0] sm:$0xff]
    %v683 = vld [vmem:[#allocation5 + $0x12e8] sm:$0xff]
    %v684 = vld [vmem:[#allocation5 + $0x12f0] sm:$0xff]
    %v685 = vld [vmem:[#allocation5 + $0x12f8] sm:$0xff]
    %v686 = vld [vmem:[#allocation5 + $0x1300] sm:$0xff]
    %v687 = vld [vmem:[#allocation5 + $0x1308] sm:$0xff]
    %v688 = vld [vmem:[#allocation5 + $0x1310] sm:$0xff]
    %v689 = vld [vmem:[#allocation5 + $0x1318] sm:$0xff]
    %v690 = vld [vmem:[#allocation5 + $0x1320] sm:$0xff]
    %v691 = vld [vmem:[#allocation5 + $0x1328] sm:$0xff]
    %v692 = vld [vmem:[#allocation5 + $0x1330] sm:$0xff]
    %v693 = vld [vmem:[#allocation5 + $0x1338] sm:$0xff]
    %v694 = vld [vmem:[#allocation5 + $0x1340] sm:$0xff]
    %v695 = vld [vmem:[#allocation5 + $0x1348] sm:$0xff]
    %v696 = vld [vmem:[#allocation5 + $0x1350] sm:$0xff]
    %v697 = vld [vmem:[#allocation5 + $0x1358] sm:$0xff]
    %v698 = vld [vmem:[#allocation5 + $0x1360] sm:$0xff]
    %v699 = vld [vmem:[#allocation5 + $0x1368] sm:$0xff]
    %v700 = vld [vmem:[#allocation5 + $0x1370] sm:$0xff]
    %v701 = vld [vmem:[#allocation5 + $0x1378] sm:$0xff]
    %v702 = vld [vmem:[#allocation5 + $0x1380] sm:$0xff]
    %v703 = vld [vmem:[#allocation5 + $0x1388] sm:$0xff]
    %v704 = vld [vmem:[#allocation5 + $0x1390] sm:$0xff]
    %v705 = vld [vmem:[#allocation5 + $0x1398] sm:$0xff]
    %v706 = vld [vmem:[#allocation5 + $0x13a0] sm:$0xff]
    %v707 = vld [vmem:[#allocation5 + $0x13a8] sm:$0xff]
    %v708 = vld [vmem:[#allocation5 + $0x13b0] sm:$0xff]
    %v709 = vld [vmem:[#allocation5 + $0x13b8] sm:$0xff]
    %v710 = vld [vmem:[#allocation5 + $0x13c0] sm:$0xff]
    %v711 = vld [vmem:[#allocation5 + $0x13c8] sm:$0xff]
    %v712 = vld [vmem:[#allocation5 + $0x13d0] sm:$0xff]
    %v713 = vld [vmem:[#allocation5 + $0x13d8] sm:$0xff]
    %v714 = vld [vmem:[#allocation5 + $0x13e0] sm:$0xff]
    %v715 = vld [vmem:[#allocation5 + $0x13e8] sm:$0xff]
    %v716 = vld [vmem:[#allocation5 + $0x13f0] sm:$0xff]
    %v717 = vld [vmem:[#allocation5 + $0x13f8] sm:$0xff]
    %v718 = vld [vmem:[#allocation5 + $0x1400] sm:$0xff]
    %v719 = vld [vmem:[#allocation5 + $0x1408] sm:$0xff]
    %v720 = vld [vmem:[#allocation5 + $0x1410] sm:$0xff]
    %v721 = vld [vmem:[#allocation5 + $0x1418] sm:$0xff]
    %v722 = vld [vmem:[#allocation5 + $0x1420] sm:$0xff]
    %v723 = vld [vmem:[#allocation5 + $0x1428] sm:$0xff]
    %v724 = vld [vmem:[#allocation5 + $0x1430] sm:$0xff]
    %v725 = vld [vmem:[#allocation5 + $0x1438] sm:$0xff]
    %v726 = vld [vmem:[#allocation5 + $0x1440] sm:$0xff]
    %v727 = vld [vmem:[#allocation5 + $0x1448] sm:$0xff]
    %v728 = vld [vmem:[#allocation5 + $0x1450] sm:$0xff]
    %v729 = vld [vmem:[#allocation5 + $0x1458] sm:$0xff]
    %v730 = vld [vmem:[#allocation5 + $0x1460] sm:$0xff]
    %v731 = vld [vmem:[#allocation5 + $0x1468] sm:$0xff]
    %v732 = vld [vmem:[#allocation5 + $0x1470] sm:$0xff]
    %v733 = vld [vmem:[#allocation5 + $0x1478] sm:$0xff]
    %v734 = vld [vmem:[#allocation5 + $0x1480] sm:$0xff]
    %v735 = vld [vmem:[#allocation5 + $0x1488] sm:$0xff]
    %v736 = vld [vmem:[#allocation5 + $0x1490] sm:$0xff]
    %v737 = vld [vmem:[#allocation5 + $0x1498] sm:$0xff]
    %v738 = vld [vmem:[#allocation5 + $0x14a0] sm:$0xff]
    %v739 = vld [vmem:[#allocation5 + $0x14a8] sm:$0xff]
    %v740 = vld [vmem:[#allocation5 + $0x14b0] sm:$0xff]
    %v741 = vld [vmem:[#allocation5 + $0x14b8] sm:$0xff]
    %v742 = vld [vmem:[#allocation5 + $0x14c0] sm:$0xff]
    %v743 = vld [vmem:[#allocation5 + $0x14c8] sm:$0xff]
    %v744 = vld [vmem:[#allocation5 + $0x14d0] sm:$0xff]
    %v745 = vld [vmem:[#allocation5 + $0x14d8] sm:$0xff]
    %v746 = vld [vmem:[#allocation5 + $0x14e0] sm:$0xff]
    %v747 = vld [vmem:[#allocation5 + $0x14e8] sm:$0xff]
    %v748 = vld [vmem:[#allocation5 + $0x14f0] sm:$0xff]
    %v749 = vld [vmem:[#allocation5 + $0x14f8] sm:$0xff]
    %v750 = vld [vmem:[#allocation5 + $0x1500] sm:$0xff]
    %v751 = vld [vmem:[#allocation5 + $0x1508] sm:$0xff]
    %v752 = vld [vmem:[#allocation5 + $0x1510] sm:$0xff]
    %v753 = vld [vmem:[#allocation5 + $0x1518] sm:$0xff]
    %v754 = vld [vmem:[#allocation5 + $0x1520] sm:$0xff]
    %v755 = vld [vmem:[#allocation5 + $0x1528] sm:$0xff]
    %v756 = vld [vmem:[#allocation5 + $0x1530] sm:$0xff]
    %v757 = vld [vmem:[#allocation5 + $0x1538] sm:$0xff]
    %v758 = vld [vmem:[#allocation5 + $0x1540] sm:$0xff]
    %v759 = vld [vmem:[#allocation5 + $0x1548] sm:$0xff]
    %v760 = vld [vmem:[#allocation5 + $0x1550] sm:$0xff]
    %v761 = vld [vmem:[#allocation5 + $0x1558] sm:$0xff]
    %v762 = vld [vmem:[#allocation5 + $0x1560] sm:$0xff]
    %v763 = vld [vmem:[#allocation5 + $0x1568] sm:$0xff]
    %v764 = vld [vmem:[#allocation5 + $0x1570] sm:$0xff]
    %v765 = vld [vmem:[#allocation5 + $0x1578] sm:$0xff]
    %v766 = vld [vmem:[#allocation5 + $0x1580] sm:$0xff]
    %v767 = vld [vmem:[#allocation5 + $0x1588] sm:$0xff]
    %v768 = vld [vmem:[#allocation5 + $0x1590] sm:$0xff]
    %v769 = vld [vmem:[#allocation5 + $0x1598] sm:$0xff]
    %v770 = vld [vmem:[#allocation5 + $0x15a0] sm:$0xff]
    %v771 = vld [vmem:[#allocation5 + $0x15a8] sm:$0xff]
    %v772 = vld [vmem:[#allocation5 + $0x15b0] sm:$0xff]
    %v773 = vld [vmem:[#allocation5 + $0x15b8] sm:$0xff]
    %v774 = vld [vmem:[#allocation5 + $0x15c0] sm:$0xff]
    %v775 = vld [vmem:[#allocation5 + $0x15c8] sm:$0xff]
    %v776 = vld [vmem:[#allocation5 + $0x15d0] sm:$0xff]
    %v777 = vld [vmem:[#allocation5 + $0x15d8] sm:$0xff]
    %v778 = vld [vmem:[#allocation5 + $0x15e0] sm:$0xff]
    %v779 = vld [vmem:[#allocation5 + $0x15e8] sm:$0xff]
    %v780 = vld [vmem:[#allocation5 + $0x15f0] sm:$0xff]
    %v781 = vld [vmem:[#allocation5 + $0x15f8] sm:$0xff]
    %v782 = vld [vmem:[#allocation5 + $0x1600] sm:$0xff]
    %v783 = vld [vmem:[#allocation5 + $0x1608] sm:$0xff]
    %v784 = vld [vmem:[#allocation5 + $0x1610] sm:$0xff]
    %v785 = vld [vmem:[#allocation5 + $0x1618] sm:$0xff]
    %v786 = vld [vmem:[#allocation5 + $0x1620] sm:$0xff]
    %v787 = vld [vmem:[#allocation5 + $0x1628] sm:$0xff]
    %v788 = vld [vmem:[#allocation5 + $0x1630] sm:$0xff]
    %v789 = vld [vmem:[#allocation5 + $0x1638] sm:$0xff]
    %v790 = vld [vmem:[#allocation5 + $0x1640] sm:$0xff]
    %v791 = vld [vmem:[#allocation5 + $0x1648] sm:$0xff]
    %v792 = vld [vmem:[#allocation5 + $0x1650] sm:$0xff]
    %v793 = vld [vmem:[#allocation5 + $0x1658] sm:$0xff]
    %v794 = vld [vmem:[#allocation5 + $0x1660] sm:$0xff]
    %v795 = vld [vmem:[#allocation5 + $0x1668] sm:$0xff]
    %v796 = vld [vmem:[#allocation5 + $0x1670] sm:$0xff]
    %v797 = vld [vmem:[#allocation5 + $0x1678] sm:$0xff]
    %v798 = vld [vmem:[#allocation5 + $0x1680] sm:$0xff]
    %v799 = vld [vmem:[#allocation5 + $0x1688] sm:$0xff]
    %v800 = vld [vmem:[#allocation5 + $0x1690] sm:$0xff]
    %v801 = vld [vmem:[#allocation5 + $0x1698] sm:$0xff]
    %v802 = vld [vmem:[#allocation5 + $0x16a0] sm:$0xff]
    %v803 = vld [vmem:[#allocation5 + $0x16a8] sm:$0xff]
    %v804 = vld [vmem:[#allocation5 + $0x16b0] sm:$0xff]
    %v805 = vld [vmem:[#allocation5 + $0x16b8] sm:$0xff]
    %v806 = vld [vmem:[#allocation5 + $0x16c0] sm:$0xff]
    %v807 = vld [vmem:[#allocation5 + $0x16c8] sm:$0xff]
    %v808 = vld [vmem:[#allocation5 + $0x16d0] sm:$0xff]
    %v809 = vld [vmem:[#allocation5 + $0x16d8] sm:$0xff]
    %v810 = vld [vmem:[#allocation5 + $0x16e0] sm:$0xff]
    %v811 = vld [vmem:[#allocation5 + $0x16e8] sm:$0xff]
    %v812 = vld [vmem:[#allocation5 + $0x16f0] sm:$0xff]
    %v813 = vld [vmem:[#allocation5 + $0x16f8] sm:$0xff]
    %v814 = vld [vmem:[#allocation5 + $0x1700] sm:$0xff]
    %v815 = vld [vmem:[#allocation5 + $0x1708] sm:$0xff]
    %v816 = vld [vmem:[#allocation5 + $0x1710] sm:$0xff]
    %v817 = vld [vmem:[#allocation5 + $0x1718] sm:$0xff]
    %v818 = vld [vmem:[#allocation5 + $0x1720] sm:$0xff]
    %v819 = vld [vmem:[#allocation5 + $0x1728] sm:$0xff]
    %v820 = vld [vmem:[#allocation5 + $0x1730] sm:$0xff]
    %v821 = vld [vmem:[#allocation5 + $0x1738] sm:$0xff]
    %v822 = vld [vmem:[#allocation5 + $0x1740] sm:$0xff]
    %v823 = vld [vmem:[#allocation5 + $0x1748] sm:$0xff]
    %v824 = vld [vmem:[#allocation5 + $0x1750] sm:$0xff]
    %v825 = vld [vmem:[#allocation5 + $0x1758] sm:$0xff]
    %v826 = vld [vmem:[#allocation5 + $0x1760] sm:$0xff]
    %v827 = vld [vmem:[#allocation5 + $0x1768] sm:$0xff]
    %v828 = vld [vmem:[#allocation5 + $0x1770] sm:$0xff]
    %v829 = vld [vmem:[#allocation5 + $0x1778] sm:$0xff]
    %v830 = vld [vmem:[#allocation5 + $0x1780] sm:$0xff]
    %v831 = vld [vmem:[#allocation5 + $0x1788] sm:$0xff]
    %v832 = vld [vmem:[#allocation5 + $0x1790] sm:$0xff]
    %v833 = vld [vmem:[#allocation5 + $0x1798] sm:$0xff]
    %v834 = vld [vmem:[#allocation5 + $0x17a0] sm:$0xff]
    %v835 = vld [vmem:[#allocation5 + $0x17a8] sm:$0xff]
    %v836 = vld [vmem:[#allocation5 + $0x17b0] sm:$0xff]
    %v837 = vld [vmem:[#allocation5 + $0x17b8] sm:$0xff]
    %v838 = vld [vmem:[#allocation5 + $0x17c0] sm:$0xff]
    %v839 = vld [vmem:[#allocation5 + $0x17c8] sm:$0xff]
    %v840 = vld [vmem:[#allocation5 + $0x17d0] sm:$0xff]
    %v841 = vld [vmem:[#allocation5 + $0x17d8] sm:$0xff]
    %v842 = vld [vmem:[#allocation5 + $0x17e0] sm:$0xff]
    %v843 = vld [vmem:[#allocation5 + $0x17e8] sm:$0xff]
    %v844 = vld [vmem:[#allocation5 + $0x17f0] sm:$0xff]
    %v845 = vld [vmem:[#allocation5 + $0x17f8] sm:$0xff]
    %v846 = vld [vmem:[#allocation5 + $0x1800] sm:$0xff]
    %v847 = vld [vmem:[#allocation5 + $0x1808] sm:$0xff]
    %v848 = vld [vmem:[#allocation5 + $0x1810] sm:$0xff]
    %v849 = vld [vmem:[#allocation5 + $0x1818] sm:$0xff]
    %v850 = vld [vmem:[#allocation5 + $0x1820] sm:$0xff]
    %v851 = vld [vmem:[#allocation5 + $0x1828] sm:$0xff]
    %v852 = vld [vmem:[#allocation5 + $0x1830] sm:$0xff]
    %v853 = vld [vmem:[#allocation5 + $0x1838] sm:$0xff]
    %v854 = vld [vmem:[#allocation5 + $0x1840] sm:$0xff]
    %v855 = vld [vmem:[#allocation5 + $0x1848] sm:$0xff]
    %v856 = vld [vmem:[#allocation5 + $0x1850] sm:$0xff]
    %v857 = vld [vmem:[#allocation5 + $0x1858] sm:$0xff]
    %v858 = vld [vmem:[#allocation5 + $0x1860] sm:$0xff]
    %v859 = vld [vmem:[#allocation5 + $0x1868] sm:$0xff]
    %v860 = vld [vmem:[#allocation5 + $0x1870] sm:$0xff]
    %v861 = vld [vmem:[#allocation5 + $0x1878] sm:$0xff]
    %v862 = vld [vmem:[#allocation5 + $0x1880] sm:$0xff]
    %v863 = vld [vmem:[#allocation5 + $0x1888] sm:$0xff]
    %v864 = vld [vmem:[#allocation5 + $0x1890] sm:$0xff]
    %v865 = vld [vmem:[#allocation5 + $0x1898] sm:$0xff]
    %v866 = vld [vmem:[#allocation5 + $0x18a0] sm:$0xff]
    %v867 = vld [vmem:[#allocation5 + $0x18a8] sm:$0xff]
    %v868 = vld [vmem:[#allocation5 + $0x18b0] sm:$0xff]
    %v869 = vld [vmem:[#allocation5 + $0x18b8] sm:$0xff]
    %v870 = vld [vmem:[#allocation5 + $0x18c0] sm:$0xff]
    %v871 = vld [vmem:[#allocation5 + $0x18c8] sm:$0xff]
    %v872 = vld [vmem:[#allocation5 + $0x18d0] sm:$0xff]
    %v873 = vld [vmem:[#allocation5 + $0x18d8] sm:$0xff]
    %v874 = vld [vmem:[#allocation5 + $0x18e0] sm:$0xff]
    %v875 = vld [vmem:[#allocation5 + $0x18e8] sm:$0xff]
    %v876 = vld [vmem:[#allocation5 + $0x18f0] sm:$0xff]
    %v877 = vld [vmem:[#allocation5 + $0x18f8] sm:$0xff]
    %v878 = vld [vmem:[#allocation5 + $0x1900] sm:$0xff]
    %v879 = vld [vmem:[#allocation5 + $0x1908] sm:$0xff]
    %v880 = vld [vmem:[#allocation5 + $0x1910] sm:$0xff]
    %v881 = vld [vmem:[#allocation5 + $0x1918] sm:$0xff]
    %v882 = vld [vmem:[#allocation5 + $0x1920] sm:$0xff]
    %v883 = vld [vmem:[#allocation5 + $0x1928] sm:$0xff]
    %v884 = vld [vmem:[#allocation5 + $0x1930] sm:$0xff]
    %v885 = vld [vmem:[#allocation5 + $0x1938] sm:$0xff]
    %v886 = vld [vmem:[#allocation5 + $0x1940] sm:$0xff]
    %v887 = vld [vmem:[#allocation5 + $0x1948] sm:$0xff]
    %v888 = vld [vmem:[#allocation5 + $0x1950] sm:$0xff]
    %v889 = vld [vmem:[#allocation5 + $0x1958] sm:$0xff]
    %v890 = vld [vmem:[#allocation5 + $0x1960] sm:$0xff]
    %v891 = vld [vmem:[#allocation5 + $0x1968] sm:$0xff]
    %v892 = vld [vmem:[#allocation5 + $0x1970] sm:$0xff]
    %v893 = vld [vmem:[#allocation5 + $0x1978] sm:$0xff]
    %v894 = vld [vmem:[#allocation5 + $0x1980] sm:$0xff]
    %v895 = vld [vmem:[#allocation5 + $0x1988] sm:$0xff]
    %v896 = vld [vmem:[#allocation5 + $0x1990] sm:$0xff]
    %v897 = vld [vmem:[#allocation5 + $0x1998] sm:$0xff]
    %v898 = vld [vmem:[#allocation5 + $0x19a0] sm:$0xff]
    %v899 = vld [vmem:[#allocation5 + $0x19a8] sm:$0xff]
    %v900 = vld [vmem:[#allocation5 + $0x19b0] sm:$0xff]
    %v901 = vld [vmem:[#allocation5 + $0x19b8] sm:$0xff]
    %v902 = vld [vmem:[#allocation5 + $0x19c0] sm:$0xff]
    %v903 = vld [vmem:[#allocation5 + $0x19c8] sm:$0xff]
    %v904 = vld [vmem:[#allocation5 + $0x19d0] sm:$0xff]
    %v905 = vld [vmem:[#allocation5 + $0x19d8] sm:$0xff]
    %v906 = vld [vmem:[#allocation5 + $0x19e0] sm:$0xff]
    %v907 = vld [vmem:[#allocation5 + $0x19e8] sm:$0xff]
    %v908 = vld [vmem:[#allocation5 + $0x19f0] sm:$0xff]
    %v909 = vld [vmem:[#allocation5 + $0x19f8] sm:$0xff]
    %v910 = vld [vmem:[#allocation5 + $0x1a00] sm:$0xff]
    %v911 = vld [vmem:[#allocation5 + $0x1a08] sm:$0xff]
    %v912 = vld [vmem:[#allocation5 + $0x1a10] sm:$0xff]
    %v913 = vld [vmem:[#allocation5 + $0x1a18] sm:$0xff]
    %v914 = vld [vmem:[#allocation5 + $0x1a20] sm:$0xff]
    %v915 = vld [vmem:[#allocation5 + $0x1a28] sm:$0xff]
    %v916 = vld [vmem:[#allocation5 + $0x1a30] sm:$0xff]
    %v917 = vld [vmem:[#allocation5 + $0x1a38] sm:$0xff]
    %v918 = vld [vmem:[#allocation5 + $0x1a40] sm:$0xff]
    %v919 = vld [vmem:[#allocation5 + $0x1a48] sm:$0xff]
    %v920 = vld [vmem:[#allocation5 + $0x1a50] sm:$0xff]
    %v921 = vld [vmem:[#allocation5 + $0x1a58] sm:$0xff]
    %v922 = vld [vmem:[#allocation5 + $0x1a60] sm:$0xff]
    %v923 = vld [vmem:[#allocation5 + $0x1a68] sm:$0xff]
    %v924 = vld [vmem:[#allocation5 + $0x1a70] sm:$0xff]
    %v925 = vld [vmem:[#allocation5 + $0x1a78] sm:$0xff]
    %v926 = vld [vmem:[#allocation5 + $0x1a80] sm:$0xff]
    %v927 = vld [vmem:[#allocation5 + $0x1a88] sm:$0xff]
    %v928 = vld [vmem:[#allocation5 + $0x1a90] sm:$0xff]
    %v929 = vld [vmem:[#allocation5 + $0x1a98] sm:$0xff]
    %v930 = vld [vmem:[#allocation5 + $0x1aa0] sm:$0xff]
    %v931 = vld [vmem:[#allocation5 + $0x1aa8] sm:$0xff]
    %v932 = vld [vmem:[#allocation5 + $0x1ab0] sm:$0xff]
    %v933 = vld [vmem:[#allocation5 + $0x1ab8] sm:$0xff]
    %v934 = vld [vmem:[#allocation5 + $0x1ac0] sm:$0xff]
    %v935 = vld [vmem:[#allocation5 + $0x1ac8] sm:$0xff]
    %v936 = vld [vmem:[#allocation5 + $0x1ad0] sm:$0xff]
    %v937 = vld [vmem:[#allocation5 + $0x1ad8] sm:$0xff]
    %v938 = vld [vmem:[#allocation5 + $0x1ae0] sm:$0xff]
    %v939 = vld [vmem:[#allocation5 + $0x1ae8] sm:$0xff]
    %v940 = vld [vmem:[#allocation5 + $0x1af0] sm:$0xff]
    %v941 = vld [vmem:[#allocation5 + $0x1af8] sm:$0xff]
    %v948 = vunpack.c.l.b16 %v72
    %v949 = vunpack.c.h.b16 %v72
    %v950 = vunpack.c.l.b16 %v73
    %v951 = vunpack.c.h.b16 %v73
    %v952 = vunpack.c.l.b16 %v74
    %v953 = vunpack.c.h.b16 %v74
    %v954 = vunpack.c.l.b16 %v75
    %v955 = vunpack.c.h.b16 %v75
    %v956 = vunpack.c.l.b16 %v76
    %v957 = vunpack.c.h.b16 %v76
    %v958 = vunpack.c.l.b16 %v77
    %v959 = vunpack.c.h.b16 %v77
    %v960 = vpack.c.b16 %v954, %v948
    %v961 = vpack.c.b16 %v955, %v949
    %v962 = vpack.c.b16 %v956, %v950
    %v963 = vpack.c.b16 %v957, %v951
    %v964 = vpack.c.b16 %v958, %v952
    %v965 = vpack.c.b16 %v959, %v953
    %v1836 = vunpack.c.l.b16 %v78
    %v1837 = vunpack.c.h.b16 %v78
    %v1838 = vunpack.c.l.b16 %v79
    %v1839 = vunpack.c.h.b16 %v79
    %v1840 = vunpack.c.l.b16 %v80
    %v1841 = vunpack.c.h.b16 %v80
    %v1842 = vunpack.c.l.b16 %v81
    %v1843 = vunpack.c.h.b16 %v81
    %v1844 = vunpack.c.l.b16 %v82
    %v1845 = vunpack.c.h.b16 %v82
    %v1846 = vunpack.c.l.b16 %v83
    %v1847 = vunpack.c.h.b16 %v83
    %v1848 = vunpack.c.l.b16 %v84
    %v1849 = vunpack.c.h.b16 %v84
    %v1850 = vunpack.c.l.b16 %v85
    %v1851 = vunpack.c.h.b16 %v85
    %v1852 = vunpack.c.l.b16 %v86
    %v1853 = vunpack.c.h.b16 %v86
    %v1854 = vunpack.c.l.b16 %v87
    %v1855 = vunpack.c.h.b16 %v87
    %v1856 = vunpack.c.l.b16 %v88
    %v1857 = vunpack.c.h.b16 %v88
    %v1858 = vunpack.c.l.b16 %v89
    %v1859 = vunpack.c.h.b16 %v89
    %v1860 = vunpack.c.l.b16 %v90
    %v1861 = vunpack.c.h.b16 %v90
    %v1862 = vunpack.c.l.b16 %v91
    %v1863 = vunpack.c.h.b16 %v91
    %v1864 = vunpack.c.l.b16 %v92
    %v1865 = vunpack.c.h.b16 %v92
    %v1866 = vunpack.c.l.b16 %v93
    %v1867 = vunpack.c.h.b16 %v93
    %v1868 = vunpack.c.l.b16 %v94
    %v1869 = vunpack.c.h.b16 %v94
    %v1870 = vunpack.c.l.b16 %v95
    %v1871 = vunpack.c.h.b16 %v95
    %v1872 = vunpack.c.l.b16 %v96
    %v1873 = vunpack.c.h.b16 %v96
    %v1874 = vunpack.c.l.b16 %v97
    %v1875 = vunpack.c.h.b16 %v97
    %v1876 = vunpack.c.l.b16 %v98
    %v1877 = vunpack.c.h.b16 %v98
    %v1878 = vunpack.c.l.b16 %v99
    %v1879 = vunpack.c.h.b16 %v99
    %v1880 = vunpack.c.l.b16 %v100
    %v1881 = vunpack.c.h.b16 %v100
    %v1882 = vunpack.c.l.b16 %v101
    %v1883 = vunpack.c.h.b16 %v101
    %v1884 = vunpack.c.l.b16 %v102
    %v1885 = vunpack.c.h.b16 %v102
    %v1886 = vunpack.c.l.b16 %v103
    %v1887 = vunpack.c.h.b16 %v103
    %v1888 = vunpack.c.l.b16 %v104
    %v1889 = vunpack.c.h.b16 %v104
    %v1890 = vunpack.c.l.b16 %v105
    %v1891 = vunpack.c.h.b16 %v105
    %v1892 = vunpack.c.l.b16 %v106
    %v1893 = vunpack.c.h.b16 %v106
    %v1894 = vunpack.c.l.b16 %v107
    %v1895 = vunpack.c.h.b16 %v107
    %v1896 = vunpack.c.l.b16 %v108
    %v1897 = vunpack.c.h.b16 %v108
    %v1898 = vunpack.c.l.b16 %v109
    %v1899 = vunpack.c.h.b16 %v109
    %v1900 = vunpack.c.l.b16 %v110
    %v1901 = vunpack.c.h.b16 %v110
    %v1902 = vunpack.c.l.b16 %v111
    %v1903 = vunpack.c.h.b16 %v111
    %v1904 = vunpack.c.l.b16 %v112
    %v1905 = vunpack.c.h.b16 %v112
    %v1906 = vunpack.c.l.b16 %v113
    %v1907 = vunpack.c.h.b16 %v113
    %v1908 = vunpack.c.l.b16 %v114
    %v1909 = vunpack.c.h.b16 %v114
    %v1910 = vunpack.c.l.b16 %v115
    %v1911 = vunpack.c.h.b16 %v115
    %v1912 = vunpack.c.l.b16 %v116
    %v1913 = vunpack.c.h.b16 %v116
    %v1914 = vunpack.c.l.b16 %v117
    %v1915 = vunpack.c.h.b16 %v117
    %v1916 = vunpack.c.l.b16 %v118
    %v1917 = vunpack.c.h.b16 %v118
    %v1918 = vunpack.c.l.b16 %v119
    %v1919 = vunpack.c.h.b16 %v119
    %v1920 = vunpack.c.l.b16 %v120
    %v1921 = vunpack.c.h.b16 %v120
    %v1922 = vunpack.c.l.b16 %v121
    %v1923 = vunpack.c.h.b16 %v121
    %v1924 = vunpack.c.l.b16 %v122
    %v1925 = vunpack.c.h.b16 %v122
    %v1926 = vunpack.c.l.b16 %v123
    %v1927 = vunpack.c.h.b16 %v123
    %v1928 = vunpack.c.l.b16 %v124
    %v1929 = vunpack.c.h.b16 %v124
    %v1930 = vunpack.c.l.b16 %v125
    %v1931 = vunpack.c.h.b16 %v125
    %v1932 = vunpack.c.l.b16 %v126
    %v1933 = vunpack.c.h.b16 %v126
    %v1934 = vunpack.c.l.b16 %v127
    %v1935 = vunpack.c.h.b16 %v127
    %v1936 = vunpack.c.l.b16 %v128
    %v1937 = vunpack.c.h.b16 %v128
    %v1938 = vunpack.c.l.b16 %v129
    %v1939 = vunpack.c.h.b16 %v129
    %v1940 = vunpack.c.l.b16 %v130
    %v1941 = vunpack.c.h.b16 %v130
    %v1942 = vunpack.c.l.b16 %v131
    %v1943 = vunpack.c.h.b16 %v131
    %v1944 = vunpack.c.l.b16 %v132
    %v1945 = vunpack.c.h.b16 %v132
    %v1946 = vunpack.c.l.b16 %v133
    %v1947 = vunpack.c.h.b16 %v133
    %v1948 = vunpack.c.l.b16 %v134
    %v1949 = vunpack.c.h.b16 %v134
    %v1950 = vunpack.c.l.b16 %v135
    %v1951 = vunpack.c.h.b16 %v135
    %v1952 = vunpack.c.l.b16 %v136
    %v1953 = vunpack.c.h.b16 %v136
    %v1954 = vunpack.c.l.b16 %v137
    %v1955 = vunpack.c.h.b16 %v137
    %v1956 = vunpack.c.l.b16 %v138
    %v1957 = vunpack.c.h.b16 %v138
    %v1958 = vunpack.c.l.b16 %v139
    %v1959 = vunpack.c.h.b16 %v139
    %v1960 = vunpack.c.l.b16 %v140
    %v1961 = vunpack.c.h.b16 %v140
    %v1962 = vunpack.c.l.b16 %v141
    %v1963 = vunpack.c.h.b16 %v141
    %v1964 = vunpack.c.l.b16 %v142
    %v1965 = vunpack.c.h.b16 %v142
    %v1966 = vunpack.c.l.b16 %v143
    %v1967 = vunpack.c.h.b16 %v143
    %v1968 = vunpack.c.l.b16 %v144
    %v1969 = vunpack.c.h.b16 %v144
    %v1970 = vunpack.c.l.b16 %v145
    %v1971 = vunpack.c.h.b16 %v145
    %v1972 = vunpack.c.l.b16 %v146
    %v1973 = vunpack.c.h.b16 %v146
    %v1974 = vunpack.c.l.b16 %v147
    %v1975 = vunpack.c.h.b16 %v147
    %v1976 = vunpack.c.l.b16 %v148
    %v1977 = vunpack.c.h.b16 %v148
    %v1978 = vunpack.c.l.b16 %v149
    %v1979 = vunpack.c.h.b16 %v149
    %v1980 = vunpack.c.l.b16 %v150
    %v1981 = vunpack.c.h.b16 %v150
    %v1982 = vunpack.c.l.b16 %v151
    %v1983 = vunpack.c.h.b16 %v151
    %v1984 = vunpack.c.l.b16 %v152
    %v1985 = vunpack.c.h.b16 %v152
    %v1986 = vunpack.c.l.b16 %v153
    %v1987 = vunpack.c.h.b16 %v153
    %v1988 = vunpack.c.l.b16 %v154
    %v1989 = vunpack.c.h.b16 %v154
    %v1990 = vunpack.c.l.b16 %v155
    %v1991 = vunpack.c.h.b16 %v155
    %v1992 = vunpack.c.l.b16 %v156
    %v1993 = vunpack.c.h.b16 %v156
    %v1994 = vunpack.c.l.b16 %v157
    %v1995 = vunpack.c.h.b16 %v157
    %v1996 = vunpack.c.l.b16 %v158
    %v1997 = vunpack.c.h.b16 %v158
    %v1998 = vunpack.c.l.b16 %v159
    %v1999 = vunpack.c.h.b16 %v159
    %v2000 = vunpack.c.l.b16 %v160
    %v2001 = vunpack.c.h.b16 %v160
    %v2002 = vunpack.c.l.b16 %v161
    %v2003 = vunpack.c.h.b16 %v161
    %v2004 = vunpack.c.l.b16 %v162
    %v2005 = vunpack.c.h.b16 %v162
    %v2006 = vunpack.c.l.b16 %v163
    %v2007 = vunpack.c.h.b16 %v163
    %v2008 = vunpack.c.l.b16 %v164
    %v2009 = vunpack.c.h.b16 %v164
    %v2010 = vunpack.c.l.b16 %v165
    %v2011 = vunpack.c.h.b16 %v165
    %v2012 = vunpack.c.l.b16 %v166
    %v2013 = vunpack.c.h.b16 %v166
    %v2014 = vunpack.c.l.b16 %v167
    %v2015 = vunpack.c.h.b16 %v167
    %v2016 = vunpack.c.l.b16 %v168
    %v2017 = vunpack.c.h.b16 %v168
    %v2018 = vunpack.c.l.b16 %v169
    %v2019 = vunpack.c.h.b16 %v169
    %v2020 = vunpack.c.l.b16 %v170
    %v2021 = vunpack.c.h.b16 %v170
    %v2022 = vunpack.c.l.b16 %v171
    %v2023 = vunpack.c.h.b16 %v171
    %v2024 = vunpack.c.l.b16 %v172
    %v2025 = vunpack.c.h.b16 %v172
    %v2026 = vunpack.c.l.b16 %v173
    %v2027 = vunpack.c.h.b16 %v173
    %v2028 = vunpack.c.l.b16 %v174
    %v2029 = vunpack.c.h.b16 %v174
    %v2030 = vunpack.c.l.b16 %v175
    %v2031 = vunpack.c.h.b16 %v175
    %v2032 = vunpack.c.l.b16 %v176
    %v2033 = vunpack.c.h.b16 %v176
    %v2034 = vunpack.c.l.b16 %v177
    %v2035 = vunpack.c.h.b16 %v177
    %v2036 = vunpack.c.l.b16 %v178
    %v2037 = vunpack.c.h.b16 %v178
    %v2038 = vunpack.c.l.b16 %v179
    %v2039 = vunpack.c.h.b16 %v179
    %v2040 = vunpack.c.l.b16 %v180
    %v2041 = vunpack.c.h.b16 %v180
    %v2042 = vunpack.c.l.b16 %v181
    %v2043 = vunpack.c.h.b16 %v181
    %v2044 = vunpack.c.l.b16 %v182
    %v2045 = vunpack.c.h.b16 %v182
    %v2046 = vunpack.c.l.b16 %v183
    %v2047 = vunpack.c.h.b16 %v183
    %v2048 = vunpack.c.l.b16 %v184
    %v2049 = vunpack.c.h.b16 %v184
    %v2050 = vunpack.c.l.b16 %v185
    %v2051 = vunpack.c.h.b16 %v185
    %v2052 = vunpack.c.l.b16 %v186
    %v2053 = vunpack.c.h.b16 %v186
    %v2054 = vunpack.c.l.b16 %v187
    %v2055 = vunpack.c.h.b16 %v187
    %v2056 = vunpack.c.l.b16 %v188
    %v2057 = vunpack.c.h.b16 %v188
    %v2058 = vunpack.c.l.b16 %v189
    %v2059 = vunpack.c.h.b16 %v189
    %v2060 = vunpack.c.l.b16 %v190
    %v2061 = vunpack.c.h.b16 %v190
    %v2062 = vunpack.c.l.b16 %v191
    %v2063 = vunpack.c.h.b16 %v191
    %v2064 = vunpack.c.l.b16 %v192
    %v2065 = vunpack.c.h.b16 %v192
    %v2066 = vunpack.c.l.b16 %v193
    %v2067 = vunpack.c.h.b16 %v193
    %v2068 = vunpack.c.l.b16 %v194
    %v2069 = vunpack.c.h.b16 %v194
    %v2070 = vunpack.c.l.b16 %v195
    %v2071 = vunpack.c.h.b16 %v195
    %v2072 = vunpack.c.l.b16 %v196
    %v2073 = vunpack.c.h.b16 %v196
    %v2074 = vunpack.c.l.b16 %v197
    %v2075 = vunpack.c.h.b16 %v197
    %v2076 = vunpack.c.l.b16 %v198
    %v2077 = vunpack.c.h.b16 %v198
    %v2078 = vunpack.c.l.b16 %v199
    %v2079 = vunpack.c.h.b16 %v199
    %v2080 = vunpack.c.l.b16 %v200
    %v2081 = vunpack.c.h.b16 %v200
    %v2082 = vunpack.c.l.b16 %v201
    %v2083 = vunpack.c.h.b16 %v201
    %v2084 = vunpack.c.l.b16 %v202
    %v2085 = vunpack.c.h.b16 %v202
    %v2086 = vunpack.c.l.b16 %v203
    %v2087 = vunpack.c.h.b16 %v203
    %v2088 = vunpack.c.l.b16 %v204
    %v2089 = vunpack.c.h.b16 %v204
    %v2090 = vunpack.c.l.b16 %v205
    %v2091 = vunpack.c.h.b16 %v205
    %v2092 = vunpack.c.l.b16 %v206
    %v2093 = vunpack.c.h.b16 %v206
    %v2094 = vunpack.c.l.b16 %v207
    %v2095 = vunpack.c.h.b16 %v207
    %v2096 = vunpack.c.l.b16 %v208
    %v2097 = vunpack.c.h.b16 %v208
    %v2098 = vunpack.c.l.b16 %v209
    %v2099 = vunpack.c.h.b16 %v209
    %v2100 = vunpack.c.l.b16 %v210
    %v2101 = vunpack.c.h.b16 %v210
    %v2102 = vunpack.c.l.b16 %v211
    %v2103 = vunpack.c.h.b16 %v211
    %v2104 = vunpack.c.l.b16 %v212
    %v2105 = vunpack.c.h.b16 %v212
    %v2106 = vunpack.c.l.b16 %v213
    %v2107 = vunpack.c.h.b16 %v213
    %v2108 = vunpack.c.l.b16 %v214
    %v2109 = vunpack.c.h.b16 %v214
    %v2110 = vunpack.c.l.b16 %v215
    %v2111 = vunpack.c.h.b16 %v215
    %v2112 = vunpack.c.l.b16 %v216
    %v2113 = vunpack.c.h.b16 %v216
    %v2114 = vunpack.c.l.b16 %v217
    %v2115 = vunpack.c.h.b16 %v217
    %v2116 = vunpack.c.l.b16 %v218
    %v2117 = vunpack.c.h.b16 %v218
    %v2118 = vunpack.c.l.b16 %v219
    %v2119 = vunpack.c.h.b16 %v219
    %v2120 = vunpack.c.l.b16 %v220
    %v2121 = vunpack.c.h.b16 %v220
    %v2122 = vunpack.c.l.b16 %v221
    %v2123 = vunpack.c.h.b16 %v221
    %v2124 = vunpack.c.l.b16 %v222
    %v2125 = vunpack.c.h.b16 %v222
    %v2126 = vunpack.c.l.b16 %v223
    %v2127 = vunpack.c.h.b16 %v223
    %v2128 = vunpack.c.l.b16 %v224
    %v2129 = vunpack.c.h.b16 %v224
    %v2130 = vunpack.c.l.b16 %v225
    %v2131 = vunpack.c.h.b16 %v225
    %v2132 = vunpack.c.l.b16 %v226
    %v2133 = vunpack.c.h.b16 %v226
    %v2134 = vunpack.c.l.b16 %v227
    %v2135 = vunpack.c.h.b16 %v227
    %v2136 = vunpack.c.l.b16 %v228
    %v2137 = vunpack.c.h.b16 %v228
    %v2138 = vunpack.c.l.b16 %v229
    %v2139 = vunpack.c.h.b16 %v229
    %v2140 = vunpack.c.l.b16 %v230
    %v2141 = vunpack.c.h.b16 %v230
    %v2142 = vunpack.c.l.b16 %v231
    %v2143 = vunpack.c.h.b16 %v231
    %v2144 = vunpack.c.l.b16 %v232
    %v2145 = vunpack.c.h.b16 %v232
    %v2146 = vunpack.c.l.b16 %v233
    %v2147 = vunpack.c.h.b16 %v233
    %v2148 = vunpack.c.l.b16 %v234
    %v2149 = vunpack.c.h.b16 %v234
    %v2150 = vunpack.c.l.b16 %v235
    %v2151 = vunpack.c.h.b16 %v235
    %v2152 = vunpack.c.l.b16 %v236
    %v2153 = vunpack.c.h.b16 %v236
    %v2154 = vunpack.c.l.b16 %v237
    %v2155 = vunpack.c.h.b16 %v237
    %v2156 = vunpack.c.l.b16 %v238
    %v2157 = vunpack.c.h.b16 %v238
    %v2158 = vunpack.c.l.b16 %v239
    %v2159 = vunpack.c.h.b16 %v239
    %v2160 = vunpack.c.l.b16 %v240
    %v2161 = vunpack.c.h.b16 %v240
    %v2162 = vunpack.c.l.b16 %v241
    %v2163 = vunpack.c.h.b16 %v241
    %v2164 = vunpack.c.l.b16 %v242
    %v2165 = vunpack.c.h.b16 %v242
    %v2166 = vunpack.c.l.b16 %v243
    %v2167 = vunpack.c.h.b16 %v243
    %v2168 = vunpack.c.l.b16 %v244
    %v2169 = vunpack.c.h.b16 %v244
    %v2170 = vunpack.c.l.b16 %v245
    %v2171 = vunpack.c.h.b16 %v245
    %v2172 = vunpack.c.l.b16 %v246
    %v2173 = vunpack.c.h.b16 %v246
    %v2174 = vunpack.c.l.b16 %v247
    %v2175 = vunpack.c.h.b16 %v247
    %v2176 = vunpack.c.l.b16 %v248
    %v2177 = vunpack.c.h.b16 %v248
    %v2178 = vunpack.c.l.b16 %v249
    %v2179 = vunpack.c.h.b16 %v249
    %v2180 = vunpack.c.l.b16 %v250
    %v2181 = vunpack.c.h.b16 %v250
    %v2182 = vunpack.c.l.b16 %v251
    %v2183 = vunpack.c.h.b16 %v251
    %v2184 = vunpack.c.l.b16 %v252
    %v2185 = vunpack.c.h.b16 %v252
    %v2186 = vunpack.c.l.b16 %v253
    %v2187 = vunpack.c.h.b16 %v253
    %v2188 = vunpack.c.l.b16 %v254
    %v2189 = vunpack.c.h.b16 %v254
    %v2190 = vunpack.c.l.b16 %v255
    %v2191 = vunpack.c.h.b16 %v255
    %v2192 = vunpack.c.l.b16 %v256
    %v2193 = vunpack.c.h.b16 %v256
    %v2194 = vunpack.c.l.b16 %v257
    %v2195 = vunpack.c.h.b16 %v257
    %v2196 = vunpack.c.l.b16 %v258
    %v2197 = vunpack.c.h.b16 %v258
    %v2198 = vunpack.c.l.b16 %v259
    %v2199 = vunpack.c.h.b16 %v259
    %v2200 = vunpack.c.l.b16 %v260
    %v2201 = vunpack.c.h.b16 %v260
    %v2202 = vunpack.c.l.b16 %v261
    %v2203 = vunpack.c.h.b16 %v261
    %v2204 = vunpack.c.l.b16 %v262
    %v2205 = vunpack.c.h.b16 %v262
    %v2206 = vunpack.c.l.b16 %v263
    %v2207 = vunpack.c.h.b16 %v263
    %v2208 = vunpack.c.l.b16 %v264
    %v2209 = vunpack.c.h.b16 %v264
    %v2210 = vunpack.c.l.b16 %v265
    %v2211 = vunpack.c.h.b16 %v265
    %v2212 = vunpack.c.l.b16 %v266
    %v2213 = vunpack.c.h.b16 %v266
    %v2214 = vunpack.c.l.b16 %v267
    %v2215 = vunpack.c.h.b16 %v267
    %v2216 = vunpack.c.l.b16 %v268
    %v2217 = vunpack.c.h.b16 %v268
    %v2218 = vunpack.c.l.b16 %v269
    %v2219 = vunpack.c.h.b16 %v269
    %v2220 = vunpack.c.l.b16 %v270
    %v2221 = vunpack.c.h.b16 %v270
    %v2222 = vunpack.c.l.b16 %v271
    %v2223 = vunpack.c.h.b16 %v271
    %v2224 = vunpack.c.l.b16 %v272
    %v2225 = vunpack.c.h.b16 %v272
    %v2226 = vunpack.c.l.b16 %v273
    %v2227 = vunpack.c.h.b16 %v273
    %v2228 = vunpack.c.l.b16 %v274
    %v2229 = vunpack.c.h.b16 %v274
    %v2230 = vunpack.c.l.b16 %v275
    %v2231 = vunpack.c.h.b16 %v275
    %v2232 = vunpack.c.l.b16 %v276
    %v2233 = vunpack.c.h.b16 %v276
    %v2234 = vunpack.c.l.b16 %v277
    %v2235 = vunpack.c.h.b16 %v277
    %v2236 = vunpack.c.l.b16 %v278
    %v2237 = vunpack.c.h.b16 %v278
    %v2238 = vunpack.c.l.b16 %v279
    %v2239 = vunpack.c.h.b16 %v279
    %v2240 = vunpack.c.l.b16 %v280
    %v2241 = vunpack.c.h.b16 %v280
    %v2242 = vunpack.c.l.b16 %v281
    %v2243 = vunpack.c.h.b16 %v281
    %v2244 = vunpack.c.l.b16 %v282
    %v2245 = vunpack.c.h.b16 %v282
    %v2246 = vunpack.c.l.b16 %v283
    %v2247 = vunpack.c.h.b16 %v283
    %v2248 = vunpack.c.l.b16 %v284
    %v2249 = vunpack.c.h.b16 %v284
    %v2250 = vunpack.c.l.b16 %v285
    %v2251 = vunpack.c.h.b16 %v285
    %v2252 = vunpack.c.l.b16 %v286
    %v2253 = vunpack.c.h.b16 %v286
    %v2254 = vunpack.c.l.b16 %v287
    %v2255 = vunpack.c.h.b16 %v287
    %v2256 = vunpack.c.l.b16 %v288
    %v2257 = vunpack.c.h.b16 %v288
    %v2258 = vunpack.c.l.b16 %v289
    %v2259 = vunpack.c.h.b16 %v289
    %v2260 = vunpack.c.l.b16 %v290
    %v2261 = vunpack.c.h.b16 %v290
    %v2262 = vunpack.c.l.b16 %v291
    %v2263 = vunpack.c.h.b16 %v291
    %v2264 = vunpack.c.l.b16 %v292
    %v2265 = vunpack.c.h.b16 %v292
    %v2266 = vunpack.c.l.b16 %v293
    %v2267 = vunpack.c.h.b16 %v293
    %v2268 = vunpack.c.l.b16 %v294
    %v2269 = vunpack.c.h.b16 %v294
    %v2270 = vunpack.c.l.b16 %v295
    %v2271 = vunpack.c.h.b16 %v295
    %v2272 = vunpack.c.l.b16 %v296
    %v2273 = vunpack.c.h.b16 %v296
    %v2274 = vunpack.c.l.b16 %v297
    %v2275 = vunpack.c.h.b16 %v297
    %v2276 = vunpack.c.l.b16 %v298
    %v2277 = vunpack.c.h.b16 %v298
    %v2278 = vunpack.c.l.b16 %v299
    %v2279 = vunpack.c.h.b16 %v299
    %v2280 = vunpack.c.l.b16 %v300
    %v2281 = vunpack.c.h.b16 %v300
    %v2282 = vunpack.c.l.b16 %v301
    %v2283 = vunpack.c.h.b16 %v301
    %v2284 = vunpack.c.l.b16 %v302
    %v2285 = vunpack.c.h.b16 %v302
    %v2286 = vunpack.c.l.b16 %v303
    %v2287 = vunpack.c.h.b16 %v303
    %v2288 = vunpack.c.l.b16 %v304
    %v2289 = vunpack.c.h.b16 %v304
    %v2290 = vunpack.c.l.b16 %v305
    %v2291 = vunpack.c.h.b16 %v305
    %v2292 = vunpack.c.l.b16 %v306
    %v2293 = vunpack.c.h.b16 %v306
    %v2294 = vunpack.c.l.b16 %v307
    %v2295 = vunpack.c.h.b16 %v307
    %v2296 = vunpack.c.l.b16 %v308
    %v2297 = vunpack.c.h.b16 %v308
    %v2298 = vunpack.c.l.b16 %v309
    %v2299 = vunpack.c.h.b16 %v309
    %v2300 = vunpack.c.l.b16 %v310
    %v2301 = vunpack.c.h.b16 %v310
    %v2302 = vunpack.c.l.b16 %v311
    %v2303 = vunpack.c.h.b16 %v311
    %v2304 = vunpack.c.l.b16 %v312
    %v2305 = vunpack.c.h.b16 %v312
    %v2306 = vunpack.c.l.b16 %v313
    %v2307 = vunpack.c.h.b16 %v313
    %v2308 = vunpack.c.l.b16 %v314
    %v2309 = vunpack.c.h.b16 %v314
    %v2310 = vunpack.c.l.b16 %v315
    %v2311 = vunpack.c.h.b16 %v315
    %v2312 = vunpack.c.l.b16 %v316
    %v2313 = vunpack.c.h.b16 %v316
    %v2314 = vunpack.c.l.b16 %v317
    %v2315 = vunpack.c.h.b16 %v317
    %v2316 = vunpack.c.l.b16 %v318
    %v2317 = vunpack.c.h.b16 %v318
    %v2318 = vunpack.c.l.b16 %v319
    %v2319 = vunpack.c.h.b16 %v319
    %v2320 = vunpack.c.l.b16 %v320
    %v2321 = vunpack.c.h.b16 %v320
    %v2322 = vunpack.c.l.b16 %v321
    %v2323 = vunpack.c.h.b16 %v321
    %v2324 = vunpack.c.l.b16 %v322
    %v2325 = vunpack.c.h.b16 %v322
    %v2326 = vunpack.c.l.b16 %v323
    %v2327 = vunpack.c.h.b16 %v323
    %v2328 = vunpack.c.l.b16 %v324
    %v2329 = vunpack.c.h.b16 %v324
    %v2330 = vunpack.c.l.b16 %v325
    %v2331 = vunpack.c.h.b16 %v325
    %v2332 = vunpack.c.l.b16 %v326
    %v2333 = vunpack.c.h.b16 %v326
    %v2334 = vunpack.c.l.b16 %v327
    %v2335 = vunpack.c.h.b16 %v327
    %v2336 = vunpack.c.l.b16 %v328
    %v2337 = vunpack.c.h.b16 %v328
    %v2338 = vunpack.c.l.b16 %v329
    %v2339 = vunpack.c.h.b16 %v329
    %v2340 = vunpack.c.l.b16 %v330
    %v2341 = vunpack.c.h.b16 %v330
    %v2342 = vunpack.c.l.b16 %v331
    %v2343 = vunpack.c.h.b16 %v331
    %v2344 = vunpack.c.l.b16 %v332
    %v2345 = vunpack.c.h.b16 %v332
    %v2346 = vunpack.c.l.b16 %v333
    %v2347 = vunpack.c.h.b16 %v333
    %v2348 = vunpack.c.l.b16 %v334
    %v2349 = vunpack.c.h.b16 %v334
    %v2350 = vunpack.c.l.b16 %v335
    %v2351 = vunpack.c.h.b16 %v335
    %v2352 = vunpack.c.l.b16 %v336
    %v2353 = vunpack.c.h.b16 %v336
    %v2354 = vunpack.c.l.b16 %v337
    %v2355 = vunpack.c.h.b16 %v337
    %v2356 = vunpack.c.l.b16 %v338
    %v2357 = vunpack.c.h.b16 %v338
    %v2358 = vunpack.c.l.b16 %v339
    %v2359 = vunpack.c.h.b16 %v339
    %v2360 = vunpack.c.l.b16 %v340
    %v2361 = vunpack.c.h.b16 %v340
    %v2362 = vunpack.c.l.b16 %v341
    %v2363 = vunpack.c.h.b16 %v341
    %v2364 = vunpack.c.l.b16 %v342
    %v2365 = vunpack.c.h.b16 %v342
    %v2366 = vunpack.c.l.b16 %v343
    %v2367 = vunpack.c.h.b16 %v343
    %v2368 = vunpack.c.l.b16 %v344
    %v2369 = vunpack.c.h.b16 %v344
    %v2370 = vunpack.c.l.b16 %v345
    %v2371 = vunpack.c.h.b16 %v345
    %v2372 = vunpack.c.l.b16 %v346
    %v2373 = vunpack.c.h.b16 %v346
    %v2374 = vunpack.c.l.b16 %v347
    %v2375 = vunpack.c.h.b16 %v347
    %v2376 = vunpack.c.l.b16 %v348
    %v2377 = vunpack.c.h.b16 %v348
    %v2378 = vunpack.c.l.b16 %v349
    %v2379 = vunpack.c.h.b16 %v349
    %v2380 = vunpack.c.l.b16 %v350
    %v2381 = vunpack.c.h.b16 %v350
    %v2382 = vunpack.c.l.b16 %v351
    %v2383 = vunpack.c.h.b16 %v351
    %v2384 = vunpack.c.l.b16 %v352
    %v2385 = vunpack.c.h.b16 %v352
    %v2386 = vunpack.c.l.b16 %v353
    %v2387 = vunpack.c.h.b16 %v353
    %v2388 = vunpack.c.l.b16 %v354
    %v2389 = vunpack.c.h.b16 %v354
    %v2390 = vunpack.c.l.b16 %v355
    %v2391 = vunpack.c.h.b16 %v355
    %v2392 = vunpack.c.l.b16 %v356
    %v2393 = vunpack.c.h.b16 %v356
    %v2394 = vunpack.c.l.b16 %v357
    %v2395 = vunpack.c.h.b16 %v357
    %v2396 = vunpack.c.l.b16 %v358
    %v2397 = vunpack.c.h.b16 %v358
    %v2398 = vunpack.c.l.b16 %v359
    %v2399 = vunpack.c.h.b16 %v359
    %v2400 = vunpack.c.l.b16 %v360
    %v2401 = vunpack.c.h.b16 %v360
    %v2402 = vunpack.c.l.b16 %v361
    %v2403 = vunpack.c.h.b16 %v361
    %v2404 = vunpack.c.l.b16 %v362
    %v2405 = vunpack.c.h.b16 %v362
    %v2406 = vunpack.c.l.b16 %v363
    %v2407 = vunpack.c.h.b16 %v363
    %v2408 = vunpack.c.l.b16 %v364
    %v2409 = vunpack.c.h.b16 %v364
    %v2410 = vunpack.c.l.b16 %v365
    %v2411 = vunpack.c.h.b16 %v365
    %v2412 = vunpack.c.l.b16 %v366
    %v2413 = vunpack.c.h.b16 %v366
    %v2414 = vunpack.c.l.b16 %v367
    %v2415 = vunpack.c.h.b16 %v367
    %v2416 = vunpack.c.l.b16 %v368
    %v2417 = vunpack.c.h.b16 %v368
    %v2418 = vunpack.c.l.b16 %v369
    %v2419 = vunpack.c.h.b16 %v369
    %v2420 = vunpack.c.l.b16 %v370
    %v2421 = vunpack.c.h.b16 %v370
    %v2422 = vunpack.c.l.b16 %v371
    %v2423 = vunpack.c.h.b16 %v371
    %v2424 = vunpack.c.l.b16 %v372
    %v2425 = vunpack.c.h.b16 %v372
    %v2426 = vunpack.c.l.b16 %v373
    %v2427 = vunpack.c.h.b16 %v373
    %v2428 = vunpack.c.l.b16 %v374
    %v2429 = vunpack.c.h.b16 %v374
    %v2430 = vunpack.c.l.b16 %v375
    %v2431 = vunpack.c.h.b16 %v375
    %v2432 = vunpack.c.l.b16 %v376
    %v2433 = vunpack.c.h.b16 %v376
    %v2434 = vunpack.c.l.b16 %v377
    %v2435 = vunpack.c.h.b16 %v377
    %v2436 = vunpack.c.l.b16 %v378
    %v2437 = vunpack.c.h.b16 %v378
    %v2438 = vunpack.c.l.b16 %v379
    %v2439 = vunpack.c.h.b16 %v379
    %v2440 = vunpack.c.l.b16 %v380
    %v2441 = vunpack.c.h.b16 %v380
    %v2442 = vunpack.c.l.b16 %v381
    %v2443 = vunpack.c.h.b16 %v381
    %v2444 = vunpack.c.l.b16 %v382
    %v2445 = vunpack.c.h.b16 %v382
    %v2446 = vunpack.c.l.b16 %v383
    %v2447 = vunpack.c.h.b16 %v383
    %v2448 = vunpack.c.l.b16 %v384
    %v2449 = vunpack.c.h.b16 %v384
    %v2450 = vunpack.c.l.b16 %v385
    %v2451 = vunpack.c.h.b16 %v385
    %v2452 = vunpack.c.l.b16 %v386
    %v2453 = vunpack.c.h.b16 %v386
    %v2454 = vunpack.c.l.b16 %v387
    %v2455 = vunpack.c.h.b16 %v387
    %v2456 = vunpack.c.l.b16 %v388
    %v2457 = vunpack.c.h.b16 %v388
    %v2458 = vunpack.c.l.b16 %v389
    %v2459 = vunpack.c.h.b16 %v389
    %v2460 = vunpack.c.l.b16 %v390
    %v2461 = vunpack.c.h.b16 %v390
    %v2462 = vunpack.c.l.b16 %v391
    %v2463 = vunpack.c.h.b16 %v391
    %v2464 = vunpack.c.l.b16 %v392
    %v2465 = vunpack.c.h.b16 %v392
    %v2466 = vunpack.c.l.b16 %v393
    %v2467 = vunpack.c.h.b16 %v393
    %v2468 = vunpack.c.l.b16 %v394
    %v2469 = vunpack.c.h.b16 %v394
    %v2470 = vunpack.c.l.b16 %v395
    %v2471 = vunpack.c.h.b16 %v395
    %v2472 = vunpack.c.l.b16 %v396
    %v2473 = vunpack.c.h.b16 %v396
    %v2474 = vunpack.c.l.b16 %v397
    %v2475 = vunpack.c.h.b16 %v397
    %v2476 = vunpack.c.l.b16 %v398
    %v2477 = vunpack.c.h.b16 %v398
    %v2478 = vunpack.c.l.b16 %v399
    %v2479 = vunpack.c.h.b16 %v399
    %v2480 = vunpack.c.l.b16 %v400
    %v2481 = vunpack.c.h.b16 %v400
    %v2482 = vunpack.c.l.b16 %v401
    %v2483 = vunpack.c.h.b16 %v401
    %v2484 = vunpack.c.l.b16 %v402
    %v2485 = vunpack.c.h.b16 %v402
    %v2486 = vunpack.c.l.b16 %v403
    %v2487 = vunpack.c.h.b16 %v403
    %v2488 = vunpack.c.l.b16 %v404
    %v2489 = vunpack.c.h.b16 %v404
    %v2490 = vunpack.c.l.b16 %v405
    %v2491 = vunpack.c.h.b16 %v405
    %v2492 = vunpack.c.l.b16 %v406
    %v2493 = vunpack.c.h.b16 %v406
    %v2494 = vunpack.c.l.b16 %v407
    %v2495 = vunpack.c.h.b16 %v407
    %v2496 = vunpack.c.l.b16 %v408
    %v2497 = vunpack.c.h.b16 %v408
    %v2498 = vunpack.c.l.b16 %v409
    %v2499 = vunpack.c.h.b16 %v409
    %v2500 = vunpack.c.l.b16 %v410
    %v2501 = vunpack.c.h.b16 %v410
    %v2502 = vunpack.c.l.b16 %v411
    %v2503 = vunpack.c.h.b16 %v411
    %v2504 = vunpack.c.l.b16 %v412
    %v2505 = vunpack.c.h.b16 %v412
    %v2506 = vunpack.c.l.b16 %v413
    %v2507 = vunpack.c.h.b16 %v413
    %v2508 = vunpack.c.l.b16 %v414
    %v2509 = vunpack.c.h.b16 %v414
    %v2510 = vunpack.c.l.b16 %v415
    %v2511 = vunpack.c.h.b16 %v415
    %v2512 = vunpack.c.l.b16 %v416
    %v2513 = vunpack.c.h.b16 %v416
    %v2514 = vunpack.c.l.b16 %v417
    %v2515 = vunpack.c.h.b16 %v417
    %v2516 = vunpack.c.l.b16 %v418
    %v2517 = vunpack.c.h.b16 %v418
    %v2518 = vunpack.c.l.b16 %v419
    %v2519 = vunpack.c.h.b16 %v419
    %v2520 = vunpack.c.l.b16 %v420
    %v2521 = vunpack.c.h.b16 %v420
    %v2522 = vunpack.c.l.b16 %v421
    %v2523 = vunpack.c.h.b16 %v421
    %v2524 = vunpack.c.l.b16 %v422
    %v2525 = vunpack.c.h.b16 %v422
    %v2526 = vunpack.c.l.b16 %v423
    %v2527 = vunpack.c.h.b16 %v423
    %v2528 = vunpack.c.l.b16 %v424
    %v2529 = vunpack.c.h.b16 %v424
    %v2530 = vunpack.c.l.b16 %v425
    %v2531 = vunpack.c.h.b16 %v425
    %v2532 = vunpack.c.l.b16 %v426
    %v2533 = vunpack.c.h.b16 %v426
    %v2534 = vunpack.c.l.b16 %v427
    %v2535 = vunpack.c.h.b16 %v427
    %v2536 = vunpack.c.l.b16 %v428
    %v2537 = vunpack.c.h.b16 %v428
    %v2538 = vunpack.c.l.b16 %v429
    %v2539 = vunpack.c.h.b16 %v429
    %v2540 = vunpack.c.l.b16 %v430
    %v2541 = vunpack.c.h.b16 %v430
    %v2542 = vunpack.c.l.b16 %v431
    %v2543 = vunpack.c.h.b16 %v431
    %v2544 = vunpack.c.l.b16 %v432
    %v2545 = vunpack.c.h.b16 %v432
    %v2546 = vunpack.c.l.b16 %v433
    %v2547 = vunpack.c.h.b16 %v433
    %v2548 = vunpack.c.l.b16 %v434
    %v2549 = vunpack.c.h.b16 %v434
    %v2550 = vunpack.c.l.b16 %v435
    %v2551 = vunpack.c.h.b16 %v435
    %v2552 = vunpack.c.l.b16 %v436
    %v2553 = vunpack.c.h.b16 %v436
    %v2554 = vunpack.c.l.b16 %v437
    %v2555 = vunpack.c.h.b16 %v437
    %v2556 = vunpack.c.l.b16 %v438
    %v2557 = vunpack.c.h.b16 %v438
    %v2558 = vunpack.c.l.b16 %v439
    %v2559 = vunpack.c.h.b16 %v439
    %v2560 = vunpack.c.l.b16 %v440
    %v2561 = vunpack.c.h.b16 %v440
    %v2562 = vunpack.c.l.b16 %v441
    %v2563 = vunpack.c.h.b16 %v441
    %v2564 = vunpack.c.l.b16 %v442
    %v2565 = vunpack.c.h.b16 %v442
    %v2566 = vunpack.c.l.b16 %v443
    %v2567 = vunpack.c.h.b16 %v443
    %v2568 = vunpack.c.l.b16 %v444
    %v2569 = vunpack.c.h.b16 %v444
    %v2570 = vunpack.c.l.b16 %v445
    %v2571 = vunpack.c.h.b16 %v445
    %v2572 = vunpack.c.l.b16 %v446
    %v2573 = vunpack.c.h.b16 %v446
    %v2574 = vunpack.c.l.b16 %v447
    %v2575 = vunpack.c.h.b16 %v447
    %v2576 = vunpack.c.l.b16 %v448
    %v2577 = vunpack.c.h.b16 %v448
    %v2578 = vunpack.c.l.b16 %v449
    %v2579 = vunpack.c.h.b16 %v449
    %v2580 = vunpack.c.l.b16 %v450
    %v2581 = vunpack.c.h.b16 %v450
    %v2582 = vunpack.c.l.b16 %v451
    %v2583 = vunpack.c.h.b16 %v451
    %v2584 = vunpack.c.l.b16 %v452
    %v2585 = vunpack.c.h.b16 %v452
    %v2586 = vunpack.c.l.b16 %v453
    %v2587 = vunpack.c.h.b16 %v453
    %v2588 = vunpack.c.l.b16 %v454
    %v2589 = vunpack.c.h.b16 %v454
    %v2590 = vunpack.c.l.b16 %v455
    %v2591 = vunpack.c.h.b16 %v455
    %v2592 = vunpack.c.l.b16 %v456
    %v2593 = vunpack.c.h.b16 %v456
    %v2594 = vunpack.c.l.b16 %v457
    %v2595 = vunpack.c.h.b16 %v457
    %v2596 = vunpack.c.l.b16 %v458
    %v2597 = vunpack.c.h.b16 %v458
    %v2598 = vunpack.c.l.b16 %v459
    %v2599 = vunpack.c.h.b16 %v459
    %v2600 = vunpack.c.l.b16 %v460
    %v2601 = vunpack.c.h.b16 %v460
    %v2602 = vunpack.c.l.b16 %v461
    %v2603 = vunpack.c.h.b16 %v461
    %v2604 = vunpack.c.l.b16 %v462
    %v2605 = vunpack.c.h.b16 %v462
    %v2606 = vunpack.c.l.b16 %v463
    %v2607 = vunpack.c.h.b16 %v463
    %v2608 = vunpack.c.l.b16 %v464
    %v2609 = vunpack.c.h.b16 %v464
    %v2610 = vunpack.c.l.b16 %v465
    %v2611 = vunpack.c.h.b16 %v465
    %v2612 = vunpack.c.l.b16 %v466
    %v2613 = vunpack.c.h.b16 %v466
    %v2614 = vunpack.c.l.b16 %v467
    %v2615 = vunpack.c.h.b16 %v467
    %v2616 = vunpack.c.l.b16 %v468
    %v2617 = vunpack.c.h.b16 %v468
    %v2618 = vunpack.c.l.b16 %v469
    %v2619 = vunpack.c.h.b16 %v469
    %v2620 = vunpack.c.l.b16 %v470
    %v2621 = vunpack.c.h.b16 %v470
    %v2622 = vunpack.c.l.b16 %v471
    %v2623 = vunpack.c.h.b16 %v471
    %v2624 = vunpack.c.l.b16 %v472
    %v2625 = vunpack.c.h.b16 %v472
    %v2626 = vunpack.c.l.b16 %v473
    %v2627 = vunpack.c.h.b16 %v473
    %v2628 = vunpack.c.l.b16 %v474
    %v2629 = vunpack.c.h.b16 %v474
    %v2630 = vunpack.c.l.b16 %v475
    %v2631 = vunpack.c.h.b16 %v475
    %v2632 = vunpack.c.l.b16 %v476
    %v2633 = vunpack.c.h.b16 %v476
    %v2634 = vunpack.c.l.b16 %v477
    %v2635 = vunpack.c.h.b16 %v477
    %v2636 = vunpack.c.l.b16 %v478
    %v2637 = vunpack.c.h.b16 %v478
    %v2638 = vunpack.c.l.b16 %v479
    %v2639 = vunpack.c.h.b16 %v479
    %v2640 = vunpack.c.l.b16 %v480
    %v2641 = vunpack.c.h.b16 %v480
    %v2642 = vunpack.c.l.b16 %v481
    %v2643 = vunpack.c.h.b16 %v481
    %v2644 = vunpack.c.l.b16 %v482
    %v2645 = vunpack.c.h.b16 %v482
    %v2646 = vunpack.c.l.b16 %v483
    %v2647 = vunpack.c.h.b16 %v483
    %v2648 = vunpack.c.l.b16 %v484
    %v2649 = vunpack.c.h.b16 %v484
    %v2650 = vunpack.c.l.b16 %v485
    %v2651 = vunpack.c.h.b16 %v485
    %v2652 = vunpack.c.l.b16 %v486
    %v2653 = vunpack.c.h.b16 %v486
    %v2654 = vunpack.c.l.b16 %v487
    %v2655 = vunpack.c.h.b16 %v487
    %v2656 = vunpack.c.l.b16 %v488
    %v2657 = vunpack.c.h.b16 %v488
    %v2658 = vunpack.c.l.b16 %v489
    %v2659 = vunpack.c.h.b16 %v489
    %v2660 = vunpack.c.l.b16 %v490
    %v2661 = vunpack.c.h.b16 %v490
    %v2662 = vunpack.c.l.b16 %v491
    %v2663 = vunpack.c.h.b16 %v491
    %v2664 = vunpack.c.l.b16 %v492
    %v2665 = vunpack.c.h.b16 %v492
    %v2666 = vunpack.c.l.b16 %v493
    %v2667 = vunpack.c.h.b16 %v493
    %v2668 = vunpack.c.l.b16 %v494
    %v2669 = vunpack.c.h.b16 %v494
    %v2670 = vunpack.c.l.b16 %v495
    %v2671 = vunpack.c.h.b16 %v495
    %v2672 = vunpack.c.l.b16 %v496
    %v2673 = vunpack.c.h.b16 %v496
    %v2674 = vunpack.c.l.b16 %v497
    %v2675 = vunpack.c.h.b16 %v497
    %v2676 = vunpack.c.l.b16 %v498
    %v2677 = vunpack.c.h.b16 %v498
    %v2678 = vunpack.c.l.b16 %v499
    %v2679 = vunpack.c.h.b16 %v499
    %v2680 = vunpack.c.l.b16 %v500
    %v2681 = vunpack.c.h.b16 %v500
    %v2682 = vunpack.c.l.b16 %v501
    %v2683 = vunpack.c.h.b16 %v501
    %v2684 = vunpack.c.l.b16 %v502
    %v2685 = vunpack.c.h.b16 %v502
    %v2686 = vunpack.c.l.b16 %v503
    %v2687 = vunpack.c.h.b16 %v503
    %v2688 = vunpack.c.l.b16 %v504
    %v2689 = vunpack.c.h.b16 %v504
    %v2690 = vunpack.c.l.b16 %v505
    %v2691 = vunpack.c.h.b16 %v505
    %v2692 = vunpack.c.l.b16 %v506
    %v2693 = vunpack.c.h.b16 %v506
    %v2694 = vunpack.c.l.b16 %v507
    %v2695 = vunpack.c.h.b16 %v507
    %v2696 = vunpack.c.l.b16 %v508
    %v2697 = vunpack.c.h.b16 %v508
    %v2698 = vunpack.c.l.b16 %v509
    %v2699 = vunpack.c.h.b16 %v509
    %v2700 = vunpack.c.l.b16 %v510
    %v2701 = vunpack.c.h.b16 %v510
    %v2702 = vunpack.c.l.b16 %v511
    %v2703 = vunpack.c.h.b16 %v511
    %v2704 = vunpack.c.l.b16 %v512
    %v2705 = vunpack.c.h.b16 %v512
    %v2706 = vunpack.c.l.b16 %v513
    %v2707 = vunpack.c.h.b16 %v513
    %v2708 = vunpack.c.l.b16 %v514
    %v2709 = vunpack.c.h.b16 %v514
    %v2710 = vunpack.c.l.b16 %v515
    %v2711 = vunpack.c.h.b16 %v515
    %v2712 = vunpack.c.l.b16 %v516
    %v2713 = vunpack.c.h.b16 %v516
    %v2714 = vunpack.c.l.b16 %v517
    %v2715 = vunpack.c.h.b16 %v517
    %v2716 = vunpack.c.l.b16 %v518
    %v2717 = vunpack.c.h.b16 %v518
    %v2718 = vunpack.c.l.b16 %v519
    %v2719 = vunpack.c.h.b16 %v519
    %v2720 = vunpack.c.l.b16 %v520
    %v2721 = vunpack.c.h.b16 %v520
    %v2722 = vunpack.c.l.b16 %v521
    %v2723 = vunpack.c.h.b16 %v521
    %v2724 = vunpack.c.l.b16 %v522
    %v2725 = vunpack.c.h.b16 %v522
    %v2726 = vunpack.c.l.b16 %v523
    %v2727 = vunpack.c.h.b16 %v523
    %v2728 = vunpack.c.l.b16 %v524
    %v2729 = vunpack.c.h.b16 %v524
    %v2730 = vunpack.c.l.b16 %v525
    %v2731 = vunpack.c.h.b16 %v525
    %v2732 = vunpack.c.l.b16 %v526
    %v2733 = vunpack.c.h.b16 %v526
    %v2734 = vunpack.c.l.b16 %v527
    %v2735 = vunpack.c.h.b16 %v527
    %v2736 = vunpack.c.l.b16 %v528
    %v2737 = vunpack.c.h.b16 %v528
    %v2738 = vunpack.c.l.b16 %v529
    %v2739 = vunpack.c.h.b16 %v529
    %v2740 = vunpack.c.l.b16 %v530
    %v2741 = vunpack.c.h.b16 %v530
    %v2742 = vunpack.c.l.b16 %v531
    %v2743 = vunpack.c.h.b16 %v531
    %v2744 = vunpack.c.l.b16 %v532
    %v2745 = vunpack.c.h.b16 %v532
    %v2746 = vunpack.c.l.b16 %v533
    %v2747 = vunpack.c.h.b16 %v533
    %v2748 = vunpack.c.l.b16 %v534
    %v2749 = vunpack.c.h.b16 %v534
    %v2750 = vunpack.c.l.b16 %v535
    %v2751 = vunpack.c.h.b16 %v535
    %v2752 = vunpack.c.l.b16 %v536
    %v2753 = vunpack.c.h.b16 %v536
    %v2754 = vunpack.c.l.b16 %v537
    %v2755 = vunpack.c.h.b16 %v537
    %v2756 = vunpack.c.l.b16 %v538
    %v2757 = vunpack.c.h.b16 %v538
    %v2758 = vunpack.c.l.b16 %v539
    %v2759 = vunpack.c.h.b16 %v539
    %v2760 = vunpack.c.l.b16 %v540
    %v2761 = vunpack.c.h.b16 %v540
    %v2762 = vunpack.c.l.b16 %v541
    %v2763 = vunpack.c.h.b16 %v541
    %v2764 = vunpack.c.l.b16 %v542
    %v2765 = vunpack.c.h.b16 %v542
    %v2766 = vunpack.c.l.b16 %v543
    %v2767 = vunpack.c.h.b16 %v543
    %v2768 = vunpack.c.l.b16 %v544
    %v2769 = vunpack.c.h.b16 %v544
    %v2770 = vunpack.c.l.b16 %v545
    %v2771 = vunpack.c.h.b16 %v545
    %v2772 = vunpack.c.l.b16 %v546
    %v2773 = vunpack.c.h.b16 %v546
    %v2774 = vunpack.c.l.b16 %v547
    %v2775 = vunpack.c.h.b16 %v547
    %v2776 = vunpack.c.l.b16 %v548
    %v2777 = vunpack.c.h.b16 %v548
    %v2778 = vunpack.c.l.b16 %v549
    %v2779 = vunpack.c.h.b16 %v549
    %v2780 = vunpack.c.l.b16 %v550
    %v2781 = vunpack.c.h.b16 %v550
    %v2782 = vunpack.c.l.b16 %v551
    %v2783 = vunpack.c.h.b16 %v551
    %v2784 = vunpack.c.l.b16 %v552
    %v2785 = vunpack.c.h.b16 %v552
    %v2786 = vunpack.c.l.b16 %v553
    %v2787 = vunpack.c.h.b16 %v553
    %v2788 = vunpack.c.l.b16 %v554
    %v2789 = vunpack.c.h.b16 %v554
    %v2790 = vunpack.c.l.b16 %v555
    %v2791 = vunpack.c.h.b16 %v555
    %v2792 = vunpack.c.l.b16 %v556
    %v2793 = vunpack.c.h.b16 %v556
    %v2794 = vunpack.c.l.b16 %v557
    %v2795 = vunpack.c.h.b16 %v557
    %v2796 = vunpack.c.l.b16 %v558
    %v2797 = vunpack.c.h.b16 %v558
    %v2798 = vunpack.c.l.b16 %v559
    %v2799 = vunpack.c.h.b16 %v559
    %v2800 = vunpack.c.l.b16 %v560
    %v2801 = vunpack.c.h.b16 %v560
    %v2802 = vunpack.c.l.b16 %v561
    %v2803 = vunpack.c.h.b16 %v561
    %v2804 = vunpack.c.l.b16 %v562
    %v2805 = vunpack.c.h.b16 %v562
    %v2806 = vunpack.c.l.b16 %v563
    %v2807 = vunpack.c.h.b16 %v563
    %v2808 = vunpack.c.l.b16 %v564
    %v2809 = vunpack.c.h.b16 %v564
    %v2810 = vunpack.c.l.b16 %v565
    %v2811 = vunpack.c.h.b16 %v565
    %v2812 = vunpack.c.l.b16 %v566
    %v2813 = vunpack.c.h.b16 %v566
    %v2814 = vunpack.c.l.b16 %v567
    %v2815 = vunpack.c.h.b16 %v567
    %v2816 = vunpack.c.l.b16 %v568
    %v2817 = vunpack.c.h.b16 %v568
    %v2818 = vunpack.c.l.b16 %v569
    %v2819 = vunpack.c.h.b16 %v569
    %v2820 = vunpack.c.l.b16 %v570
    %v2821 = vunpack.c.h.b16 %v570
    %v2822 = vunpack.c.l.b16 %v571
    %v2823 = vunpack.c.h.b16 %v571
    %v2824 = vunpack.c.l.b16 %v572
    %v2825 = vunpack.c.h.b16 %v572
    %v2826 = vunpack.c.l.b16 %v573
    %v2827 = vunpack.c.h.b16 %v573
    %v2828 = vunpack.c.l.b16 %v574
    %v2829 = vunpack.c.h.b16 %v574
    %v2830 = vunpack.c.l.b16 %v575
    %v2831 = vunpack.c.h.b16 %v575
    %v2832 = vunpack.c.l.b16 %v576
    %v2833 = vunpack.c.h.b16 %v576
    %v2834 = vunpack.c.l.b16 %v577
    %v2835 = vunpack.c.h.b16 %v577
    %v2836 = vunpack.c.l.b16 %v578
    %v2837 = vunpack.c.h.b16 %v578
    %v2838 = vunpack.c.l.b16 %v579
    %v2839 = vunpack.c.h.b16 %v579
    %v2840 = vunpack.c.l.b16 %v580
    %v2841 = vunpack.c.h.b16 %v580
    %v2842 = vunpack.c.l.b16 %v581
    %v2843 = vunpack.c.h.b16 %v581
    %v2844 = vunpack.c.l.b16 %v582
    %v2845 = vunpack.c.h.b16 %v582
    %v2846 = vunpack.c.l.b16 %v583
    %v2847 = vunpack.c.h.b16 %v583
    %v2848 = vunpack.c.l.b16 %v584
    %v2849 = vunpack.c.h.b16 %v584
    %v2850 = vunpack.c.l.b16 %v585
    %v2851 = vunpack.c.h.b16 %v585
    %v2852 = vunpack.c.l.b16 %v586
    %v2853 = vunpack.c.h.b16 %v586
    %v2854 = vunpack.c.l.b16 %v587
    %v2855 = vunpack.c.h.b16 %v587
    %v2856 = vunpack.c.l.b16 %v588
    %v2857 = vunpack.c.h.b16 %v588
    %v2858 = vunpack.c.l.b16 %v589
    %v2859 = vunpack.c.h.b16 %v589
    %v2860 = vunpack.c.l.b16 %v590
    %v2861 = vunpack.c.h.b16 %v590
    %v2862 = vunpack.c.l.b16 %v591
    %v2863 = vunpack.c.h.b16 %v591
    %v2864 = vunpack.c.l.b16 %v592
    %v2865 = vunpack.c.h.b16 %v592
    %v2866 = vunpack.c.l.b16 %v593
    %v2867 = vunpack.c.h.b16 %v593
    %v2868 = vunpack.c.l.b16 %v594
    %v2869 = vunpack.c.h.b16 %v594
    %v2870 = vunpack.c.l.b16 %v595
    %v2871 = vunpack.c.h.b16 %v595
    %v2872 = vunpack.c.l.b16 %v596
    %v2873 = vunpack.c.h.b16 %v596
    %v2874 = vunpack.c.l.b16 %v597
    %v2875 = vunpack.c.h.b16 %v597
    %v2876 = vunpack.c.l.b16 %v598
    %v2877 = vunpack.c.h.b16 %v598
    %v2878 = vunpack.c.l.b16 %v599
    %v2879 = vunpack.c.h.b16 %v599
    %v2880 = vunpack.c.l.b16 %v600
    %v2881 = vunpack.c.h.b16 %v600
    %v2882 = vunpack.c.l.b16 %v601
    %v2883 = vunpack.c.h.b16 %v601
    %v2884 = vunpack.c.l.b16 %v602
    %v2885 = vunpack.c.h.b16 %v602
    %v2886 = vunpack.c.l.b16 %v603
    %v2887 = vunpack.c.h.b16 %v603
    %v2888 = vunpack.c.l.b16 %v604
    %v2889 = vunpack.c.h.b16 %v604
    %v2890 = vunpack.c.l.b16 %v605
    %v2891 = vunpack.c.h.b16 %v605
    %v2892 = vunpack.c.l.b16 %v606
    %v2893 = vunpack.c.h.b16 %v606
    %v2894 = vunpack.c.l.b16 %v607
    %v2895 = vunpack.c.h.b16 %v607
    %v2896 = vunpack.c.l.b16 %v608
    %v2897 = vunpack.c.h.b16 %v608
    %v2898 = vunpack.c.l.b16 %v609
    %v2899 = vunpack.c.h.b16 %v609
    %v2900 = vunpack.c.l.b16 %v610
    %v2901 = vunpack.c.h.b16 %v610
    %v2902 = vunpack.c.l.b16 %v611
    %v2903 = vunpack.c.h.b16 %v611
    %v2904 = vunpack.c.l.b16 %v612
    %v2905 = vunpack.c.h.b16 %v612
    %v2906 = vunpack.c.l.b16 %v613
    %v2907 = vunpack.c.h.b16 %v613
    %v2908 = vunpack.c.l.b16 %v614
    %v2909 = vunpack.c.h.b16 %v614
    %v2910 = vunpack.c.l.b16 %v615
    %v2911 = vunpack.c.h.b16 %v615
    %v2912 = vunpack.c.l.b16 %v616
    %v2913 = vunpack.c.h.b16 %v616
    %v2914 = vunpack.c.l.b16 %v617
    %v2915 = vunpack.c.h.b16 %v617
    %v2916 = vunpack.c.l.b16 %v618
    %v2917 = vunpack.c.h.b16 %v618
    %v2918 = vunpack.c.l.b16 %v619
    %v2919 = vunpack.c.h.b16 %v619
    %v2920 = vunpack.c.l.b16 %v620
    %v2921 = vunpack.c.h.b16 %v620
    %v2922 = vunpack.c.l.b16 %v621
    %v2923 = vunpack.c.h.b16 %v621
    %v2924 = vunpack.c.l.b16 %v622
    %v2925 = vunpack.c.h.b16 %v622
    %v2926 = vunpack.c.l.b16 %v623
    %v2927 = vunpack.c.h.b16 %v623
    %v2928 = vunpack.c.l.b16 %v624
    %v2929 = vunpack.c.h.b16 %v624
    %v2930 = vunpack.c.l.b16 %v625
    %v2931 = vunpack.c.h.b16 %v625
    %v2932 = vunpack.c.l.b16 %v626
    %v2933 = vunpack.c.h.b16 %v626
    %v2934 = vunpack.c.l.b16 %v627
    %v2935 = vunpack.c.h.b16 %v627
    %v2936 = vunpack.c.l.b16 %v628
    %v2937 = vunpack.c.h.b16 %v628
    %v2938 = vunpack.c.l.b16 %v629
    %v2939 = vunpack.c.h.b16 %v629
    %v2940 = vunpack.c.l.b16 %v630
    %v2941 = vunpack.c.h.b16 %v630
    %v2942 = vunpack.c.l.b16 %v631
    %v2943 = vunpack.c.h.b16 %v631
    %v2944 = vunpack.c.l.b16 %v632
    %v2945 = vunpack.c.h.b16 %v632
    %v2946 = vunpack.c.l.b16 %v633
    %v2947 = vunpack.c.h.b16 %v633
    %v2948 = vunpack.c.l.b16 %v634
    %v2949 = vunpack.c.h.b16 %v634
    %v2950 = vunpack.c.l.b16 %v635
    %v2951 = vunpack.c.h.b16 %v635
    %v2952 = vunpack.c.l.b16 %v636
    %v2953 = vunpack.c.h.b16 %v636
    %v2954 = vunpack.c.l.b16 %v637
    %v2955 = vunpack.c.h.b16 %v637
    %v2956 = vunpack.c.l.b16 %v638
    %v2957 = vunpack.c.h.b16 %v638
    %v2958 = vunpack.c.l.b16 %v639
    %v2959 = vunpack.c.h.b16 %v639
    %v2960 = vunpack.c.l.b16 %v640
    %v2961 = vunpack.c.h.b16 %v640
    %v2962 = vunpack.c.l.b16 %v641
    %v2963 = vunpack.c.h.b16 %v641
    %v2964 = vunpack.c.l.b16 %v642
    %v2965 = vunpack.c.h.b16 %v642
    %v2966 = vunpack.c.l.b16 %v643
    %v2967 = vunpack.c.h.b16 %v643
    %v2968 = vunpack.c.l.b16 %v644
    %v2969 = vunpack.c.h.b16 %v644
    %v2970 = vunpack.c.l.b16 %v645
    %v2971 = vunpack.c.h.b16 %v645
    %v2972 = vunpack.c.l.b16 %v646
    %v2973 = vunpack.c.h.b16 %v646
    %v2974 = vunpack.c.l.b16 %v647
    %v2975 = vunpack.c.h.b16 %v647
    %v2976 = vunpack.c.l.b16 %v648
    %v2977 = vunpack.c.h.b16 %v648
    %v2978 = vunpack.c.l.b16 %v649
    %v2979 = vunpack.c.h.b16 %v649
    %v2980 = vunpack.c.l.b16 %v650
    %v2981 = vunpack.c.h.b16 %v650
    %v2982 = vunpack.c.l.b16 %v651
    %v2983 = vunpack.c.h.b16 %v651
    %v2984 = vunpack.c.l.b16 %v652
    %v2985 = vunpack.c.h.b16 %v652
    %v2986 = vunpack.c.l.b16 %v653
    %v2987 = vunpack.c.h.b16 %v653
    %v2988 = vunpack.c.l.b16 %v654
    %v2989 = vunpack.c.h.b16 %v654
    %v2990 = vunpack.c.l.b16 %v655
    %v2991 = vunpack.c.h.b16 %v655
    %v2992 = vunpack.c.l.b16 %v656
    %v2993 = vunpack.c.h.b16 %v656
    %v2994 = vunpack.c.l.b16 %v657
    %v2995 = vunpack.c.h.b16 %v657
    %v2996 = vunpack.c.l.b16 %v658
    %v2997 = vunpack.c.h.b16 %v658
    %v2998 = vunpack.c.l.b16 %v659
    %v2999 = vunpack.c.h.b16 %v659
    %v3000 = vunpack.c.l.b16 %v660
    %v3001 = vunpack.c.h.b16 %v660
    %v3002 = vunpack.c.l.b16 %v661
    %v3003 = vunpack.c.h.b16 %v661
    %v3004 = vunpack.c.l.b16 %v662
    %v3005 = vunpack.c.h.b16 %v662
    %v3006 = vunpack.c.l.b16 %v663
    %v3007 = vunpack.c.h.b16 %v663
    %v3008 = vunpack.c.l.b16 %v664
    %v3009 = vunpack.c.h.b16 %v664
    %v3010 = vunpack.c.l.b16 %v665
    %v3011 = vunpack.c.h.b16 %v665
    %v3012 = vunpack.c.l.b16 %v666
    %v3013 = vunpack.c.h.b16 %v666
    %v3014 = vunpack.c.l.b16 %v667
    %v3015 = vunpack.c.h.b16 %v667
    %v3016 = vunpack.c.l.b16 %v668
    %v3017 = vunpack.c.h.b16 %v668
    %v3018 = vunpack.c.l.b16 %v669
    %v3019 = vunpack.c.h.b16 %v669
    %v3020 = vunpack.c.l.b16 %v670
    %v3021 = vunpack.c.h.b16 %v670
    %v3022 = vunpack.c.l.b16 %v671
    %v3023 = vunpack.c.h.b16 %v671
    %v3024 = vunpack.c.l.b16 %v672
    %v3025 = vunpack.c.h.b16 %v672
    %v3026 = vunpack.c.l.b16 %v673
    %v3027 = vunpack.c.h.b16 %v673
    %v3028 = vunpack.c.l.b16 %v674
    %v3029 = vunpack.c.h.b16 %v674
    %v3030 = vunpack.c.l.b16 %v675
    %v3031 = vunpack.c.h.b16 %v675
    %v3032 = vunpack.c.l.b16 %v676
    %v3033 = vunpack.c.h.b16 %v676
    %v3034 = vunpack.c.l.b16 %v677
    %v3035 = vunpack.c.h.b16 %v677
    %v3036 = vunpack.c.l.b16 %v678
    %v3037 = vunpack.c.h.b16 %v678
    %v3038 = vunpack.c.l.b16 %v679
    %v3039 = vunpack.c.h.b16 %v679
    %v3040 = vunpack.c.l.b16 %v680
    %v3041 = vunpack.c.h.b16 %v680
    %v3042 = vunpack.c.l.b16 %v681
    %v3043 = vunpack.c.h.b16 %v681
    %v3044 = vunpack.c.l.b16 %v682
    %v3045 = vunpack.c.h.b16 %v682
    %v3046 = vunpack.c.l.b16 %v683
    %v3047 = vunpack.c.h.b16 %v683
    %v3048 = vunpack.c.l.b16 %v684
    %v3049 = vunpack.c.h.b16 %v684
    %v3050 = vunpack.c.l.b16 %v685
    %v3051 = vunpack.c.h.b16 %v685
    %v3052 = vunpack.c.l.b16 %v686
    %v3053 = vunpack.c.h.b16 %v686
    %v3054 = vunpack.c.l.b16 %v687
    %v3055 = vunpack.c.h.b16 %v687
    %v3056 = vunpack.c.l.b16 %v688
    %v3057 = vunpack.c.h.b16 %v688
    %v3058 = vunpack.c.l.b16 %v689
    %v3059 = vunpack.c.h.b16 %v689
    %v3060 = vunpack.c.l.b16 %v690
    %v3061 = vunpack.c.h.b16 %v690
    %v3062 = vunpack.c.l.b16 %v691
    %v3063 = vunpack.c.h.b16 %v691
    %v3064 = vunpack.c.l.b16 %v692
    %v3065 = vunpack.c.h.b16 %v692
    %v3066 = vunpack.c.l.b16 %v693
    %v3067 = vunpack.c.h.b16 %v693
    %v3068 = vunpack.c.l.b16 %v694
    %v3069 = vunpack.c.h.b16 %v694
    %v3070 = vunpack.c.l.b16 %v695
    %v3071 = vunpack.c.h.b16 %v695
    %v3072 = vunpack.c.l.b16 %v696
    %v3073 = vunpack.c.h.b16 %v696
    %v3074 = vunpack.c.l.b16 %v697
    %v3075 = vunpack.c.h.b16 %v697
    %v3076 = vunpack.c.l.b16 %v698
    %v3077 = vunpack.c.h.b16 %v698
    %v3078 = vunpack.c.l.b16 %v699
    %v3079 = vunpack.c.h.b16 %v699
    %v3080 = vunpack.c.l.b16 %v700
    %v3081 = vunpack.c.h.b16 %v700
    %v3082 = vunpack.c.l.b16 %v701
    %v3083 = vunpack.c.h.b16 %v701
    %v3084 = vunpack.c.l.b16 %v702
    %v3085 = vunpack.c.h.b16 %v702
    %v3086 = vunpack.c.l.b16 %v703
    %v3087 = vunpack.c.h.b16 %v703
    %v3088 = vunpack.c.l.b16 %v704
    %v3089 = vunpack.c.h.b16 %v704
    %v3090 = vunpack.c.l.b16 %v705
    %v3091 = vunpack.c.h.b16 %v705
    %v3092 = vunpack.c.l.b16 %v706
    %v3093 = vunpack.c.h.b16 %v706
    %v3094 = vunpack.c.l.b16 %v707
    %v3095 = vunpack.c.h.b16 %v707
    %v3096 = vunpack.c.l.b16 %v708
    %v3097 = vunpack.c.h.b16 %v708
    %v3098 = vunpack.c.l.b16 %v709
    %v3099 = vunpack.c.h.b16 %v709
    %v3100 = vunpack.c.l.b16 %v710
    %v3101 = vunpack.c.h.b16 %v710
    %v3102 = vunpack.c.l.b16 %v711
    %v3103 = vunpack.c.h.b16 %v711
    %v3104 = vunpack.c.l.b16 %v712
    %v3105 = vunpack.c.h.b16 %v712
    %v3106 = vunpack.c.l.b16 %v713
    %v3107 = vunpack.c.h.b16 %v713
    %v3108 = vunpack.c.l.b16 %v714
    %v3109 = vunpack.c.h.b16 %v714
    %v3110 = vunpack.c.l.b16 %v715
    %v3111 = vunpack.c.h.b16 %v715
    %v3112 = vunpack.c.l.b16 %v716
    %v3113 = vunpack.c.h.b16 %v716
    %v3114 = vunpack.c.l.b16 %v717
    %v3115 = vunpack.c.h.b16 %v717
    %v3116 = vunpack.c.l.b16 %v718
    %v3117 = vunpack.c.h.b16 %v718
    %v3118 = vunpack.c.l.b16 %v719
    %v3119 = vunpack.c.h.b16 %v719
    %v3120 = vunpack.c.l.b16 %v720
    %v3121 = vunpack.c.h.b16 %v720
    %v3122 = vunpack.c.l.b16 %v721
    %v3123 = vunpack.c.h.b16 %v721
    %v3124 = vunpack.c.l.b16 %v722
    %v3125 = vunpack.c.h.b16 %v722
    %v3126 = vunpack.c.l.b16 %v723
    %v3127 = vunpack.c.h.b16 %v723
    %v3128 = vunpack.c.l.b16 %v724
    %v3129 = vunpack.c.h.b16 %v724
    %v3130 = vunpack.c.l.b16 %v725
    %v3131 = vunpack.c.h.b16 %v725
    %v3132 = vunpack.c.l.b16 %v726
    %v3133 = vunpack.c.h.b16 %v726
    %v3134 = vunpack.c.l.b16 %v727
    %v3135 = vunpack.c.h.b16 %v727
    %v3136 = vunpack.c.l.b16 %v728
    %v3137 = vunpack.c.h.b16 %v728
    %v3138 = vunpack.c.l.b16 %v729
    %v3139 = vunpack.c.h.b16 %v729
    %v3140 = vunpack.c.l.b16 %v730
    %v3141 = vunpack.c.h.b16 %v730
    %v3142 = vunpack.c.l.b16 %v731
    %v3143 = vunpack.c.h.b16 %v731
    %v3144 = vunpack.c.l.b16 %v732
    %v3145 = vunpack.c.h.b16 %v732
    %v3146 = vunpack.c.l.b16 %v733
    %v3147 = vunpack.c.h.b16 %v733
    %v3148 = vunpack.c.l.b16 %v734
    %v3149 = vunpack.c.h.b16 %v734
    %v3150 = vunpack.c.l.b16 %v735
    %v3151 = vunpack.c.h.b16 %v735
    %v3152 = vunpack.c.l.b16 %v736
    %v3153 = vunpack.c.h.b16 %v736
    %v3154 = vunpack.c.l.b16 %v737
    %v3155 = vunpack.c.h.b16 %v737
    %v3156 = vunpack.c.l.b16 %v738
    %v3157 = vunpack.c.h.b16 %v738
    %v3158 = vunpack.c.l.b16 %v739
    %v3159 = vunpack.c.h.b16 %v739
    %v3160 = vunpack.c.l.b16 %v740
    %v3161 = vunpack.c.h.b16 %v740
    %v3162 = vunpack.c.l.b16 %v741
    %v3163 = vunpack.c.h.b16 %v741
    %v3164 = vunpack.c.l.b16 %v742
    %v3165 = vunpack.c.h.b16 %v742
    %v3166 = vunpack.c.l.b16 %v743
    %v3167 = vunpack.c.h.b16 %v743
    %v3168 = vunpack.c.l.b16 %v744
    %v3169 = vunpack.c.h.b16 %v744
    %v3170 = vunpack.c.l.b16 %v745
    %v3171 = vunpack.c.h.b16 %v745
    %v3172 = vunpack.c.l.b16 %v746
    %v3173 = vunpack.c.h.b16 %v746
    %v3174 = vunpack.c.l.b16 %v747
    %v3175 = vunpack.c.h.b16 %v747
    %v3176 = vunpack.c.l.b16 %v748
    %v3177 = vunpack.c.h.b16 %v748
    %v3178 = vunpack.c.l.b16 %v749
    %v3179 = vunpack.c.h.b16 %v749
    %v3180 = vunpack.c.l.b16 %v750
    %v3181 = vunpack.c.h.b16 %v750
    %v3182 = vunpack.c.l.b16 %v751
    %v3183 = vunpack.c.h.b16 %v751
    %v3184 = vunpack.c.l.b16 %v752
    %v3185 = vunpack.c.h.b16 %v752
    %v3186 = vunpack.c.l.b16 %v753
    %v3187 = vunpack.c.h.b16 %v753
    %v3188 = vunpack.c.l.b16 %v754
    %v3189 = vunpack.c.h.b16 %v754
    %v3190 = vunpack.c.l.b16 %v755
    %v3191 = vunpack.c.h.b16 %v755
    %v3192 = vunpack.c.l.b16 %v756
    %v3193 = vunpack.c.h.b16 %v756
    %v3194 = vunpack.c.l.b16 %v757
    %v3195 = vunpack.c.h.b16 %v757
    %v3196 = vunpack.c.l.b16 %v758
    %v3197 = vunpack.c.h.b16 %v758
    %v3198 = vunpack.c.l.b16 %v759
    %v3199 = vunpack.c.h.b16 %v759
    %v3200 = vunpack.c.l.b16 %v760
    %v3201 = vunpack.c.h.b16 %v760
    %v3202 = vunpack.c.l.b16 %v761
    %v3203 = vunpack.c.h.b16 %v761
    %v3204 = vunpack.c.l.b16 %v762
    %v3205 = vunpack.c.h.b16 %v762
    %v3206 = vunpack.c.l.b16 %v763
    %v3207 = vunpack.c.h.b16 %v763
    %v3208 = vunpack.c.l.b16 %v764
    %v3209 = vunpack.c.h.b16 %v764
    %v3210 = vunpack.c.l.b16 %v765
    %v3211 = vunpack.c.h.b16 %v765
    %v3212 = vunpack.c.l.b16 %v766
    %v3213 = vunpack.c.h.b16 %v766
    %v3214 = vunpack.c.l.b16 %v767
    %v3215 = vunpack.c.h.b16 %v767
    %v3216 = vunpack.c.l.b16 %v768
    %v3217 = vunpack.c.h.b16 %v768
    %v3218 = vunpack.c.l.b16 %v769
    %v3219 = vunpack.c.h.b16 %v769
    %v3220 = vunpack.c.l.b16 %v770
    %v3221 = vunpack.c.h.b16 %v770
    %v3222 = vunpack.c.l.b16 %v771
    %v3223 = vunpack.c.h.b16 %v771
    %v3224 = vunpack.c.l.b16 %v772
    %v3225 = vunpack.c.h.b16 %v772
    %v3226 = vunpack.c.l.b16 %v773
    %v3227 = vunpack.c.h.b16 %v773
    %v3228 = vunpack.c.l.b16 %v774
    %v3229 = vunpack.c.h.b16 %v774
    %v3230 = vunpack.c.l.b16 %v775
    %v3231 = vunpack.c.h.b16 %v775
    %v3232 = vunpack.c.l.b16 %v776
    %v3233 = vunpack.c.h.b16 %v776
    %v3234 = vunpack.c.l.b16 %v777
    %v3235 = vunpack.c.h.b16 %v777
    %v3236 = vunpack.c.l.b16 %v778
    %v3237 = vunpack.c.h.b16 %v778
    %v3238 = vunpack.c.l.b16 %v779
    %v3239 = vunpack.c.h.b16 %v779
    %v3240 = vunpack.c.l.b16 %v780
    %v3241 = vunpack.c.h.b16 %v780
    %v3242 = vunpack.c.l.b16 %v781
    %v3243 = vunpack.c.h.b16 %v781
    %v3244 = vunpack.c.l.b16 %v782
    %v3245 = vunpack.c.h.b16 %v782
    %v3246 = vunpack.c.l.b16 %v783
    %v3247 = vunpack.c.h.b16 %v783
    %v3248 = vunpack.c.l.b16 %v784
    %v3249 = vunpack.c.h.b16 %v784
    %v3250 = vunpack.c.l.b16 %v785
    %v3251 = vunpack.c.h.b16 %v785
    %v3252 = vunpack.c.l.b16 %v786
    %v3253 = vunpack.c.h.b16 %v786
    %v3254 = vunpack.c.l.b16 %v787
    %v3255 = vunpack.c.h.b16 %v787
    %v3256 = vunpack.c.l.b16 %v788
    %v3257 = vunpack.c.h.b16 %v788
    %v3258 = vunpack.c.l.b16 %v789
    %v3259 = vunpack.c.h.b16 %v789
    %v3260 = vunpack.c.l.b16 %v790
    %v3261 = vunpack.c.h.b16 %v790
    %v3262 = vunpack.c.l.b16 %v791
    %v3263 = vunpack.c.h.b16 %v791
    %v3264 = vunpack.c.l.b16 %v792
    %v3265 = vunpack.c.h.b16 %v792
    %v3266 = vunpack.c.l.b16 %v793
    %v3267 = vunpack.c.h.b16 %v793
    %v3268 = vunpack.c.l.b16 %v794
    %v3269 = vunpack.c.h.b16 %v794
    %v3270 = vunpack.c.l.b16 %v795
    %v3271 = vunpack.c.h.b16 %v795
    %v3272 = vunpack.c.l.b16 %v796
    %v3273 = vunpack.c.h.b16 %v796
    %v3274 = vunpack.c.l.b16 %v797
    %v3275 = vunpack.c.h.b16 %v797
    %v3276 = vunpack.c.l.b16 %v798
    %v3277 = vunpack.c.h.b16 %v798
    %v3278 = vunpack.c.l.b16 %v799
    %v3279 = vunpack.c.h.b16 %v799
    %v3280 = vunpack.c.l.b16 %v800
    %v3281 = vunpack.c.h.b16 %v800
    %v3282 = vunpack.c.l.b16 %v801
    %v3283 = vunpack.c.h.b16 %v801
    %v3284 = vunpack.c.l.b16 %v802
    %v3285 = vunpack.c.h.b16 %v802
    %v3286 = vunpack.c.l.b16 %v803
    %v3287 = vunpack.c.h.b16 %v803
    %v3288 = vunpack.c.l.b16 %v804
    %v3289 = vunpack.c.h.b16 %v804
    %v3290 = vunpack.c.l.b16 %v805
    %v3291 = vunpack.c.h.b16 %v805
    %v3292 = vunpack.c.l.b16 %v806
    %v3293 = vunpack.c.h.b16 %v806
    %v3294 = vunpack.c.l.b16 %v807
    %v3295 = vunpack.c.h.b16 %v807
    %v3296 = vunpack.c.l.b16 %v808
    %v3297 = vunpack.c.h.b16 %v808
    %v3298 = vunpack.c.l.b16 %v809
    %v3299 = vunpack.c.h.b16 %v809
    %v3300 = vunpack.c.l.b16 %v810
    %v3301 = vunpack.c.h.b16 %v810
    %v3302 = vunpack.c.l.b16 %v811
    %v3303 = vunpack.c.h.b16 %v811
    %v3304 = vunpack.c.l.b16 %v812
    %v3305 = vunpack.c.h.b16 %v812
    %v3306 = vunpack.c.l.b16 %v813
    %v3307 = vunpack.c.h.b16 %v813
    %v3308 = vunpack.c.l.b16 %v814
    %v3309 = vunpack.c.h.b16 %v814
    %v3310 = vunpack.c.l.b16 %v815
    %v3311 = vunpack.c.h.b16 %v815
    %v3312 = vunpack.c.l.b16 %v816
    %v3313 = vunpack.c.h.b16 %v816
    %v3314 = vunpack.c.l.b16 %v817
    %v3315 = vunpack.c.h.b16 %v817
    %v3316 = vunpack.c.l.b16 %v818
    %v3317 = vunpack.c.h.b16 %v818
    %v3318 = vunpack.c.l.b16 %v819
    %v3319 = vunpack.c.h.b16 %v819
    %v3320 = vunpack.c.l.b16 %v820
    %v3321 = vunpack.c.h.b16 %v820
    %v3322 = vunpack.c.l.b16 %v821
    %v3323 = vunpack.c.h.b16 %v821
    %v3324 = vunpack.c.l.b16 %v822
    %v3325 = vunpack.c.h.b16 %v822
    %v3326 = vunpack.c.l.b16 %v823
    %v3327 = vunpack.c.h.b16 %v823
    %v3328 = vunpack.c.l.b16 %v824
    %v3329 = vunpack.c.h.b16 %v824
    %v3330 = vunpack.c.l.b16 %v825
    %v3331 = vunpack.c.h.b16 %v825
    %v3332 = vunpack.c.l.b16 %v826
    %v3333 = vunpack.c.h.b16 %v826
    %v3334 = vunpack.c.l.b16 %v827
    %v3335 = vunpack.c.h.b16 %v827
    %v3336 = vunpack.c.l.b16 %v828
    %v3337 = vunpack.c.h.b16 %v828
    %v3338 = vunpack.c.l.b16 %v829
    %v3339 = vunpack.c.h.b16 %v829
    %v3340 = vunpack.c.l.b16 %v830
    %v3341 = vunpack.c.h.b16 %v830
    %v3342 = vunpack.c.l.b16 %v831
    %v3343 = vunpack.c.h.b16 %v831
    %v3344 = vunpack.c.l.b16 %v832
    %v3345 = vunpack.c.h.b16 %v832
    %v3346 = vunpack.c.l.b16 %v833
    %v3347 = vunpack.c.h.b16 %v833
    %v3348 = vunpack.c.l.b16 %v834
    %v3349 = vunpack.c.h.b16 %v834
    %v3350 = vunpack.c.l.b16 %v835
    %v3351 = vunpack.c.h.b16 %v835
    %v3352 = vunpack.c.l.b16 %v836
    %v3353 = vunpack.c.h.b16 %v836
    %v3354 = vunpack.c.l.b16 %v837
    %v3355 = vunpack.c.h.b16 %v837
    %v3356 = vunpack.c.l.b16 %v838
    %v3357 = vunpack.c.h.b16 %v838
    %v3358 = vunpack.c.l.b16 %v839
    %v3359 = vunpack.c.h.b16 %v839
    %v3360 = vunpack.c.l.b16 %v840
    %v3361 = vunpack.c.h.b16 %v840
    %v3362 = vunpack.c.l.b16 %v841
    %v3363 = vunpack.c.h.b16 %v841
    %v3364 = vunpack.c.l.b16 %v842
    %v3365 = vunpack.c.h.b16 %v842
    %v3366 = vunpack.c.l.b16 %v843
    %v3367 = vunpack.c.h.b16 %v843
    %v3368 = vunpack.c.l.b16 %v844
    %v3369 = vunpack.c.h.b16 %v844
    %v3370 = vunpack.c.l.b16 %v845
    %v3371 = vunpack.c.h.b16 %v845
    %v3372 = vunpack.c.l.b16 %v846
    %v3373 = vunpack.c.h.b16 %v846
    %v3374 = vunpack.c.l.b16 %v847
    %v3375 = vunpack.c.h.b16 %v847
    %v3376 = vunpack.c.l.b16 %v848
    %v3377 = vunpack.c.h.b16 %v848
    %v3378 = vunpack.c.l.b16 %v849
    %v3379 = vunpack.c.h.b16 %v849
    %v3380 = vunpack.c.l.b16 %v850
    %v3381 = vunpack.c.h.b16 %v850
    %v3382 = vunpack.c.l.b16 %v851
    %v3383 = vunpack.c.h.b16 %v851
    %v3384 = vunpack.c.l.b16 %v852
    %v3385 = vunpack.c.h.b16 %v852
    %v3386 = vunpack.c.l.b16 %v853
    %v3387 = vunpack.c.h.b16 %v853
    %v3388 = vunpack.c.l.b16 %v854
    %v3389 = vunpack.c.h.b16 %v854
    %v3390 = vunpack.c.l.b16 %v855
    %v3391 = vunpack.c.h.b16 %v855
    %v3392 = vunpack.c.l.b16 %v856
    %v3393 = vunpack.c.h.b16 %v856
    %v3394 = vunpack.c.l.b16 %v857
    %v3395 = vunpack.c.h.b16 %v857
    %v3396 = vunpack.c.l.b16 %v858
    %v3397 = vunpack.c.h.b16 %v858
    %v3398 = vunpack.c.l.b16 %v859
    %v3399 = vunpack.c.h.b16 %v859
    %v3400 = vunpack.c.l.b16 %v860
    %v3401 = vunpack.c.h.b16 %v860
    %v3402 = vunpack.c.l.b16 %v861
    %v3403 = vunpack.c.h.b16 %v861
    %v3404 = vunpack.c.l.b16 %v862
    %v3405 = vunpack.c.h.b16 %v862
    %v3406 = vunpack.c.l.b16 %v863
    %v3407 = vunpack.c.h.b16 %v863
    %v3408 = vunpack.c.l.b16 %v864
    %v3409 = vunpack.c.h.b16 %v864
    %v3410 = vunpack.c.l.b16 %v865
    %v3411 = vunpack.c.h.b16 %v865
    %v3412 = vunpack.c.l.b16 %v866
    %v3413 = vunpack.c.h.b16 %v866
    %v3414 = vunpack.c.l.b16 %v867
    %v3415 = vunpack.c.h.b16 %v867
    %v3416 = vunpack.c.l.b16 %v868
    %v3417 = vunpack.c.h.b16 %v868
    %v3418 = vunpack.c.l.b16 %v869
    %v3419 = vunpack.c.h.b16 %v869
    %v3420 = vunpack.c.l.b16 %v870
    %v3421 = vunpack.c.h.b16 %v870
    %v3422 = vunpack.c.l.b16 %v871
    %v3423 = vunpack.c.h.b16 %v871
    %v3424 = vunpack.c.l.b16 %v872
    %v3425 = vunpack.c.h.b16 %v872
    %v3426 = vunpack.c.l.b16 %v873
    %v3427 = vunpack.c.h.b16 %v873
    %v3428 = vunpack.c.l.b16 %v874
    %v3429 = vunpack.c.h.b16 %v874
    %v3430 = vunpack.c.l.b16 %v875
    %v3431 = vunpack.c.h.b16 %v875
    %v3432 = vunpack.c.l.b16 %v876
    %v3433 = vunpack.c.h.b16 %v876
    %v3434 = vunpack.c.l.b16 %v877
    %v3435 = vunpack.c.h.b16 %v877
    %v3436 = vunpack.c.l.b16 %v878
    %v3437 = vunpack.c.h.b16 %v878
    %v3438 = vunpack.c.l.b16 %v879
    %v3439 = vunpack.c.h.b16 %v879
    %v3440 = vunpack.c.l.b16 %v880
    %v3441 = vunpack.c.h.b16 %v880
    %v3442 = vunpack.c.l.b16 %v881
    %v3443 = vunpack.c.h.b16 %v881
    %v3444 = vunpack.c.l.b16 %v882
    %v3445 = vunpack.c.h.b16 %v882
    %v3446 = vunpack.c.l.b16 %v883
    %v3447 = vunpack.c.h.b16 %v883
    %v3448 = vunpack.c.l.b16 %v884
    %v3449 = vunpack.c.h.b16 %v884
    %v3450 = vunpack.c.l.b16 %v885
    %v3451 = vunpack.c.h.b16 %v885
    %v3452 = vunpack.c.l.b16 %v886
    %v3453 = vunpack.c.h.b16 %v886
    %v3454 = vunpack.c.l.b16 %v887
    %v3455 = vunpack.c.h.b16 %v887
    %v3456 = vunpack.c.l.b16 %v888
    %v3457 = vunpack.c.h.b16 %v888
    %v3458 = vunpack.c.l.b16 %v889
    %v3459 = vunpack.c.h.b16 %v889
    %v3460 = vunpack.c.l.b16 %v890
    %v3461 = vunpack.c.h.b16 %v890
    %v3462 = vunpack.c.l.b16 %v891
    %v3463 = vunpack.c.h.b16 %v891
    %v3464 = vunpack.c.l.b16 %v892
    %v3465 = vunpack.c.h.b16 %v892
    %v3466 = vunpack.c.l.b16 %v893
    %v3467 = vunpack.c.h.b16 %v893
    %v3468 = vunpack.c.l.b16 %v894
    %v3469 = vunpack.c.h.b16 %v894
    %v3470 = vunpack.c.l.b16 %v895
    %v3471 = vunpack.c.h.b16 %v895
    %v3472 = vunpack.c.l.b16 %v896
    %v3473 = vunpack.c.h.b16 %v896
    %v3474 = vunpack.c.l.b16 %v897
    %v3475 = vunpack.c.h.b16 %v897
    %v3476 = vunpack.c.l.b16 %v898
    %v3477 = vunpack.c.h.b16 %v898
    %v3478 = vunpack.c.l.b16 %v899
    %v3479 = vunpack.c.h.b16 %v899
    %v3480 = vunpack.c.l.b16 %v900
    %v3481 = vunpack.c.h.b16 %v900
    %v3482 = vunpack.c.l.b16 %v901
    %v3483 = vunpack.c.h.b16 %v901
    %v3484 = vunpack.c.l.b16 %v902
    %v3485 = vunpack.c.h.b16 %v902
    %v3486 = vunpack.c.l.b16 %v903
    %v3487 = vunpack.c.h.b16 %v903
    %v3488 = vunpack.c.l.b16 %v904
    %v3489 = vunpack.c.h.b16 %v904
    %v3490 = vunpack.c.l.b16 %v905
    %v3491 = vunpack.c.h.b16 %v905
    %v3492 = vunpack.c.l.b16 %v906
    %v3493 = vunpack.c.h.b16 %v906
    %v3494 = vunpack.c.l.b16 %v907
    %v3495 = vunpack.c.h.b16 %v907
    %v3496 = vunpack.c.l.b16 %v908
    %v3497 = vunpack.c.h.b16 %v908
    %v3498 = vunpack.c.l.b16 %v909
    %v3499 = vunpack.c.h.b16 %v909
    %v3500 = vunpack.c.l.b16 %v910
    %v3501 = vunpack.c.h.b16 %v910
    %v3502 = vunpack.c.l.b16 %v911
    %v3503 = vunpack.c.h.b16 %v911
    %v3504 = vunpack.c.l.b16 %v912
    %v3505 = vunpack.c.h.b16 %v912
    %v3506 = vunpack.c.l.b16 %v913
    %v3507 = vunpack.c.h.b16 %v913
    %v3508 = vunpack.c.l.b16 %v914
    %v3509 = vunpack.c.h.b16 %v914
    %v3510 = vunpack.c.l.b16 %v915
    %v3511 = vunpack.c.h.b16 %v915
    %v3512 = vunpack.c.l.b16 %v916
    %v3513 = vunpack.c.h.b16 %v916
    %v3514 = vunpack.c.l.b16 %v917
    %v3515 = vunpack.c.h.b16 %v917
    %v3516 = vunpack.c.l.b16 %v918
    %v3517 = vunpack.c.h.b16 %v918
    %v3518 = vunpack.c.l.b16 %v919
    %v3519 = vunpack.c.h.b16 %v919
    %v3520 = vunpack.c.l.b16 %v920
    %v3521 = vunpack.c.h.b16 %v920
    %v3522 = vunpack.c.l.b16 %v921
    %v3523 = vunpack.c.h.b16 %v921
    %v3524 = vunpack.c.l.b16 %v922
    %v3525 = vunpack.c.h.b16 %v922
    %v3526 = vunpack.c.l.b16 %v923
    %v3527 = vunpack.c.h.b16 %v923
    %v3528 = vunpack.c.l.b16 %v924
    %v3529 = vunpack.c.h.b16 %v924
    %v3530 = vunpack.c.l.b16 %v925
    %v3531 = vunpack.c.h.b16 %v925
    %v3532 = vunpack.c.l.b16 %v926
    %v3533 = vunpack.c.h.b16 %v926
    %v3534 = vunpack.c.l.b16 %v927
    %v3535 = vunpack.c.h.b16 %v927
    %v3536 = vunpack.c.l.b16 %v928
    %v3537 = vunpack.c.h.b16 %v928
    %v3538 = vunpack.c.l.b16 %v929
    %v3539 = vunpack.c.h.b16 %v929
    %v3540 = vunpack.c.l.b16 %v930
    %v3541 = vunpack.c.h.b16 %v930
    %v3542 = vunpack.c.l.b16 %v931
    %v3543 = vunpack.c.h.b16 %v931
    %v3544 = vunpack.c.l.b16 %v932
    %v3545 = vunpack.c.h.b16 %v932
    %v3546 = vunpack.c.l.b16 %v933
    %v3547 = vunpack.c.h.b16 %v933
    %v3548 = vunpack.c.l.b16 %v934
    %v3549 = vunpack.c.h.b16 %v934
    %v3550 = vunpack.c.l.b16 %v935
    %v3551 = vunpack.c.h.b16 %v935
    %v3552 = vunpack.c.l.b16 %v936
    %v3553 = vunpack.c.h.b16 %v936
    %v3554 = vunpack.c.l.b16 %v937
    %v3555 = vunpack.c.h.b16 %v937
    %v3556 = vunpack.c.l.b16 %v938
    %v3557 = vunpack.c.h.b16 %v938
    %v3558 = vunpack.c.l.b16 %v939
    %v3559 = vunpack.c.h.b16 %v939
    %v3560 = vunpack.c.l.b16 %v940
    %v3561 = vunpack.c.h.b16 %v940
    %v3562 = vunpack.c.l.b16 %v941
    %v3563 = vunpack.c.h.b16 %v941
    %v3564 = vpack.c.b16 %v1854, %v1836
    %v3565 = vpack.c.b16 %v1855, %v1837
    %v3566 = vpack.c.b16 %v1856, %v1838
    %v3567 = vpack.c.b16 %v1857, %v1839
    %v3568 = vpack.c.b16 %v1858, %v1840
    %v3569 = vpack.c.b16 %v1859, %v1841
    %v3570 = vpack.c.b16 %v1860, %v1842
    %v3571 = vpack.c.b16 %v1861, %v1843
    %v3572 = vpack.c.b16 %v1862, %v1844
    %v3573 = vpack.c.b16 %v1863, %v1845
    %v3574 = vpack.c.b16 %v1864, %v1846
    %v3575 = vpack.c.b16 %v1865, %v1847
    %v3576 = vpack.c.b16 %v1866, %v1848
    %v3577 = vpack.c.b16 %v1867, %v1849
    %v3578 = vpack.c.b16 %v1868, %v1850
    %v3579 = vpack.c.b16 %v1869, %v1851
    %v3580 = vpack.c.b16 %v1870, %v1852
    %v3581 = vpack.c.b16 %v1871, %v1853
    %v3582 = vpack.c.b16 %v1890, %v1872
    %v3583 = vpack.c.b16 %v1891, %v1873
    %v3584 = vpack.c.b16 %v1892, %v1874
    %v3585 = vpack.c.b16 %v1893, %v1875
    %v3586 = vpack.c.b16 %v1894, %v1876
    %v3587 = vpack.c.b16 %v1895, %v1877
    %v3588 = vpack.c.b16 %v1896, %v1878
    %v3589 = vpack.c.b16 %v1897, %v1879
    %v3590 = vpack.c.b16 %v1898, %v1880
    %v3591 = vpack.c.b16 %v1899, %v1881
    %v3592 = vpack.c.b16 %v1900, %v1882
    %v3593 = vpack.c.b16 %v1901, %v1883
    %v3594 = vpack.c.b16 %v1902, %v1884
    %v3595 = vpack.c.b16 %v1903, %v1885
    %v3596 = vpack.c.b16 %v1904, %v1886
    %v3597 = vpack.c.b16 %v1905, %v1887
    %v3598 = vpack.c.b16 %v1906, %v1888
    %v3599 = vpack.c.b16 %v1907, %v1889
    %v3600 = vpack.c.b16 %v1926, %v1908
    %v3601 = vpack.c.b16 %v1927, %v1909
    %v3602 = vpack.c.b16 %v1928, %v1910
    %v3603 = vpack.c.b16 %v1929, %v1911
    %v3604 = vpack.c.b16 %v1930, %v1912
    %v3605 = vpack.c.b16 %v1931, %v1913
    %v3606 = vpack.c.b16 %v1932, %v1914
    %v3607 = vpack.c.b16 %v1933, %v1915
    %v3608 = vpack.c.b16 %v1934, %v1916
    %v3609 = vpack.c.b16 %v1935, %v1917
    %v3610 = vpack.c.b16 %v1936, %v1918
    %v3611 = vpack.c.b16 %v1937, %v1919
    %v3612 = vpack.c.b16 %v1938, %v1920
    %v3613 = vpack.c.b16 %v1939, %v1921
    %v3614 = vpack.c.b16 %v1940, %v1922
    %v3615 = vpack.c.b16 %v1941, %v1923
    %v3616 = vpack.c.b16 %v1942, %v1924
    %v3617 = vpack.c.b16 %v1943, %v1925
    %v3618 = vpack.c.b16 %v1962, %v1944
    %v3619 = vpack.c.b16 %v1963, %v1945
    %v3620 = vpack.c.b16 %v1964, %v1946
    %v3621 = vpack.c.b16 %v1965, %v1947
    %v3622 = vpack.c.b16 %v1966, %v1948
    %v3623 = vpack.c.b16 %v1967, %v1949
    %v3624 = vpack.c.b16 %v1968, %v1950
    %v3625 = vpack.c.b16 %v1969, %v1951
    %v3626 = vpack.c.b16 %v1970, %v1952
    %v3627 = vpack.c.b16 %v1971, %v1953
    %v3628 = vpack.c.b16 %v1972, %v1954
    %v3629 = vpack.c.b16 %v1973, %v1955
    %v3630 = vpack.c.b16 %v1974, %v1956
    %v3631 = vpack.c.b16 %v1975, %v1957
    %v3632 = vpack.c.b16 %v1976, %v1958
    %v3633 = vpack.c.b16 %v1977, %v1959
    %v3634 = vpack.c.b16 %v1978, %v1960
    %v3635 = vpack.c.b16 %v1979, %v1961
    %v3636 = vpack.c.b16 %v1998, %v1980
    %v3637 = vpack.c.b16 %v1999, %v1981
    %v3638 = vpack.c.b16 %v2000, %v1982
    %v3639 = vpack.c.b16 %v2001, %v1983
    %v3640 = vpack.c.b16 %v2002, %v1984
    %v3641 = vpack.c.b16 %v2003, %v1985
    %v3642 = vpack.c.b16 %v2004, %v1986
    %v3643 = vpack.c.b16 %v2005, %v1987
    %v3644 = vpack.c.b16 %v2006, %v1988
    %v3645 = vpack.c.b16 %v2007, %v1989
    %v3646 = vpack.c.b16 %v2008, %v1990
    %v3647 = vpack.c.b16 %v2009, %v1991
    %v3648 = vpack.c.b16 %v2010, %v1992
    %v3649 = vpack.c.b16 %v2011, %v1993
    %v3650 = vpack.c.b16 %v2012, %v1994
    %v3651 = vpack.c.b16 %v2013, %v1995
    %v3652 = vpack.c.b16 %v2014, %v1996
    %v3653 = vpack.c.b16 %v2015, %v1997
    %v3654 = vpack.c.b16 %v2034, %v2016
    %v3655 = vpack.c.b16 %v2035, %v2017
    %v3656 = vpack.c.b16 %v2036, %v2018
    %v3657 = vpack.c.b16 %v2037, %v2019
    %v3658 = vpack.c.b16 %v2038, %v2020
    %v3659 = vpack.c.b16 %v2039, %v2021
    %v3660 = vpack.c.b16 %v2040, %v2022
    %v3661 = vpack.c.b16 %v2041, %v2023
    %v3662 = vpack.c.b16 %v2042, %v2024
    %v3663 = vpack.c.b16 %v2043, %v2025
    %v3664 = vpack.c.b16 %v2044, %v2026
    %v3665 = vpack.c.b16 %v2045, %v2027
    %v3666 = vpack.c.b16 %v2046, %v2028
    %v3667 = vpack.c.b16 %v2047, %v2029
    %v3668 = vpack.c.b16 %v2048, %v2030
    %v3669 = vpack.c.b16 %v2049, %v2031
    %v3670 = vpack.c.b16 %v2050, %v2032
    %v3671 = vpack.c.b16 %v2051, %v2033
    %v3672 = vpack.c.b16 %v2070, %v2052
    %v3673 = vpack.c.b16 %v2071, %v2053
    %v3674 = vpack.c.b16 %v2072, %v2054
    %v3675 = vpack.c.b16 %v2073, %v2055
    %v3676 = vpack.c.b16 %v2074, %v2056
    %v3677 = vpack.c.b16 %v2075, %v2057
    %v3678 = vpack.c.b16 %v2076, %v2058
    %v3679 = vpack.c.b16 %v2077, %v2059
    %v3680 = vpack.c.b16 %v2078, %v2060
    %v3681 = vpack.c.b16 %v2079, %v2061
    %v3682 = vpack.c.b16 %v2080, %v2062
    %v3683 = vpack.c.b16 %v2081, %v2063
    %v3684 = vpack.c.b16 %v2082, %v2064
    %v3685 = vpack.c.b16 %v2083, %v2065
    %v3686 = vpack.c.b16 %v2084, %v2066
    %v3687 = vpack.c.b16 %v2085, %v2067
    %v3688 = vpack.c.b16 %v2086, %v2068
    %v3689 = vpack.c.b16 %v2087, %v2069
    %v3690 = vpack.c.b16 %v2106, %v2088
    %v3691 = vpack.c.b16 %v2107, %v2089
    %v3692 = vpack.c.b16 %v2108, %v2090
    %v3693 = vpack.c.b16 %v2109, %v2091
    %v3694 = vpack.c.b16 %v2110, %v2092
    %v3695 = vpack.c.b16 %v2111, %v2093
    %v3696 = vpack.c.b16 %v2112, %v2094
    %v3697 = vpack.c.b16 %v2113, %v2095
    %v3698 = vpack.c.b16 %v2114, %v2096
    %v3699 = vpack.c.b16 %v2115, %v2097
    %v3700 = vpack.c.b16 %v2116, %v2098
    %v3701 = vpack.c.b16 %v2117, %v2099
    %v3702 = vpack.c.b16 %v2118, %v2100
    %v3703 = vpack.c.b16 %v2119, %v2101
    %v3704 = vpack.c.b16 %v2120, %v2102
    %v3705 = vpack.c.b16 %v2121, %v2103
    %v3706 = vpack.c.b16 %v2122, %v2104
    %v3707 = vpack.c.b16 %v2123, %v2105
    %v3708 = vpack.c.b16 %v2142, %v2124
    %v3709 = vpack.c.b16 %v2143, %v2125
    %v3710 = vpack.c.b16 %v2144, %v2126
    %v3711 = vpack.c.b16 %v2145, %v2127
    %v3712 = vpack.c.b16 %v2146, %v2128
    %v3713 = vpack.c.b16 %v2147, %v2129
    %v3714 = vpack.c.b16 %v2148, %v2130
    %v3715 = vpack.c.b16 %v2149, %v2131
    %v3716 = vpack.c.b16 %v2150, %v2132
    %v3717 = vpack.c.b16 %v2151, %v2133
    %v3718 = vpack.c.b16 %v2152, %v2134
    %v3719 = vpack.c.b16 %v2153, %v2135
    %v3720 = vpack.c.b16 %v2154, %v2136
    %v3721 = vpack.c.b16 %v2155, %v2137
    %v3722 = vpack.c.b16 %v2156, %v2138
    %v3723 = vpack.c.b16 %v2157, %v2139
    %v3724 = vpack.c.b16 %v2158, %v2140
    %v3725 = vpack.c.b16 %v2159, %v2141
    %v3726 = vpack.c.b16 %v2178, %v2160
    %v3727 = vpack.c.b16 %v2179, %v2161
    %v3728 = vpack.c.b16 %v2180, %v2162
    %v3729 = vpack.c.b16 %v2181, %v2163
    %v3730 = vpack.c.b16 %v2182, %v2164
    %v3731 = vpack.c.b16 %v2183, %v2165
    %v3732 = vpack.c.b16 %v2184, %v2166
    %v3733 = vpack.c.b16 %v2185, %v2167
    %v3734 = vpack.c.b16 %v2186, %v2168
    %v3735 = vpack.c.b16 %v2187, %v2169
    %v3736 = vpack.c.b16 %v2188, %v2170
    %v3737 = vpack.c.b16 %v2189, %v2171
    %v3738 = vpack.c.b16 %v2190, %v2172
    %v3739 = vpack.c.b16 %v2191, %v2173
    %v3740 = vpack.c.b16 %v2192, %v2174
    %v3741 = vpack.c.b16 %v2193, %v2175
    %v3742 = vpack.c.b16 %v2194, %v2176
    %v3743 = vpack.c.b16 %v2195, %v2177
    %v3744 = vpack.c.b16 %v2214, %v2196
    %v3745 = vpack.c.b16 %v2215, %v2197
    %v3746 = vpack.c.b16 %v2216, %v2198
    %v3747 = vpack.c.b16 %v2217, %v2199
    %v3748 = vpack.c.b16 %v2218, %v2200
    %v3749 = vpack.c.b16 %v2219, %v2201
    %v3750 = vpack.c.b16 %v2220, %v2202
    %v3751 = vpack.c.b16 %v2221, %v2203
    %v3752 = vpack.c.b16 %v2222, %v2204
    %v3753 = vpack.c.b16 %v2223, %v2205
    %v3754 = vpack.c.b16 %v2224, %v2206
    %v3755 = vpack.c.b16 %v2225, %v2207
    %v3756 = vpack.c.b16 %v2226, %v2208
    %v3757 = vpack.c.b16 %v2227, %v2209
    %v3758 = vpack.c.b16 %v2228, %v2210
    %v3759 = vpack.c.b16 %v2229, %v2211
    %v3760 = vpack.c.b16 %v2230, %v2212
    %v3761 = vpack.c.b16 %v2231, %v2213
    %v3762 = vpack.c.b16 %v2250, %v2232
    %v3763 = vpack.c.b16 %v2251, %v2233
    %v3764 = vpack.c.b16 %v2252, %v2234
    %v3765 = vpack.c.b16 %v2253, %v2235
    %v3766 = vpack.c.b16 %v2254, %v2236
    %v3767 = vpack.c.b16 %v2255, %v2237
    %v3768 = vpack.c.b16 %v2256, %v2238
    %v3769 = vpack.c.b16 %v2257, %v2239
    %v3770 = vpack.c.b16 %v2258, %v2240
    %v3771 = vpack.c.b16 %v2259, %v2241
    %v3772 = vpack.c.b16 %v2260, %v2242
    %v3773 = vpack.c.b16 %v2261, %v2243
    %v3774 = vpack.c.b16 %v2262, %v2244
    %v3775 = vpack.c.b16 %v2263, %v2245
    %v3776 = vpack.c.b16 %v2264, %v2246
    %v3777 = vpack.c.b16 %v2265, %v2247
    %v3778 = vpack.c.b16 %v2266, %v2248
    %v3779 = vpack.c.b16 %v2267, %v2249
    %v3780 = vpack.c.b16 %v2286, %v2268
    %v3781 = vpack.c.b16 %v2287, %v2269
    %v3782 = vpack.c.b16 %v2288, %v2270
    %v3783 = vpack.c.b16 %v2289, %v2271
    %v3784 = vpack.c.b16 %v2290, %v2272
    %v3785 = vpack.c.b16 %v2291, %v2273
    %v3786 = vpack.c.b16 %v2292, %v2274
    %v3787 = vpack.c.b16 %v2293, %v2275
    %v3788 = vpack.c.b16 %v2294, %v2276
    %v3789 = vpack.c.b16 %v2295, %v2277
    %v3790 = vpack.c.b16 %v2296, %v2278
    %v3791 = vpack.c.b16 %v2297, %v2279
    %v3792 = vpack.c.b16 %v2298, %v2280
    %v3793 = vpack.c.b16 %v2299, %v2281
    %v3794 = vpack.c.b16 %v2300, %v2282
    %v3795 = vpack.c.b16 %v2301, %v2283
    %v3796 = vpack.c.b16 %v2302, %v2284
    %v3797 = vpack.c.b16 %v2303, %v2285
    %v3798 = vpack.c.b16 %v2322, %v2304
    %v3799 = vpack.c.b16 %v2323, %v2305
    %v3800 = vpack.c.b16 %v2324, %v2306
    %v3801 = vpack.c.b16 %v2325, %v2307
    %v3802 = vpack.c.b16 %v2326, %v2308
    %v3803 = vpack.c.b16 %v2327, %v2309
    %v3804 = vpack.c.b16 %v2328, %v2310
    %v3805 = vpack.c.b16 %v2329, %v2311
    %v3806 = vpack.c.b16 %v2330, %v2312
    %v3807 = vpack.c.b16 %v2331, %v2313
    %v3808 = vpack.c.b16 %v2332, %v2314
    %v3809 = vpack.c.b16 %v2333, %v2315
    %v3810 = vpack.c.b16 %v2334, %v2316
    %v3811 = vpack.c.b16 %v2335, %v2317
    %v3812 = vpack.c.b16 %v2336, %v2318
    %v3813 = vpack.c.b16 %v2337, %v2319
    %v3814 = vpack.c.b16 %v2338, %v2320
    %v3815 = vpack.c.b16 %v2339, %v2321
    %v3816 = vpack.c.b16 %v2358, %v2340
    %v3817 = vpack.c.b16 %v2359, %v2341
    %v3818 = vpack.c.b16 %v2360, %v2342
    %v3819 = vpack.c.b16 %v2361, %v2343
    %v3820 = vpack.c.b16 %v2362, %v2344
    %v3821 = vpack.c.b16 %v2363, %v2345
    %v3822 = vpack.c.b16 %v2364, %v2346
    %v3823 = vpack.c.b16 %v2365, %v2347
    %v3824 = vpack.c.b16 %v2366, %v2348
    %v3825 = vpack.c.b16 %v2367, %v2349
    %v3826 = vpack.c.b16 %v2368, %v2350
    %v3827 = vpack.c.b16 %v2369, %v2351
    %v3828 = vpack.c.b16 %v2370, %v2352
    %v3829 = vpack.c.b16 %v2371, %v2353
    %v3830 = vpack.c.b16 %v2372, %v2354
    %v3831 = vpack.c.b16 %v2373, %v2355
    %v3832 = vpack.c.b16 %v2374, %v2356
    %v3833 = vpack.c.b16 %v2375, %v2357
    %v3834 = vpack.c.b16 %v2394, %v2376
    %v3835 = vpack.c.b16 %v2395, %v2377
    %v3836 = vpack.c.b16 %v2396, %v2378
    %v3837 = vpack.c.b16 %v2397, %v2379
    %v3838 = vpack.c.b16 %v2398, %v2380
    %v3839 = vpack.c.b16 %v2399, %v2381
    %v3840 = vpack.c.b16 %v2400, %v2382
    %v3841 = vpack.c.b16 %v2401, %v2383
    %v3842 = vpack.c.b16 %v2402, %v2384
    %v3843 = vpack.c.b16 %v2403, %v2385
    %v3844 = vpack.c.b16 %v2404, %v2386
    %v3845 = vpack.c.b16 %v2405, %v2387
    %v3846 = vpack.c.b16 %v2406, %v2388
    %v3847 = vpack.c.b16 %v2407, %v2389
    %v3848 = vpack.c.b16 %v2408, %v2390
    %v3849 = vpack.c.b16 %v2409, %v2391
    %v3850 = vpack.c.b16 %v2410, %v2392
    %v3851 = vpack.c.b16 %v2411, %v2393
    %v3852 = vpack.c.b16 %v2430, %v2412
    %v3853 = vpack.c.b16 %v2431, %v2413
    %v3854 = vpack.c.b16 %v2432, %v2414
    %v3855 = vpack.c.b16 %v2433, %v2415
    %v3856 = vpack.c.b16 %v2434, %v2416
    %v3857 = vpack.c.b16 %v2435, %v2417
    %v3858 = vpack.c.b16 %v2436, %v2418
    %v3859 = vpack.c.b16 %v2437, %v2419
    %v3860 = vpack.c.b16 %v2438, %v2420
    %v3861 = vpack.c.b16 %v2439, %v2421
    %v3862 = vpack.c.b16 %v2440, %v2422
    %v3863 = vpack.c.b16 %v2441, %v2423
    %v3864 = vpack.c.b16 %v2442, %v2424
    %v3865 = vpack.c.b16 %v2443, %v2425
    %v3866 = vpack.c.b16 %v2444, %v2426
    %v3867 = vpack.c.b16 %v2445, %v2427
    %v3868 = vpack.c.b16 %v2446, %v2428
    %v3869 = vpack.c.b16 %v2447, %v2429
    %v3870 = vpack.c.b16 %v2466, %v2448
    %v3871 = vpack.c.b16 %v2467, %v2449
    %v3872 = vpack.c.b16 %v2468, %v2450
    %v3873 = vpack.c.b16 %v2469, %v2451
    %v3874 = vpack.c.b16 %v2470, %v2452
    %v3875 = vpack.c.b16 %v2471, %v2453
    %v3876 = vpack.c.b16 %v2472, %v2454
    %v3877 = vpack.c.b16 %v2473, %v2455
    %v3878 = vpack.c.b16 %v2474, %v2456
    %v3879 = vpack.c.b16 %v2475, %v2457
    %v3880 = vpack.c.b16 %v2476, %v2458
    %v3881 = vpack.c.b16 %v2477, %v2459
    %v3882 = vpack.c.b16 %v2478, %v2460
    %v3883 = vpack.c.b16 %v2479, %v2461
    %v3884 = vpack.c.b16 %v2480, %v2462
    %v3885 = vpack.c.b16 %v2481, %v2463
    %v3886 = vpack.c.b16 %v2482, %v2464
    %v3887 = vpack.c.b16 %v2483, %v2465
    %v3888 = vpack.c.b16 %v2502, %v2484
    %v3889 = vpack.c.b16 %v2503, %v2485
    %v3890 = vpack.c.b16 %v2504, %v2486
    %v3891 = vpack.c.b16 %v2505, %v2487
    %v3892 = vpack.c.b16 %v2506, %v2488
    %v3893 = vpack.c.b16 %v2507, %v2489
    %v3894 = vpack.c.b16 %v2508, %v2490
    %v3895 = vpack.c.b16 %v2509, %v2491
    %v3896 = vpack.c.b16 %v2510, %v2492
    %v3897 = vpack.c.b16 %v2511, %v2493
    %v3898 = vpack.c.b16 %v2512, %v2494
    %v3899 = vpack.c.b16 %v2513, %v2495
    %v3900 = vpack.c.b16 %v2514, %v2496
    %v3901 = vpack.c.b16 %v2515, %v2497
    %v3902 = vpack.c.b16 %v2516, %v2498
    %v3903 = vpack.c.b16 %v2517, %v2499
    %v3904 = vpack.c.b16 %v2518, %v2500
    %v3905 = vpack.c.b16 %v2519, %v2501
    %v3906 = vpack.c.b16 %v2538, %v2520
    %v3907 = vpack.c.b16 %v2539, %v2521
    %v3908 = vpack.c.b16 %v2540, %v2522
    %v3909 = vpack.c.b16 %v2541, %v2523
    %v3910 = vpack.c.b16 %v2542, %v2524
    %v3911 = vpack.c.b16 %v2543, %v2525
    %v3912 = vpack.c.b16 %v2544, %v2526
    %v3913 = vpack.c.b16 %v2545, %v2527
    %v3914 = vpack.c.b16 %v2546, %v2528
    %v3915 = vpack.c.b16 %v2547, %v2529
    %v3916 = vpack.c.b16 %v2548, %v2530
    %v3917 = vpack.c.b16 %v2549, %v2531
    %v3918 = vpack.c.b16 %v2550, %v2532
    %v3919 = vpack.c.b16 %v2551, %v2533
    %v3920 = vpack.c.b16 %v2552, %v2534
    %v3921 = vpack.c.b16 %v2553, %v2535
    %v3922 = vpack.c.b16 %v2554, %v2536
    %v3923 = vpack.c.b16 %v2555, %v2537
    %v3924 = vpack.c.b16 %v2574, %v2556
    %v3925 = vpack.c.b16 %v2575, %v2557
    %v3926 = vpack.c.b16 %v2576, %v2558
    %v3927 = vpack.c.b16 %v2577, %v2559
    %v3928 = vpack.c.b16 %v2578, %v2560
    %v3929 = vpack.c.b16 %v2579, %v2561
    %v3930 = vpack.c.b16 %v2580, %v2562
    %v3931 = vpack.c.b16 %v2581, %v2563
    %v3932 = vpack.c.b16 %v2582, %v2564
    %v3933 = vpack.c.b16 %v2583, %v2565
    %v3934 = vpack.c.b16 %v2584, %v2566
    %v3935 = vpack.c.b16 %v2585, %v2567
    %v3936 = vpack.c.b16 %v2586, %v2568
    %v3937 = vpack.c.b16 %v2587, %v2569
    %v3938 = vpack.c.b16 %v2588, %v2570
    %v3939 = vpack.c.b16 %v2589, %v2571
    %v3940 = vpack.c.b16 %v2590, %v2572
    %v3941 = vpack.c.b16 %v2591, %v2573
    %v3942 = vpack.c.b16 %v2610, %v2592
    %v3943 = vpack.c.b16 %v2611, %v2593
    %v3944 = vpack.c.b16 %v2612, %v2594
    %v3945 = vpack.c.b16 %v2613, %v2595
    %v3946 = vpack.c.b16 %v2614, %v2596
    %v3947 = vpack.c.b16 %v2615, %v2597
    %v3948 = vpack.c.b16 %v2616, %v2598
    %v3949 = vpack.c.b16 %v2617, %v2599
    %v3950 = vpack.c.b16 %v2618, %v2600
    %v3951 = vpack.c.b16 %v2619, %v2601
    %v3952 = vpack.c.b16 %v2620, %v2602
    %v3953 = vpack.c.b16 %v2621, %v2603
    %v3954 = vpack.c.b16 %v2622, %v2604
    %v3955 = vpack.c.b16 %v2623, %v2605
    %v3956 = vpack.c.b16 %v2624, %v2606
    %v3957 = vpack.c.b16 %v2625, %v2607
    %v3958 = vpack.c.b16 %v2626, %v2608
    %v3959 = vpack.c.b16 %v2627, %v2609
    %v3960 = vpack.c.b16 %v2646, %v2628
    %v3961 = vpack.c.b16 %v2647, %v2629
    %v3962 = vpack.c.b16 %v2648, %v2630
    %v3963 = vpack.c.b16 %v2649, %v2631
    %v3964 = vpack.c.b16 %v2650, %v2632
    %v3965 = vpack.c.b16 %v2651, %v2633
    %v3966 = vpack.c.b16 %v2652, %v2634
    %v3967 = vpack.c.b16 %v2653, %v2635
    %v3968 = vpack.c.b16 %v2654, %v2636
    %v3969 = vpack.c.b16 %v2655, %v2637
    %v3970 = vpack.c.b16 %v2656, %v2638
    %v3971 = vpack.c.b16 %v2657, %v2639
    %v3972 = vpack.c.b16 %v2658, %v2640
    %v3973 = vpack.c.b16 %v2659, %v2641
    %v3974 = vpack.c.b16 %v2660, %v2642
    %v3975 = vpack.c.b16 %v2661, %v2643
    %v3976 = vpack.c.b16 %v2662, %v2644
    %v3977 = vpack.c.b16 %v2663, %v2645
    %v3978 = vpack.c.b16 %v2682, %v2664
    %v3979 = vpack.c.b16 %v2683, %v2665
    %v3980 = vpack.c.b16 %v2684, %v2666
    %v3981 = vpack.c.b16 %v2685, %v2667
    %v3982 = vpack.c.b16 %v2686, %v2668
    %v3983 = vpack.c.b16 %v2687, %v2669
    %v3984 = vpack.c.b16 %v2688, %v2670
    %v3985 = vpack.c.b16 %v2689, %v2671
    %v3986 = vpack.c.b16 %v2690, %v2672
    %v3987 = vpack.c.b16 %v2691, %v2673
    %v3988 = vpack.c.b16 %v2692, %v2674
    %v3989 = vpack.c.b16 %v2693, %v2675
    %v3990 = vpack.c.b16 %v2694, %v2676
    %v3991 = vpack.c.b16 %v2695, %v2677
    %v3992 = vpack.c.b16 %v2696, %v2678
    %v3993 = vpack.c.b16 %v2697, %v2679
    %v3994 = vpack.c.b16 %v2698, %v2680
    %v3995 = vpack.c.b16 %v2699, %v2681
    %v3996 = vpack.c.b16 %v2718, %v2700
    %v3997 = vpack.c.b16 %v2719, %v2701
    %v3998 = vpack.c.b16 %v2720, %v2702
    %v3999 = vpack.c.b16 %v2721, %v2703
    %v4000 = vpack.c.b16 %v2722, %v2704
    %v4001 = vpack.c.b16 %v2723, %v2705
    %v4002 = vpack.c.b16 %v2724, %v2706
    %v4003 = vpack.c.b16 %v2725, %v2707
    %v4004 = vpack.c.b16 %v2726, %v2708
    %v4005 = vpack.c.b16 %v2727, %v2709
    %v4006 = vpack.c.b16 %v2728, %v2710
    %v4007 = vpack.c.b16 %v2729, %v2711
    %v4008 = vpack.c.b16 %v2730, %v2712
    %v4009 = vpack.c.b16 %v2731, %v2713
    %v4010 = vpack.c.b16 %v2732, %v2714
    %v4011 = vpack.c.b16 %v2733, %v2715
    %v4012 = vpack.c.b16 %v2734, %v2716
    %v4013 = vpack.c.b16 %v2735, %v2717
    %v4014 = vpack.c.b16 %v2754, %v2736
    %v4015 = vpack.c.b16 %v2755, %v2737
    %v4016 = vpack.c.b16 %v2756, %v2738
    %v4017 = vpack.c.b16 %v2757, %v2739
    %v4018 = vpack.c.b16 %v2758, %v2740
    %v4019 = vpack.c.b16 %v2759, %v2741
    %v4020 = vpack.c.b16 %v2760, %v2742
    %v4021 = vpack.c.b16 %v2761, %v2743
    %v4022 = vpack.c.b16 %v2762, %v2744
    %v4023 = vpack.c.b16 %v2763, %v2745
    %v4024 = vpack.c.b16 %v2764, %v2746
    %v4025 = vpack.c.b16 %v2765, %v2747
    %v4026 = vpack.c.b16 %v2766, %v2748
    %v4027 = vpack.c.b16 %v2767, %v2749
    %v4028 = vpack.c.b16 %v2768, %v2750
    %v4029 = vpack.c.b16 %v2769, %v2751
    %v4030 = vpack.c.b16 %v2770, %v2752
    %v4031 = vpack.c.b16 %v2771, %v2753
    %v4032 = vpack.c.b16 %v2790, %v2772
    %v4033 = vpack.c.b16 %v2791, %v2773
    %v4034 = vpack.c.b16 %v2792, %v2774
    %v4035 = vpack.c.b16 %v2793, %v2775
    %v4036 = vpack.c.b16 %v2794, %v2776
    %v4037 = vpack.c.b16 %v2795, %v2777
    %v4038 = vpack.c.b16 %v2796, %v2778
    %v4039 = vpack.c.b16 %v2797, %v2779
    %v4040 = vpack.c.b16 %v2798, %v2780
    %v4041 = vpack.c.b16 %v2799, %v2781
    %v4042 = vpack.c.b16 %v2800, %v2782
    %v4043 = vpack.c.b16 %v2801, %v2783
    %v4044 = vpack.c.b16 %v2802, %v2784
    %v4045 = vpack.c.b16 %v2803, %v2785
    %v4046 = vpack.c.b16 %v2804, %v2786
    %v4047 = vpack.c.b16 %v2805, %v2787
    %v4048 = vpack.c.b16 %v2806, %v2788
    %v4049 = vpack.c.b16 %v2807, %v2789
    %v4050 = vpack.c.b16 %v2826, %v2808
    %v4051 = vpack.c.b16 %v2827, %v2809
    %v4052 = vpack.c.b16 %v2828, %v2810
    %v4053 = vpack.c.b16 %v2829, %v2811
    %v4054 = vpack.c.b16 %v2830, %v2812
    %v4055 = vpack.c.b16 %v2831, %v2813
    %v4056 = vpack.c.b16 %v2832, %v2814
    %v4057 = vpack.c.b16 %v2833, %v2815
    %v4058 = vpack.c.b16 %v2834, %v2816
    %v4059 = vpack.c.b16 %v2835, %v2817
    %v4060 = vpack.c.b16 %v2836, %v2818
    %v4061 = vpack.c.b16 %v2837, %v2819
    %v4062 = vpack.c.b16 %v2838, %v2820
    %v4063 = vpack.c.b16 %v2839, %v2821
    %v4064 = vpack.c.b16 %v2840, %v2822
    %v4065 = vpack.c.b16 %v2841, %v2823
    %v4066 = vpack.c.b16 %v2842, %v2824
    %v4067 = vpack.c.b16 %v2843, %v2825
    %v4068 = vpack.c.b16 %v2862, %v2844
    %v4069 = vpack.c.b16 %v2863, %v2845
    %v4070 = vpack.c.b16 %v2864, %v2846
    %v4071 = vpack.c.b16 %v2865, %v2847
    %v4072 = vpack.c.b16 %v2866, %v2848
    %v4073 = vpack.c.b16 %v2867, %v2849
    %v4074 = vpack.c.b16 %v2868, %v2850
    %v4075 = vpack.c.b16 %v2869, %v2851
    %v4076 = vpack.c.b16 %v2870, %v2852
    %v4077 = vpack.c.b16 %v2871, %v2853
    %v4078 = vpack.c.b16 %v2872, %v2854
    %v4079 = vpack.c.b16 %v2873, %v2855
    %v4080 = vpack.c.b16 %v2874, %v2856
    %v4081 = vpack.c.b16 %v2875, %v2857
    %v4082 = vpack.c.b16 %v2876, %v2858
    %v4083 = vpack.c.b16 %v2877, %v2859
    %v4084 = vpack.c.b16 %v2878, %v2860
    %v4085 = vpack.c.b16 %v2879, %v2861
    %v4086 = vpack.c.b16 %v2898, %v2880
    %v4087 = vpack.c.b16 %v2899, %v2881
    %v4088 = vpack.c.b16 %v2900, %v2882
    %v4089 = vpack.c.b16 %v2901, %v2883
    %v4090 = vpack.c.b16 %v2902, %v2884
    %v4091 = vpack.c.b16 %v2903, %v2885
    %v4092 = vpack.c.b16 %v2904, %v2886
    %v4093 = vpack.c.b16 %v2905, %v2887
    %v4094 = vpack.c.b16 %v2906, %v2888
    %v4095 = vpack.c.b16 %v2907, %v2889
    %v4096 = vpack.c.b16 %v2908, %v2890
    %v4097 = vpack.c.b16 %v2909, %v2891
    %v4098 = vpack.c.b16 %v2910, %v2892
    %v4099 = vpack.c.b16 %v2911, %v2893
    %v4100 = vpack.c.b16 %v2912, %v2894
    %v4101 = vpack.c.b16 %v2913, %v2895
    %v4102 = vpack.c.b16 %v2914, %v2896
    %v4103 = vpack.c.b16 %v2915, %v2897
    %v4104 = vpack.c.b16 %v2934, %v2916
    %v4105 = vpack.c.b16 %v2935, %v2917
    %v4106 = vpack.c.b16 %v2936, %v2918
    %v4107 = vpack.c.b16 %v2937, %v2919
    %v4108 = vpack.c.b16 %v2938, %v2920
    %v4109 = vpack.c.b16 %v2939, %v2921
    %v4110 = vpack.c.b16 %v2940, %v2922
    %v4111 = vpack.c.b16 %v2941, %v2923
    %v4112 = vpack.c.b16 %v2942, %v2924
    %v4113 = vpack.c.b16 %v2943, %v2925
    %v4114 = vpack.c.b16 %v2944, %v2926
    %v4115 = vpack.c.b16 %v2945, %v2927
    %v4116 = vpack.c.b16 %v2946, %v2928
    %v4117 = vpack.c.b16 %v2947, %v2929
    %v4118 = vpack.c.b16 %v2948, %v2930
    %v4119 = vpack.c.b16 %v2949, %v2931
    %v4120 = vpack.c.b16 %v2950, %v2932
    %v4121 = vpack.c.b16 %v2951, %v2933
    %v4122 = vpack.c.b16 %v2970, %v2952
    %v4123 = vpack.c.b16 %v2971, %v2953
    %v4124 = vpack.c.b16 %v2972, %v2954
    %v4125 = vpack.c.b16 %v2973, %v2955
    %v4126 = vpack.c.b16 %v2974, %v2956
    %v4127 = vpack.c.b16 %v2975, %v2957
    %v4128 = vpack.c.b16 %v2976, %v2958
    %v4129 = vpack.c.b16 %v2977, %v2959
    %v4130 = vpack.c.b16 %v2978, %v2960
    %v4131 = vpack.c.b16 %v2979, %v2961
    %v4132 = vpack.c.b16 %v2980, %v2962
    %v4133 = vpack.c.b16 %v2981, %v2963
    %v4134 = vpack.c.b16 %v2982, %v2964
    %v4135 = vpack.c.b16 %v2983, %v2965
    %v4136 = vpack.c.b16 %v2984, %v2966
    %v4137 = vpack.c.b16 %v2985, %v2967
    %v4138 = vpack.c.b16 %v2986, %v2968
    %v4139 = vpack.c.b16 %v2987, %v2969
    %v4140 = vpack.c.b16 %v3006, %v2988
    %v4141 = vpack.c.b16 %v3007, %v2989
    %v4142 = vpack.c.b16 %v3008, %v2990
    %v4143 = vpack.c.b16 %v3009, %v2991
    %v4144 = vpack.c.b16 %v3010, %v2992
    %v4145 = vpack.c.b16 %v3011, %v2993
    %v4146 = vpack.c.b16 %v3012, %v2994
    %v4147 = vpack.c.b16 %v3013, %v2995
    %v4148 = vpack.c.b16 %v3014, %v2996
    %v4149 = vpack.c.b16 %v3015, %v2997
    %v4150 = vpack.c.b16 %v3016, %v2998
    %v4151 = vpack.c.b16 %v3017, %v2999
    %v4152 = vpack.c.b16 %v3018, %v3000
    %v4153 = vpack.c.b16 %v3019, %v3001
    %v4154 = vpack.c.b16 %v3020, %v3002
    %v4155 = vpack.c.b16 %v3021, %v3003
    %v4156 = vpack.c.b16 %v3022, %v3004
    %v4157 = vpack.c.b16 %v3023, %v3005
    %v4158 = vpack.c.b16 %v3042, %v3024
    %v4159 = vpack.c.b16 %v3043, %v3025
    %v4160 = vpack.c.b16 %v3044, %v3026
    %v4161 = vpack.c.b16 %v3045, %v3027
    %v4162 = vpack.c.b16 %v3046, %v3028
    %v4163 = vpack.c.b16 %v3047, %v3029
    %v4164 = vpack.c.b16 %v3048, %v3030
    %v4165 = vpack.c.b16 %v3049, %v3031
    %v4166 = vpack.c.b16 %v3050, %v3032
    %v4167 = vpack.c.b16 %v3051, %v3033
    %v4168 = vpack.c.b16 %v3052, %v3034
    %v4169 = vpack.c.b16 %v3053, %v3035
    %v4170 = vpack.c.b16 %v3054, %v3036
    %v4171 = vpack.c.b16 %v3055, %v3037
    %v4172 = vpack.c.b16 %v3056, %v3038
    %v4173 = vpack.c.b16 %v3057, %v3039
    %v4174 = vpack.c.b16 %v3058, %v3040
    %v4175 = vpack.c.b16 %v3059, %v3041
    %v4176 = vpack.c.b16 %v3078, %v3060
    %v4177 = vpack.c.b16 %v3079, %v3061
    %v4178 = vpack.c.b16 %v3080, %v3062
    %v4179 = vpack.c.b16 %v3081, %v3063
    %v4180 = vpack.c.b16 %v3082, %v3064
    %v4181 = vpack.c.b16 %v3083, %v3065
    %v4182 = vpack.c.b16 %v3084, %v3066
    %v4183 = vpack.c.b16 %v3085, %v3067
    %v4184 = vpack.c.b16 %v3086, %v3068
    %v4185 = vpack.c.b16 %v3087, %v3069
    %v4186 = vpack.c.b16 %v3088, %v3070
    %v4187 = vpack.c.b16 %v3089, %v3071
    %v4188 = vpack.c.b16 %v3090, %v3072
    %v4189 = vpack.c.b16 %v3091, %v3073
    %v4190 = vpack.c.b16 %v3092, %v3074
    %v4191 = vpack.c.b16 %v3093, %v3075
    %v4192 = vpack.c.b16 %v3094, %v3076
    %v4193 = vpack.c.b16 %v3095, %v3077
    %v4194 = vpack.c.b16 %v3114, %v3096
    %v4195 = vpack.c.b16 %v3115, %v3097
    %v4196 = vpack.c.b16 %v3116, %v3098
    %v4197 = vpack.c.b16 %v3117, %v3099
    %v4198 = vpack.c.b16 %v3118, %v3100
    %v4199 = vpack.c.b16 %v3119, %v3101
    %v4200 = vpack.c.b16 %v3120, %v3102
    %v4201 = vpack.c.b16 %v3121, %v3103
    %v4202 = vpack.c.b16 %v3122, %v3104
    %v4203 = vpack.c.b16 %v3123, %v3105
    %v4204 = vpack.c.b16 %v3124, %v3106
    %v4205 = vpack.c.b16 %v3125, %v3107
    %v4206 = vpack.c.b16 %v3126, %v3108
    %v4207 = vpack.c.b16 %v3127, %v3109
    %v4208 = vpack.c.b16 %v3128, %v3110
    %v4209 = vpack.c.b16 %v3129, %v3111
    %v4210 = vpack.c.b16 %v3130, %v3112
    %v4211 = vpack.c.b16 %v3131, %v3113
    %v4212 = vpack.c.b16 %v3150, %v3132
    %v4213 = vpack.c.b16 %v3151, %v3133
    %v4214 = vpack.c.b16 %v3152, %v3134
    %v4215 = vpack.c.b16 %v3153, %v3135
    %v4216 = vpack.c.b16 %v3154, %v3136
    %v4217 = vpack.c.b16 %v3155, %v3137
    %v4218 = vpack.c.b16 %v3156, %v3138
    %v4219 = vpack.c.b16 %v3157, %v3139
    %v4220 = vpack.c.b16 %v3158, %v3140
    %v4221 = vpack.c.b16 %v3159, %v3141
    %v4222 = vpack.c.b16 %v3160, %v3142
    %v4223 = vpack.c.b16 %v3161, %v3143
    %v4224 = vpack.c.b16 %v3162, %v3144
    %v4225 = vpack.c.b16 %v3163, %v3145
    %v4226 = vpack.c.b16 %v3164, %v3146
    %v4227 = vpack.c.b16 %v3165, %v3147
    %v4228 = vpack.c.b16 %v3166, %v3148
    %v4229 = vpack.c.b16 %v3167, %v3149
    %v4230 = vpack.c.b16 %v3186, %v3168
    %v4231 = vpack.c.b16 %v3187, %v3169
    %v4232 = vpack.c.b16 %v3188, %v3170
    %v4233 = vpack.c.b16 %v3189, %v3171
    %v4234 = vpack.c.b16 %v3190, %v3172
    %v4235 = vpack.c.b16 %v3191, %v3173
    %v4236 = vpack.c.b16 %v3192, %v3174
    %v4237 = vpack.c.b16 %v3193, %v3175
    %v4238 = vpack.c.b16 %v3194, %v3176
    %v4239 = vpack.c.b16 %v3195, %v3177
    %v4240 = vpack.c.b16 %v3196, %v3178
    %v4241 = vpack.c.b16 %v3197, %v3179
    %v4242 = vpack.c.b16 %v3198, %v3180
    %v4243 = vpack.c.b16 %v3199, %v3181
    %v4244 = vpack.c.b16 %v3200, %v3182
    %v4245 = vpack.c.b16 %v3201, %v3183
    %v4246 = vpack.c.b16 %v3202, %v3184
    %v4247 = vpack.c.b16 %v3203, %v3185
    %v4248 = vpack.c.b16 %v3222, %v3204
    %v4249 = vpack.c.b16 %v3223, %v3205
    %v4250 = vpack.c.b16 %v3224, %v3206
    %v4251 = vpack.c.b16 %v3225, %v3207
    %v4252 = vpack.c.b16 %v3226, %v3208
    %v4253 = vpack.c.b16 %v3227, %v3209
    %v4254 = vpack.c.b16 %v3228, %v3210
    %v4255 = vpack.c.b16 %v3229, %v3211
    %v4256 = vpack.c.b16 %v3230, %v3212
    %v4257 = vpack.c.b16 %v3231, %v3213
    %v4258 = vpack.c.b16 %v3232, %v3214
    %v4259 = vpack.c.b16 %v3233, %v3215
    %v4260 = vpack.c.b16 %v3234, %v3216
    %v4261 = vpack.c.b16 %v3235, %v3217
    %v4262 = vpack.c.b16 %v3236, %v3218
    %v4263 = vpack.c.b16 %v3237, %v3219
    %v4264 = vpack.c.b16 %v3238, %v3220
    %v4265 = vpack.c.b16 %v3239, %v3221
    %v4266 = vpack.c.b16 %v3258, %v3240
    %v4267 = vpack.c.b16 %v3259, %v3241
    %v4268 = vpack.c.b16 %v3260, %v3242
    %v4269 = vpack.c.b16 %v3261, %v3243
    %v4270 = vpack.c.b16 %v3262, %v3244
    %v4271 = vpack.c.b16 %v3263, %v3245
    %v4272 = vpack.c.b16 %v3264, %v3246
    %v4273 = vpack.c.b16 %v3265, %v3247
    %v4274 = vpack.c.b16 %v3266, %v3248
    %v4275 = vpack.c.b16 %v3267, %v3249
    %v4276 = vpack.c.b16 %v3268, %v3250
    %v4277 = vpack.c.b16 %v3269, %v3251
    %v4278 = vpack.c.b16 %v3270, %v3252
    %v4279 = vpack.c.b16 %v3271, %v3253
    %v4280 = vpack.c.b16 %v3272, %v3254
    %v4281 = vpack.c.b16 %v3273, %v3255
    %v4282 = vpack.c.b16 %v3274, %v3256
    %v4283 = vpack.c.b16 %v3275, %v3257
    %v4284 = vpack.c.b16 %v3294, %v3276
    %v4285 = vpack.c.b16 %v3295, %v3277
    %v4286 = vpack.c.b16 %v3296, %v3278
    %v4287 = vpack.c.b16 %v3297, %v3279
    %v4288 = vpack.c.b16 %v3298, %v3280
    %v4289 = vpack.c.b16 %v3299, %v3281
    %v4290 = vpack.c.b16 %v3300, %v3282
    %v4291 = vpack.c.b16 %v3301, %v3283
    %v4292 = vpack.c.b16 %v3302, %v3284
    %v4293 = vpack.c.b16 %v3303, %v3285
    %v4294 = vpack.c.b16 %v3304, %v3286
    %v4295 = vpack.c.b16 %v3305, %v3287
    %v4296 = vpack.c.b16 %v3306, %v3288
    %v4297 = vpack.c.b16 %v3307, %v3289
    %v4298 = vpack.c.b16 %v3308, %v3290
    %v4299 = vpack.c.b16 %v3309, %v3291
    %v4300 = vpack.c.b16 %v3310, %v3292
    %v4301 = vpack.c.b16 %v3311, %v3293
    %v4302 = vpack.c.b16 %v3330, %v3312
    %v4303 = vpack.c.b16 %v3331, %v3313
    %v4304 = vpack.c.b16 %v3332, %v3314
    %v4305 = vpack.c.b16 %v3333, %v3315
    %v4306 = vpack.c.b16 %v3334, %v3316
    %v4307 = vpack.c.b16 %v3335, %v3317
    %v4308 = vpack.c.b16 %v3336, %v3318
    %v4309 = vpack.c.b16 %v3337, %v3319
    %v4310 = vpack.c.b16 %v3338, %v3320
    %v4311 = vpack.c.b16 %v3339, %v3321
    %v4312 = vpack.c.b16 %v3340, %v3322
    %v4313 = vpack.c.b16 %v3341, %v3323
    %v4314 = vpack.c.b16 %v3342, %v3324
    %v4315 = vpack.c.b16 %v3343, %v3325
    %v4316 = vpack.c.b16 %v3344, %v3326
    %v4317 = vpack.c.b16 %v3345, %v3327
    %v4318 = vpack.c.b16 %v3346, %v3328
    %v4319 = vpack.c.b16 %v3347, %v3329
    %v4320 = vpack.c.b16 %v3366, %v3348
    %v4321 = vpack.c.b16 %v3367, %v3349
    %v4322 = vpack.c.b16 %v3368, %v3350
    %v4323 = vpack.c.b16 %v3369, %v3351
    %v4324 = vpack.c.b16 %v3370, %v3352
    %v4325 = vpack.c.b16 %v3371, %v3353
    %v4326 = vpack.c.b16 %v3372, %v3354
    %v4327 = vpack.c.b16 %v3373, %v3355
    %v4328 = vpack.c.b16 %v3374, %v3356
    %v4329 = vpack.c.b16 %v3375, %v3357
    %v4330 = vpack.c.b16 %v3376, %v3358
    %v4331 = vpack.c.b16 %v3377, %v3359
    %v4332 = vpack.c.b16 %v3378, %v3360
    %v4333 = vpack.c.b16 %v3379, %v3361
    %v4334 = vpack.c.b16 %v3380, %v3362
    %v4335 = vpack.c.b16 %v3381, %v3363
    %v4336 = vpack.c.b16 %v3382, %v3364
    %v4337 = vpack.c.b16 %v3383, %v3365
    %v4338 = vpack.c.b16 %v3402, %v3384
    %v4339 = vpack.c.b16 %v3403, %v3385
    %v4340 = vpack.c.b16 %v3404, %v3386
    %v4341 = vpack.c.b16 %v3405, %v3387
    %v4342 = vpack.c.b16 %v3406, %v3388
    %v4343 = vpack.c.b16 %v3407, %v3389
    %v4344 = vpack.c.b16 %v3408, %v3390
    %v4345 = vpack.c.b16 %v3409, %v3391
    %v4346 = vpack.c.b16 %v3410, %v3392
    %v4347 = vpack.c.b16 %v3411, %v3393
    %v4348 = vpack.c.b16 %v3412, %v3394
    %v4349 = vpack.c.b16 %v3413, %v3395
    %v4350 = vpack.c.b16 %v3414, %v3396
    %v4351 = vpack.c.b16 %v3415, %v3397
    %v4352 = vpack.c.b16 %v3416, %v3398
    %v4353 = vpack.c.b16 %v3417, %v3399
    %v4354 = vpack.c.b16 %v3418, %v3400
    %v4355 = vpack.c.b16 %v3419, %v3401
    %v4356 = vpack.c.b16 %v3438, %v3420
    %v4357 = vpack.c.b16 %v3439, %v3421
    %v4358 = vpack.c.b16 %v3440, %v3422
    %v4359 = vpack.c.b16 %v3441, %v3423
    %v4360 = vpack.c.b16 %v3442, %v3424
    %v4361 = vpack.c.b16 %v3443, %v3425
    %v4362 = vpack.c.b16 %v3444, %v3426
    %v4363 = vpack.c.b16 %v3445, %v3427
    %v4364 = vpack.c.b16 %v3446, %v3428
    %v4365 = vpack.c.b16 %v3447, %v3429
    %v4366 = vpack.c.b16 %v3448, %v3430
    %v4367 = vpack.c.b16 %v3449, %v3431
    %v4368 = vpack.c.b16 %v3450, %v3432
    %v4369 = vpack.c.b16 %v3451, %v3433
    %v4370 = vpack.c.b16 %v3452, %v3434
    %v4371 = vpack.c.b16 %v3453, %v3435
    %v4372 = vpack.c.b16 %v3454, %v3436
    %v4373 = vpack.c.b16 %v3455, %v3437
    %v4374 = vpack.c.b16 %v3474, %v3456
    %v4375 = vpack.c.b16 %v3475, %v3457
    %v4376 = vpack.c.b16 %v3476, %v3458
    %v4377 = vpack.c.b16 %v3477, %v3459
    %v4378 = vpack.c.b16 %v3478, %v3460
    %v4379 = vpack.c.b16 %v3479, %v3461
    %v4380 = vpack.c.b16 %v3480, %v3462
    %v4381 = vpack.c.b16 %v3481, %v3463
    %v4382 = vpack.c.b16 %v3482, %v3464
    %v4383 = vpack.c.b16 %v3483, %v3465
    %v4384 = vpack.c.b16 %v3484, %v3466
    %v4385 = vpack.c.b16 %v3485, %v3467
    %v4386 = vpack.c.b16 %v3486, %v3468
    %v4387 = vpack.c.b16 %v3487, %v3469
    %v4388 = vpack.c.b16 %v3488, %v3470
    %v4389 = vpack.c.b16 %v3489, %v3471
    %v4390 = vpack.c.b16 %v3490, %v3472
    %v4391 = vpack.c.b16 %v3491, %v3473
    %v4392 = vpack.c.b16 %v3510, %v3492
    %v4393 = vpack.c.b16 %v3511, %v3493
    %v4394 = vpack.c.b16 %v3512, %v3494
    %v4395 = vpack.c.b16 %v3513, %v3495
    %v4396 = vpack.c.b16 %v3514, %v3496
    %v4397 = vpack.c.b16 %v3515, %v3497
    %v4398 = vpack.c.b16 %v3516, %v3498
    %v4399 = vpack.c.b16 %v3517, %v3499
    %v4400 = vpack.c.b16 %v3518, %v3500
    %v4401 = vpack.c.b16 %v3519, %v3501
    %v4402 = vpack.c.b16 %v3520, %v3502
    %v4403 = vpack.c.b16 %v3521, %v3503
    %v4404 = vpack.c.b16 %v3522, %v3504
    %v4405 = vpack.c.b16 %v3523, %v3505
    %v4406 = vpack.c.b16 %v3524, %v3506
    %v4407 = vpack.c.b16 %v3525, %v3507
    %v4408 = vpack.c.b16 %v3526, %v3508
    %v4409 = vpack.c.b16 %v3527, %v3509
    %v4410 = vpack.c.b16 %v3546, %v3528
    %v4411 = vpack.c.b16 %v3547, %v3529
    %v4412 = vpack.c.b16 %v3548, %v3530
    %v4413 = vpack.c.b16 %v3549, %v3531
    %v4414 = vpack.c.b16 %v3550, %v3532
    %v4415 = vpack.c.b16 %v3551, %v3533
    %v4416 = vpack.c.b16 %v3552, %v3534
    %v4417 = vpack.c.b16 %v3553, %v3535
    %v4418 = vpack.c.b16 %v3554, %v3536
    %v4419 = vpack.c.b16 %v3555, %v3537
    %v4420 = vpack.c.b16 %v3556, %v3538
    %v4421 = vpack.c.b16 %v3557, %v3539
    %v4422 = vpack.c.b16 %v3558, %v3540
    %v4423 = vpack.c.b16 %v3559, %v3541
    %v4424 = vpack.c.b16 %v3560, %v3542
    %v4425 = vpack.c.b16 %v3561, %v3543
    %v4426 = vpack.c.b16 %v3562, %v3544
    %v4427 = vpack.c.b16 %v3563, %v3545
    %5292 = vmatprep.subr.bf16.mxu0 %v3691
    %5293 = vmatpush1.bf16.msra.mxu0 %v3690
    %5294 = vmatprep.subr.bf16.mxu0 %v3673
    %5295 = vmatpush1.bf16.msra.mxu0 %v3672
    %5296 = vmatprep.subr.bf16.mxu0 %v3655
    %5297 = vmatpush1.bf16.msra.mxu0 %v3654
    %5298 = vmatprep.subr.bf16.mxu0 %v3637
    %5299 = vmatpush1.bf16.msra.mxu0 %v3636
    %5300 = vmatprep.subr.bf16.mxu0 %v3619
    %5301 = vmatpush1.bf16.msra.mxu0 %v3618
    %5302 = vmatprep.subr.bf16.mxu0 %v3601
    %5303 = vmatpush1.bf16.msra.mxu0 %v3600
    %5304 = vmatprep.subr.bf16.mxu0 %v3583
    %5305 = vmatpush1.bf16.msra.mxu0 %v3582
    %5306 = vmatprep.subr.bf16.mxu0 %v3565
    %5307 = vmatpush1.bf16.msra.mxu0 %v3564
    %5308 = vmatprep.subr.bf16.mxu0 %v3835
    %5309 = vmatpush2.bf16.msra.mxu0 %v3834
    %5310 = vmatprep.subr.bf16.mxu0 %v3817
    %5311 = vmatpush2.bf16.msra.mxu0 %v3816
    %5312 = vmatprep.subr.bf16.mxu0 %v3799
    %5313 = vmatpush2.bf16.msra.mxu0 %v3798
    %5314 = vmatprep.subr.bf16.mxu0 %v3781
    %5315 = vmatpush2.bf16.msra.mxu0 %v3780
    %5316 = vmatprep.subr.bf16.mxu0 %v3763
    %5317 = vmatpush2.bf16.msra.mxu0 %v3762
    %5318 = vmatprep.subr.bf16.mxu0 %v3745
    %5319 = vmatpush2.bf16.msra.mxu0 %v3744
    %5320 = vmatprep.subr.bf16.mxu0 %v3727
    %5321 = vmatpush2.bf16.msra.mxu0 %v3726
    %5322 = vmatprep.subr.bf16.mxu0 %v3709
    %5323 = vmatpush2.bf16.msra.mxu0 %v3708
    %5324 = vmatprep.mubr.bf16.mxu0 %v961
    %5325 = vmatmul.mubr.bf16.gmra.mxu0 %v960
    %v5326 = vpop.f32.mrf.mxu0
    %v5327 = vadd.f32 0.0, %v5326
    %v5328 = vpop.f32.mrf.mxu0
    %v5329 = vadd.f32 0.0, %v5328
    %v5330 = vpop.f32.mrf.mxu0
    %v5331 = vadd.f32 0.0, %v5330
    %v5332 = vpop.f32.mrf.mxu0
    %v5333 = vadd.f32 0.0, %v5332
    %5334 = vdwg.mxu0
    %5335 = vmatprep.subr.bf16.mxu0 %v3979
    %5336 = vmatpush1.bf16.msra.mxu0 %v3978
    %5337 = vmatprep.subr.bf16.mxu0 %v3961
    %5338 = vmatpush1.bf16.msra.mxu0 %v3960
    %5339 = vmatprep.subr.bf16.mxu0 %v3943
    %5340 = vmatpush1.bf16.msra.mxu0 %v3942
    %5341 = vmatprep.subr.bf16.mxu0 %v3925
    %5342 = vmatpush1.bf16.msra.mxu0 %v3924
    %5343 = vmatprep.subr.bf16.mxu0 %v3907
    %5344 = vmatpush1.bf16.msra.mxu0 %v3906
    %5345 = vmatprep.subr.bf16.mxu0 %v3889
    %5346 = vmatpush1.bf16.msra.mxu0 %v3888
    %5347 = vmatprep.subr.bf16.mxu0 %v3871
    %5348 = vmatpush1.bf16.msra.mxu0 %v3870
    %5349 = vmatprep.subr.bf16.mxu0 %v3853
    %5350 = vmatpush1.bf16.msra.mxu0 %v3852
    %5351 = vmatprep.subr.bf16.mxu0 %v4123
    %5352 = vmatpush2.bf16.msra.mxu0 %v4122
    %5353 = vmatprep.subr.bf16.mxu0 %v4105
    %5354 = vmatpush2.bf16.msra.mxu0 %v4104
    %5355 = vmatprep.subr.bf16.mxu0 %v4087
    %5356 = vmatpush2.bf16.msra.mxu0 %v4086
    %5357 = vmatprep.subr.bf16.mxu0 %v4069
    %5358 = vmatpush2.bf16.msra.mxu0 %v4068
    %5359 = vmatprep.subr.bf16.mxu0 %v4051
    %5360 = vmatpush2.bf16.msra.mxu0 %v4050
    %5361 = vmatprep.subr.bf16.mxu0 %v4033
    %5362 = vmatpush2.bf16.msra.mxu0 %v4032
    %5363 = vmatprep.subr.bf16.mxu0 %v4015
    %5364 = vmatpush2.bf16.msra.mxu0 %v4014
    %5365 = vmatprep.subr.bf16.mxu0 %v3997
    %5366 = vmatpush2.bf16.msra.mxu0 %v3996
    %5367 = vmatprep.mubr.bf16.mxu0 %v963
    %5368 = vmatmul.mubr.bf16.gmra.mxu0 %v962
    %v5369 = vpop.f32.mrf.mxu0
    %v5370 = vadd.f32 %v5327, %v5369
    %v5371 = vpop.f32.mrf.mxu0
    %v5372 = vadd.f32 %v5329, %v5371
    %v5373 = vpop.f32.mrf.mxu0
    %v5374 = vadd.f32 %v5331, %v5373
    %v5375 = vpop.f32.mrf.mxu0
    %v5376 = vadd.f32 %v5333, %v5375
    %5377 = vdwg.mxu0
    %5378 = vmatprep.subr.bf16.mxu0 %v4267
    %5379 = vmatpush1.bf16.msra.mxu0 %v4266
    %5380 = vmatprep.subr.bf16.mxu0 %v4249
    %5381 = vmatpush1.bf16.msra.mxu0 %v4248
    %5382 = vmatprep.subr.bf16.mxu0 %v4231
    %5383 = vmatpush1.bf16.msra.mxu0 %v4230
    %5384 = vmatprep.subr.bf16.mxu0 %v4213
    %5385 = vmatpush1.bf16.msra.mxu0 %v4212
    %5386 = vmatprep.subr.bf16.mxu0 %v4195
    %5387 = vmatpush1.bf16.msra.mxu0 %v4194
    %5388 = vmatprep.subr.bf16.mxu0 %v4177
    %5389 = vmatpush1.bf16.msra.mxu0 %v4176
    %5390 = vmatprep.subr.bf16.mxu0 %v4159
    %5391 = vmatpush1.bf16.msra.mxu0 %v4158
    %5392 = vmatprep.subr.bf16.mxu0 %v4141
    %5393 = vmatpush1.bf16.msra.mxu0 %v4140
    %5394 = vmatprep.subr.bf16.mxu0 %v4411
    %5395 = vmatpush2.bf16.msra.mxu0 %v4410
    %5396 = vmatprep.subr.bf16.mxu0 %v4393
    %5397 = vmatpush2.bf16.msra.mxu0 %v4392
    %5398 = vmatprep.subr.bf16.mxu0 %v4375
    %5399 = vmatpush2.bf16.msra.mxu0 %v4374
    %5400 = vmatprep.subr.bf16.mxu0 %v4357
    %5401 = vmatpush2.bf16.msra.mxu0 %v4356
    %5402 = vmatprep.subr.bf16.mxu0 %v4339
    %5403 = vmatpush2.bf16.msra.mxu0 %v4338
    %5404 = vmatprep.subr.bf16.mxu0 %v4321
    %5405 = vmatpush2.bf16.msra.mxu0 %v4320
    %5406 = vmatprep.subr.bf16.mxu0 %v4303
    %5407 = vmatpush2.bf16.msra.mxu0 %v4302
    %5408 = vmatprep.subr.bf16.mxu0 %v4285
    %5409 = vmatpush2.bf16.msra.mxu0 %v4284
    %5410 = vmatprep.mubr.bf16.mxu0 %v965
    %5411 = vmatmul.mubr.bf16.gmra.mxu0 %v964
    %v5412 = vpop.f32.mrf.mxu0
    %v5413 = vadd.f32 %v5370, %v5412
    %v5414 = vpop.f32.mrf.mxu0
    %v5415 = vadd.f32 %v5372, %v5414
    %v5416 = vpop.f32.mrf.mxu0
    %v5417 = vadd.f32 %v5374, %v5416
    %v5418 = vpop.f32.mrf.mxu0
    %v5419 = vadd.f32 %v5376, %v5418
    %5420 = vdwg.mxu0
    %5421 = vmatprep.subr.bf16.mxu0 %v3693
    %5422 = vmatpush1.bf16.msra.mxu0 %v3692
    %5423 = vmatprep.subr.bf16.mxu0 %v3675
    %5424 = vmatpush1.bf16.msra.mxu0 %v3674
    %5425 = vmatprep.subr.bf16.mxu0 %v3657
    %5426 = vmatpush1.bf16.msra.mxu0 %v3656
    %5427 = vmatprep.subr.bf16.mxu0 %v3639
    %5428 = vmatpush1.bf16.msra.mxu0 %v3638
    %5429 = vmatprep.subr.bf16.mxu0 %v3621
    %5430 = vmatpush1.bf16.msra.mxu0 %v3620
    %5431 = vmatprep.subr.bf16.mxu0 %v3603
    %5432 = vmatpush1.bf16.msra.mxu0 %v3602
    %5433 = vmatprep.subr.bf16.mxu0 %v3585
    %5434 = vmatpush1.bf16.msra.mxu0 %v3584
    %5435 = vmatprep.subr.bf16.mxu0 %v3567
    %5436 = vmatpush1.bf16.msra.mxu0 %v3566
    %5437 = vmatprep.subr.bf16.mxu0 %v3837
    %5438 = vmatpush2.bf16.msra.mxu0 %v3836
    %5439 = vmatprep.subr.bf16.mxu0 %v3819
    %5440 = vmatpush2.bf16.msra.mxu0 %v3818
    %5441 = vmatprep.subr.bf16.mxu0 %v3801
    %5442 = vmatpush2.bf16.msra.mxu0 %v3800
    %5443 = vmatprep.subr.bf16.mxu0 %v3783
    %5444 = vmatpush2.bf16.msra.mxu0 %v3782
    %5445 = vmatprep.subr.bf16.mxu0 %v3765
    %5446 = vmatpush2.bf16.msra.mxu0 %v3764
    %5447 = vmatprep.subr.bf16.mxu0 %v3747
    %5448 = vmatpush2.bf16.msra.mxu0 %v3746
    %5449 = vmatprep.subr.bf16.mxu0 %v3729
    %5450 = vmatpush2.bf16.msra.mxu0 %v3728
    %5451 = vmatprep.subr.bf16.mxu0 %v3711
    %5452 = vmatpush2.bf16.msra.mxu0 %v3710
    %5453 = vmatprep.mubr.bf16.mxu0 %v961
    %5454 = vmatmul.mubr.bf16.gmra.mxu0 %v960
    %v5455 = vpop.f32.mrf.mxu0
    %v5456 = vadd.f32 0.0, %v5455
    %v5457 = vpop.f32.mrf.mxu0
    %v5458 = vadd.f32 0.0, %v5457
    %v5459 = vpop.f32.mrf.mxu0
    %v5460 = vadd.f32 0.0, %v5459
    %v5461 = vpop.f32.mrf.mxu0
    %v5462 = vadd.f32 0.0, %v5461
    %5463 = vdwg.mxu0
    %5464 = vmatprep.subr.bf16.mxu0 %v3981
    %5465 = vmatpush1.bf16.msra.mxu0 %v3980
    %5466 = vmatprep.subr.bf16.mxu0 %v3963
    %5467 = vmatpush1.bf16.msra.mxu0 %v3962
    %5468 = vmatprep.subr.bf16.mxu0 %v3945
    %5469 = vmatpush1.bf16.msra.mxu0 %v3944
    %5470 = vmatprep.subr.bf16.mxu0 %v3927
    %5471 = vmatpush1.bf16.msra.mxu0 %v3926
    %5472 = vmatprep.subr.bf16.mxu0 %v3909
    %5473 = vmatpush1.bf16.msra.mxu0 %v3908
    %5474 = vmatprep.subr.bf16.mxu0 %v3891
    %5475 = vmatpush1.bf16.msra.mxu0 %v3890
    %5476 = vmatprep.subr.bf16.mxu0 %v3873
    %5477 = vmatpush1.bf16.msra.mxu0 %v3872
    %5478 = vmatprep.subr.bf16.mxu0 %v3855
    %5479 = vmatpush1.bf16.msra.mxu0 %v3854
    %5480 = vmatprep.subr.bf16.mxu0 %v4125
    %5481 = vmatpush2.bf16.msra.mxu0 %v4124
    %5482 = vmatprep.subr.bf16.mxu0 %v4107
    %5483 = vmatpush2.bf16.msra.mxu0 %v4106
    %5484 = vmatprep.subr.bf16.mxu0 %v4089
    %5485 = vmatpush2.bf16.msra.mxu0 %v4088
    %5486 = vmatprep.subr.bf16.mxu0 %v4071
    %5487 = vmatpush2.bf16.msra.mxu0 %v4070
    %5488 = vmatprep.subr.bf16.mxu0 %v4053
    %5489 = vmatpush2.bf16.msra.mxu0 %v4052
    %5490 = vmatprep.subr.bf16.mxu0 %v4035
    %5491 = vmatpush2.bf16.msra.mxu0 %v4034
    %5492 = vmatprep.subr.bf16.mxu0 %v4017
    %5493 = vmatpush2.bf16.msra.mxu0 %v4016
    %5494 = vmatprep.subr.bf16.mxu0 %v3999
    %5495 = vmatpush2.bf16.msra.mxu0 %v3998
    %5496 = vmatprep.mubr.bf16.mxu0 %v963
    %5497 = vmatmul.mubr.bf16.gmra.mxu0 %v962
    %v5498 = vpop.f32.mrf.mxu0
    %v5499 = vadd.f32 %v5456, %v5498
    %v5500 = vpop.f32.mrf.mxu0
    %v5501 = vadd.f32 %v5458, %v5500
    %v5502 = vpop.f32.mrf.mxu0
    %v5503 = vadd.f32 %v5460, %v5502
    %v5504 = vpop.f32.mrf.mxu0
    %v5505 = vadd.f32 %v5462, %v5504
    %5506 = vdwg.mxu0
    %5507 = vmatprep.subr.bf16.mxu0 %v4269
    %5508 = vmatpush1.bf16.msra.mxu0 %v4268
    %5509 = vmatprep.subr.bf16.mxu0 %v4251
    %5510 = vmatpush1.bf16.msra.mxu0 %v4250
    %5511 = vmatprep.subr.bf16.mxu0 %v4233
    %5512 = vmatpush1.bf16.msra.mxu0 %v4232
    %5513 = vmatprep.subr.bf16.mxu0 %v4215
    %5514 = vmatpush1.bf16.msra.mxu0 %v4214
    %5515 = vmatprep.subr.bf16.mxu0 %v4197
    %5516 = vmatpush1.bf16.msra.mxu0 %v4196
    %5517 = vmatprep.subr.bf16.mxu0 %v4179
    %5518 = vmatpush1.bf16.msra.mxu0 %v4178
    %5519 = vmatprep.subr.bf16.mxu0 %v4161
    %5520 = vmatpush1.bf16.msra.mxu0 %v4160
    %5521 = vmatprep.subr.bf16.mxu0 %v4143
    %5522 = vmatpush1.bf16.msra.mxu0 %v4142
    %5523 = vmatprep.subr.bf16.mxu0 %v4413
    %5524 = vmatpush2.bf16.msra.mxu0 %v4412
    %5525 = vmatprep.subr.bf16.mxu0 %v4395
    %5526 = vmatpush2.bf16.msra.mxu0 %v4394
    %5527 = vmatprep.subr.bf16.mxu0 %v4377
    %5528 = vmatpush2.bf16.msra.mxu0 %v4376
    %5529 = vmatprep.subr.bf16.mxu0 %v4359
    %5530 = vmatpush2.bf16.msra.mxu0 %v4358
    %5531 = vmatprep.subr.bf16.mxu0 %v4341
    %5532 = vmatpush2.bf16.msra.mxu0 %v4340
    %5533 = vmatprep.subr.bf16.mxu0 %v4323
    %5534 = vmatpush2.bf16.msra.mxu0 %v4322
    %5535 = vmatprep.subr.bf16.mxu0 %v4305
    %5536 = vmatpush2.bf16.msra.mxu0 %v4304
    %5537 = vmatprep.subr.bf16.mxu0 %v4287
    %5538 = vmatpush2.bf16.msra.mxu0 %v4286
    %5539 = vmatprep.mubr.bf16.mxu0 %v965
    %5540 = vmatmul.mubr.bf16.gmra.mxu0 %v964
    %v5541 = vpop.f32.mrf.mxu0
    %v5542 = vadd.f32 %v5499, %v5541
    %v5543 = vpop.f32.mrf.mxu0
    %v5544 = vadd.f32 %v5501, %v5543
    %v5545 = vpop.f32.mrf.mxu0
    %v5546 = vadd.f32 %v5503, %v5545
    %v5547 = vpop.f32.mrf.mxu0
    %v5548 = vadd.f32 %v5505, %v5547
    %5549 = vdwg.mxu0
    %5550 = vmatprep.subr.bf16.mxu0 %v3695
    %5551 = vmatpush1.bf16.msra.mxu0 %v3694
    %5552 = vmatprep.subr.bf16.mxu0 %v3677
    %5553 = vmatpush1.bf16.msra.mxu0 %v3676
    %5554 = vmatprep.subr.bf16.mxu0 %v3659
    %5555 = vmatpush1.bf16.msra.mxu0 %v3658
    %5556 = vmatprep.subr.bf16.mxu0 %v3641
    %5557 = vmatpush1.bf16.msra.mxu0 %v3640
    %5558 = vmatprep.subr.bf16.mxu0 %v3623
    %5559 = vmatpush1.bf16.msra.mxu0 %v3622
    %5560 = vmatprep.subr.bf16.mxu0 %v3605
    %5561 = vmatpush1.bf16.msra.mxu0 %v3604
    %5562 = vmatprep.subr.bf16.mxu0 %v3587
    %5563 = vmatpush1.bf16.msra.mxu0 %v3586
    %5564 = vmatprep.subr.bf16.mxu0 %v3569
    %5565 = vmatpush1.bf16.msra.mxu0 %v3568
    %5566 = vmatprep.subr.bf16.mxu0 %v3839
    %5567 = vmatpush2.bf16.msra.mxu0 %v3838
    %5568 = vmatprep.subr.bf16.mxu0 %v3821
    %5569 = vmatpush2.bf16.msra.mxu0 %v3820
    %5570 = vmatprep.subr.bf16.mxu0 %v3803
    %5571 = vmatpush2.bf16.msra.mxu0 %v3802
    %5572 = vmatprep.subr.bf16.mxu0 %v3785
    %5573 = vmatpush2.bf16.msra.mxu0 %v3784
    %5574 = vmatprep.subr.bf16.mxu0 %v3767
    %5575 = vmatpush2.bf16.msra.mxu0 %v3766
    %5576 = vmatprep.subr.bf16.mxu0 %v3749
    %5577 = vmatpush2.bf16.msra.mxu0 %v3748
    %5578 = vmatprep.subr.bf16.mxu0 %v3731
    %5579 = vmatpush2.bf16.msra.mxu0 %v3730
    %5580 = vmatprep.subr.bf16.mxu0 %v3713
    %5581 = vmatpush2.bf16.msra.mxu0 %v3712
    %5582 = vmatprep.mubr.bf16.mxu0 %v961
    %5583 = vmatmul.mubr.bf16.gmra.mxu0 %v960
    %v5584 = vpop.f32.mrf.mxu0
    %v5585 = vadd.f32 0.0, %v5584
    %v5586 = vpop.f32.mrf.mxu0
    %v5587 = vadd.f32 0.0, %v5586
    %v5588 = vpop.f32.mrf.mxu0
    %v5589 = vadd.f32 0.0, %v5588
    %v5590 = vpop.f32.mrf.mxu0
    %v5591 = vadd.f32 0.0, %v5590
    %5592 = vdwg.mxu0
    %5593 = vmatprep.subr.bf16.mxu0 %v3983
    %5594 = vmatpush1.bf16.msra.mxu0 %v3982
    %5595 = vmatprep.subr.bf16.mxu0 %v3965
    %5596 = vmatpush1.bf16.msra.mxu0 %v3964
    %5597 = vmatprep.subr.bf16.mxu0 %v3947
    %5598 = vmatpush1.bf16.msra.mxu0 %v3946
    %5599 = vmatprep.subr.bf16.mxu0 %v3929
    %5600 = vmatpush1.bf16.msra.mxu0 %v3928
    %5601 = vmatprep.subr.bf16.mxu0 %v3911
    %5602 = vmatpush1.bf16.msra.mxu0 %v3910
    %5603 = vmatprep.subr.bf16.mxu0 %v3893
    %5604 = vmatpush1.bf16.msra.mxu0 %v3892
    %5605 = vmatprep.subr.bf16.mxu0 %v3875
    %5606 = vmatpush1.bf16.msra.mxu0 %v3874
    %5607 = vmatprep.subr.bf16.mxu0 %v3857
    %5608 = vmatpush1.bf16.msra.mxu0 %v3856
    %5609 = vmatprep.subr.bf16.mxu0 %v4127
    %5610 = vmatpush2.bf16.msra.mxu0 %v4126
    %5611 = vmatprep.subr.bf16.mxu0 %v4109
    %5612 = vmatpush2.bf16.msra.mxu0 %v4108
    %5613 = vmatprep.subr.bf16.mxu0 %v4091
    %5614 = vmatpush2.bf16.msra.mxu0 %v4090
    %5615 = vmatprep.subr.bf16.mxu0 %v4073
    %5616 = vmatpush2.bf16.msra.mxu0 %v4072
    %5617 = vmatprep.subr.bf16.mxu0 %v4055
    %5618 = vmatpush2.bf16.msra.mxu0 %v4054
    %5619 = vmatprep.subr.bf16.mxu0 %v4037
    %5620 = vmatpush2.bf16.msra.mxu0 %v4036
    %5621 = vmatprep.subr.bf16.mxu0 %v4019
    %5622 = vmatpush2.bf16.msra.mxu0 %v4018
    %5623 = vmatprep.subr.bf16.mxu0 %v4001
    %5624 = vmatpush2.bf16.msra.mxu0 %v4000
    %5625 = vmatprep.mubr.bf16.mxu0 %v963
    %5626 = vmatmul.mubr.bf16.gmra.mxu0 %v962
    %v5627 = vpop.f32.mrf.mxu0
    %v5628 = vadd.f32 %v5585, %v5627
    %v5629 = vpop.f32.mrf.mxu0
    %v5630 = vadd.f32 %v5587, %v5629
    %v5631 = vpop.f32.mrf.mxu0
    %v5632 = vadd.f32 %v5589, %v5631
    %v5633 = vpop.f32.mrf.mxu0
    %v5634 = vadd.f32 %v5591, %v5633
    %5635 = vdwg.mxu0
    %5636 = vmatprep.subr.bf16.mxu0 %v4271
    %5637 = vmatpush1.bf16.msra.mxu0 %v4270
    %5638 = vmatprep.subr.bf16.mxu0 %v4253
    %5639 = vmatpush1.bf16.msra.mxu0 %v4252
    %5640 = vmatprep.subr.bf16.mxu0 %v4235
    %5641 = vmatpush1.bf16.msra.mxu0 %v4234
    %5642 = vmatprep.subr.bf16.mxu0 %v4217
    %5643 = vmatpush1.bf16.msra.mxu0 %v4216
    %5644 = vmatprep.subr.bf16.mxu0 %v4199
    %5645 = vmatpush1.bf16.msra.mxu0 %v4198
    %5646 = vmatprep.subr.bf16.mxu0 %v4181
    %5647 = vmatpush1.bf16.msra.mxu0 %v4180
    %5648 = vmatprep.subr.bf16.mxu0 %v4163
    %5649 = vmatpush1.bf16.msra.mxu0 %v4162
    %5650 = vmatprep.subr.bf16.mxu0 %v4145
    %5651 = vmatpush1.bf16.msra.mxu0 %v4144
    %5652 = vmatprep.subr.bf16.mxu0 %v4415
    %5653 = vmatpush2.bf16.msra.mxu0 %v4414
    %5654 = vmatprep.subr.bf16.mxu0 %v4397
    %5655 = vmatpush2.bf16.msra.mxu0 %v4396
    %5656 = vmatprep.subr.bf16.mxu0 %v4379
    %5657 = vmatpush2.bf16.msra.mxu0 %v4378
    %5658 = vmatprep.subr.bf16.mxu0 %v4361
    %5659 = vmatpush2.bf16.msra.mxu0 %v4360
    %5660 = vmatprep.subr.bf16.mxu0 %v4343
    %5661 = vmatpush2.bf16.msra.mxu0 %v4342
    %5662 = vmatprep.subr.bf16.mxu0 %v4325
    %5663 = vmatpush2.bf16.msra.mxu0 %v4324
    %5664 = vmatprep.subr.bf16.mxu0 %v4307
    %5665 = vmatpush2.bf16.msra.mxu0 %v4306
    %5666 = vmatprep.subr.bf16.mxu0 %v4289
    %5667 = vmatpush2.bf16.msra.mxu0 %v4288
    %5668 = vmatprep.mubr.bf16.mxu0 %v965
    %5669 = vmatmul.mubr.bf16.gmra.mxu0 %v964
    %v5670 = vpop.f32.mrf.mxu0
    %v5671 = vadd.f32 %v5628, %v5670
    %v5672 = vpop.f32.mrf.mxu0
    %v5673 = vadd.f32 %v5630, %v5672
    %v5674 = vpop.f32.mrf.mxu0
    %v5675 = vadd.f32 %v5632, %v5674
    %v5676 = vpop.f32.mrf.mxu0
    %v5677 = vadd.f32 %v5634, %v5676
    %5678 = vdwg.mxu0
    %5679 = vmatprep.subr.bf16.mxu0 %v3697
    %5680 = vmatpush1.bf16.msra.mxu0 %v3696
    %5681 = vmatprep.subr.bf16.mxu0 %v3679
    %5682 = vmatpush1.bf16.msra.mxu0 %v3678
    %5683 = vmatprep.subr.bf16.mxu0 %v3661
    %5684 = vmatpush1.bf16.msra.mxu0 %v3660
    %5685 = vmatprep.subr.bf16.mxu0 %v3643
    %5686 = vmatpush1.bf16.msra.mxu0 %v3642
    %5687 = vmatprep.subr.bf16.mxu0 %v3625
    %5688 = vmatpush1.bf16.msra.mxu0 %v3624
    %5689 = vmatprep.subr.bf16.mxu0 %v3607
    %5690 = vmatpush1.bf16.msra.mxu0 %v3606
    %5691 = vmatprep.subr.bf16.mxu0 %v3589
    %5692 = vmatpush1.bf16.msra.mxu0 %v3588
    %5693 = vmatprep.subr.bf16.mxu0 %v3571
    %5694 = vmatpush1.bf16.msra.mxu0 %v3570
    %5695 = vmatprep.subr.bf16.mxu0 %v3841
    %5696 = vmatpush2.bf16.msra.mxu0 %v3840
    %5697 = vmatprep.subr.bf16.mxu0 %v3823
    %5698 = vmatpush2.bf16.msra.mxu0 %v3822
    %5699 = vmatprep.subr.bf16.mxu0 %v3805
    %5700 = vmatpush2.bf16.msra.mxu0 %v3804
    %5701 = vmatprep.subr.bf16.mxu0 %v3787
    %5702 = vmatpush2.bf16.msra.mxu0 %v3786
    %5703 = vmatprep.subr.bf16.mxu0 %v3769
    %5704 = vmatpush2.bf16.msra.mxu0 %v3768
    %5705 = vmatprep.subr.bf16.mxu0 %v3751
    %5706 = vmatpush2.bf16.msra.mxu0 %v3750
    %5707 = vmatprep.subr.bf16.mxu0 %v3733
    %5708 = vmatpush2.bf16.msra.mxu0 %v3732
    %5709 = vmatprep.subr.bf16.mxu0 %v3715
    %5710 = vmatpush2.bf16.msra.mxu0 %v3714
    %5711 = vmatprep.mubr.bf16.mxu0 %v961
    %5712 = vmatmul.mubr.bf16.gmra.mxu0 %v960
    %v5713 = vpop.f32.mrf.mxu0
    %v5714 = vadd.f32 0.0, %v5713
    %v5715 = vpop.f32.mrf.mxu0
    %v5716 = vadd.f32 0.0, %v5715
    %v5717 = vpop.f32.mrf.mxu0
    %v5718 = vadd.f32 0.0, %v5717
    %v5719 = vpop.f32.mrf.mxu0
    %v5720 = vadd.f32 0.0, %v5719
    %5721 = vdwg.mxu0
    %5722 = vmatprep.subr.bf16.mxu0 %v3985
    %5723 = vmatpush1.bf16.msra.mxu0 %v3984
    %5724 = vmatprep.subr.bf16.mxu0 %v3967
    %5725 = vmatpush1.bf16.msra.mxu0 %v3966
    %5726 = vmatprep.subr.bf16.mxu0 %v3949
    %5727 = vmatpush1.bf16.msra.mxu0 %v3948
    %5728 = vmatprep.subr.bf16.mxu0 %v3931
    %5729 = vmatpush1.bf16.msra.mxu0 %v3930
    %5730 = vmatprep.subr.bf16.mxu0 %v3913
    %5731 = vmatpush1.bf16.msra.mxu0 %v3912
    %5732 = vmatprep.subr.bf16.mxu0 %v3895
    %5733 = vmatpush1.bf16.msra.mxu0 %v3894
    %5734 = vmatprep.subr.bf16.mxu0 %v3877
    %5735 = vmatpush1.bf16.msra.mxu0 %v3876
    %5736 = vmatprep.subr.bf16.mxu0 %v3859
    %5737 = vmatpush1.bf16.msra.mxu0 %v3858
    %5738 = vmatprep.subr.bf16.mxu0 %v4129
    %5739 = vmatpush2.bf16.msra.mxu0 %v4128
    %5740 = vmatprep.subr.bf16.mxu0 %v4111
    %5741 = vmatpush2.bf16.msra.mxu0 %v4110
    %5742 = vmatprep.subr.bf16.mxu0 %v4093
    %5743 = vmatpush2.bf16.msra.mxu0 %v4092
    %5744 = vmatprep.subr.bf16.mxu0 %v4075
    %5745 = vmatpush2.bf16.msra.mxu0 %v4074
    %5746 = vmatprep.subr.bf16.mxu0 %v4057
    %5747 = vmatpush2.bf16.msra.mxu0 %v4056
    %5748 = vmatprep.subr.bf16.mxu0 %v4039
    %5749 = vmatpush2.bf16.msra.mxu0 %v4038
    %5750 = vmatprep.subr.bf16.mxu0 %v4021
    %5751 = vmatpush2.bf16.msra.mxu0 %v4020
    %5752 = vmatprep.subr.bf16.mxu0 %v4003
    %5753 = vmatpush2.bf16.msra.mxu0 %v4002
    %5754 = vmatprep.mubr.bf16.mxu0 %v963
    %5755 = vmatmul.mubr.bf16.gmra.mxu0 %v962
    %v5756 = vpop.f32.mrf.mxu0
    %v5757 = vadd.f32 %v5714, %v5756
    %v5758 = vpop.f32.mrf.mxu0
    %v5759 = vadd.f32 %v5716, %v5758
    %v5760 = vpop.f32.mrf.mxu0
    %v5761 = vadd.f32 %v5718, %v5760
    %v5762 = vpop.f32.mrf.mxu0
    %v5763 = vadd.f32 %v5720, %v5762
    %5764 = vdwg.mxu0
    %5765 = vmatprep.subr.bf16.mxu0 %v4273
    %5766 = vmatpush1.bf16.msra.mxu0 %v4272
    %5767 = vmatprep.subr.bf16.mxu0 %v4255
    %5768 = vmatpush1.bf16.msra.mxu0 %v4254
    %5769 = vmatprep.subr.bf16.mxu0 %v4237
    %5770 = vmatpush1.bf16.msra.mxu0 %v4236
    %5771 = vmatprep.subr.bf16.mxu0 %v4219
    %5772 = vmatpush1.bf16.msra.mxu0 %v4218
    %5773 = vmatprep.subr.bf16.mxu0 %v4201
    %5774 = vmatpush1.bf16.msra.mxu0 %v4200
    %5775 = vmatprep.subr.bf16.mxu0 %v4183
    %5776 = vmatpush1.bf16.msra.mxu0 %v4182
    %5777 = vmatprep.subr.bf16.mxu0 %v4165
    %5778 = vmatpush1.bf16.msra.mxu0 %v4164
    %5779 = vmatprep.subr.bf16.mxu0 %v4147
    %5780 = vmatpush1.bf16.msra.mxu0 %v4146
    %5781 = vmatprep.subr.bf16.mxu0 %v4417
    %5782 = vmatpush2.bf16.msra.mxu0 %v4416
    %5783 = vmatprep.subr.bf16.mxu0 %v4399
    %5784 = vmatpush2.bf16.msra.mxu0 %v4398
    %5785 = vmatprep.subr.bf16.mxu0 %v4381
    %5786 = vmatpush2.bf16.msra.mxu0 %v4380
    %5787 = vmatprep.subr.bf16.mxu0 %v4363
    %5788 = vmatpush2.bf16.msra.mxu0 %v4362
    %5789 = vmatprep.subr.bf16.mxu0 %v4345
    %5790 = vmatpush2.bf16.msra.mxu0 %v4344
    %5791 = vmatprep.subr.bf16.mxu0 %v4327
    %5792 = vmatpush2.bf16.msra.mxu0 %v4326
    %5793 = vmatprep.subr.bf16.mxu0 %v4309
    %5794 = vmatpush2.bf16.msra.mxu0 %v4308
    %5795 = vmatprep.subr.bf16.mxu0 %v4291
    %5796 = vmatpush2.bf16.msra.mxu0 %v4290
    %5797 = vmatprep.mubr.bf16.mxu0 %v965
    %5798 = vmatmul.mubr.bf16.gmra.mxu0 %v964
    %v5799 = vpop.f32.mrf.mxu0
    %v5800 = vadd.f32 %v5757, %v5799
    %v5801 = vpop.f32.mrf.mxu0
    %v5802 = vadd.f32 %v5759, %v5801
    %v5803 = vpop.f32.mrf.mxu0
    %v5804 = vadd.f32 %v5761, %v5803
    %v5805 = vpop.f32.mrf.mxu0
    %v5806 = vadd.f32 %v5763, %v5805
    %5807 = vdwg.mxu0
    %5808 = vmatprep.subr.bf16.mxu0 %v3699
    %5809 = vmatpush1.bf16.msra.mxu0 %v3698
    %5810 = vmatprep.subr.bf16.mxu0 %v3681
    %5811 = vmatpush1.bf16.msra.mxu0 %v3680
    %5812 = vmatprep.subr.bf16.mxu0 %v3663
    %5813 = vmatpush1.bf16.msra.mxu0 %v3662
    %5814 = vmatprep.subr.bf16.mxu0 %v3645
    %5815 = vmatpush1.bf16.msra.mxu0 %v3644
    %5816 = vmatprep.subr.bf16.mxu0 %v3627
    %5817 = vmatpush1.bf16.msra.mxu0 %v3626
    %5818 = vmatprep.subr.bf16.mxu0 %v3609
    %5819 = vmatpush1.bf16.msra.mxu0 %v3608
    %5820 = vmatprep.subr.bf16.mxu0 %v3591
    %5821 = vmatpush1.bf16.msra.mxu0 %v3590
    %5822 = vmatprep.subr.bf16.mxu0 %v3573
    %5823 = vmatpush1.bf16.msra.mxu0 %v3572
    %5824 = vmatprep.subr.bf16.mxu0 %v3843
    %5825 = vmatpush2.bf16.msra.mxu0 %v3842
    %5826 = vmatprep.subr.bf16.mxu0 %v3825
    %5827 = vmatpush2.bf16.msra.mxu0 %v3824
    %5828 = vmatprep.subr.bf16.mxu0 %v3807
    %5829 = vmatpush2.bf16.msra.mxu0 %v3806
    %5830 = vmatprep.subr.bf16.mxu0 %v3789
    %5831 = vmatpush2.bf16.msra.mxu0 %v3788
    %5832 = vmatprep.subr.bf16.mxu0 %v3771
    %5833 = vmatpush2.bf16.msra.mxu0 %v3770
    %5834 = vmatprep.subr.bf16.mxu0 %v3753
    %5835 = vmatpush2.bf16.msra.mxu0 %v3752
    %5836 = vmatprep.subr.bf16.mxu0 %v3735
    %5837 = vmatpush2.bf16.msra.mxu0 %v3734
    %5838 = vmatprep.subr.bf16.mxu0 %v3717
    %5839 = vmatpush2.bf16.msra.mxu0 %v3716
    %5840 = vmatprep.mubr.bf16.mxu0 %v961
    %5841 = vmatmul.mubr.bf16.gmra.mxu0 %v960
    %v5842 = vpop.f32.mrf.mxu0
    %v5843 = vadd.f32 0.0, %v5842
    %v5844 = vpop.f32.mrf.mxu0
    %v5845 = vadd.f32 0.0, %v5844
    %v5846 = vpop.f32.mrf.mxu0
    %v5847 = vadd.f32 0.0, %v5846
    %v5848 = vpop.f32.mrf.mxu0
    %v5849 = vadd.f32 0.0, %v5848
    %5850 = vdwg.mxu0
    %5851 = vmatprep.subr.bf16.mxu0 %v3987
    %5852 = vmatpush1.bf16.msra.mxu0 %v3986
    %5853 = vmatprep.subr.bf16.mxu0 %v3969
    %5854 = vmatpush1.bf16.msra.mxu0 %v3968
    %5855 = vmatprep.subr.bf16.mxu0 %v3951
    %5856 = vmatpush1.bf16.msra.mxu0 %v3950
    %5857 = vmatprep.subr.bf16.mxu0 %v3933
    %5858 = vmatpush1.bf16.msra.mxu0 %v3932
    %5859 = vmatprep.subr.bf16.mxu0 %v3915
    %5860 = vmatpush1.bf16.msra.mxu0 %v3914
    %5861 = vmatprep.subr.bf16.mxu0 %v3897
    %5862 = vmatpush1.bf16.msra.mxu0 %v3896
    %5863 = vmatprep.subr.bf16.mxu0 %v3879
    %5864 = vmatpush1.bf16.msra.mxu0 %v3878
    %5865 = vmatprep.subr.bf16.mxu0 %v3861
    %5866 = vmatpush1.bf16.msra.mxu0 %v3860
    %5867 = vmatprep.subr.bf16.mxu0 %v4131
    %5868 = vmatpush2.bf16.msra.mxu0 %v4130
    %5869 = vmatprep.subr.bf16.mxu0 %v4113
    %5870 = vmatpush2.bf16.msra.mxu0 %v4112
    %5871 = vmatprep.subr.bf16.mxu0 %v4095
    %5872 = vmatpush2.bf16.msra.mxu0 %v4094
    %5873 = vmatprep.subr.bf16.mxu0 %v4077
    %5874 = vmatpush2.bf16.msra.mxu0 %v4076
    %5875 = vmatprep.subr.bf16.mxu0 %v4059
    %5876 = vmatpush2.bf16.msra.mxu0 %v4058
    %5877 = vmatprep.subr.bf16.mxu0 %v4041
    %5878 = vmatpush2.bf16.msra.mxu0 %v4040
    %5879 = vmatprep.subr.bf16.mxu0 %v4023
    %5880 = vmatpush2.bf16.msra.mxu0 %v4022
    %5881 = vmatprep.subr.bf16.mxu0 %v4005
    %5882 = vmatpush2.bf16.msra.mxu0 %v4004
    %5883 = vmatprep.mubr.bf16.mxu0 %v963
    %5884 = vmatmul.mubr.bf16.gmra.mxu0 %v962
    %v5885 = vpop.f32.mrf.mxu0
    %v5886 = vadd.f32 %v5843, %v5885
    %v5887 = vpop.f32.mrf.mxu0
    %v5888 = vadd.f32 %v5845, %v5887
    %v5889 = vpop.f32.mrf.mxu0
    %v5890 = vadd.f32 %v5847, %v5889
    %v5891 = vpop.f32.mrf.mxu0
    %v5892 = vadd.f32 %v5849, %v5891
    %5893 = vdwg.mxu0
    %5894 = vmatprep.subr.bf16.mxu0 %v4275
    %5895 = vmatpush1.bf16.msra.mxu0 %v4274
    %5896 = vmatprep.subr.bf16.mxu0 %v4257
    %5897 = vmatpush1.bf16.msra.mxu0 %v4256
    %5898 = vmatprep.subr.bf16.mxu0 %v4239
    %5899 = vmatpush1.bf16.msra.mxu0 %v4238
    %5900 = vmatprep.subr.bf16.mxu0 %v4221
    %5901 = vmatpush1.bf16.msra.mxu0 %v4220
    %5902 = vmatprep.subr.bf16.mxu0 %v4203
    %5903 = vmatpush1.bf16.msra.mxu0 %v4202
    %5904 = vmatprep.subr.bf16.mxu0 %v4185
    %5905 = vmatpush1.bf16.msra.mxu0 %v4184
    %5906 = vmatprep.subr.bf16.mxu0 %v4167
    %5907 = vmatpush1.bf16.msra.mxu0 %v4166
    %5908 = vmatprep.subr.bf16.mxu0 %v4149
    %5909 = vmatpush1.bf16.msra.mxu0 %v4148
    %5910 = vmatprep.subr.bf16.mxu0 %v4419
    %5911 = vmatpush2.bf16.msra.mxu0 %v4418
    %5912 = vmatprep.subr.bf16.mxu0 %v4401
    %5913 = vmatpush2.bf16.msra.mxu0 %v4400
    %5914 = vmatprep.subr.bf16.mxu0 %v4383
    %5915 = vmatpush2.bf16.msra.mxu0 %v4382
    %5916 = vmatprep.subr.bf16.mxu0 %v4365
    %5917 = vmatpush2.bf16.msra.mxu0 %v4364
    %5918 = vmatprep.subr.bf16.mxu0 %v4347
    %5919 = vmatpush2.bf16.msra.mxu0 %v4346
    %5920 = vmatprep.subr.bf16.mxu0 %v4329
    %5921 = vmatpush2.bf16.msra.mxu0 %v4328
    %5922 = vmatprep.subr.bf16.mxu0 %v4311
    %5923 = vmatpush2.bf16.msra.mxu0 %v4310
    %5924 = vmatprep.subr.bf16.mxu0 %v4293
    %5925 = vmatpush2.bf16.msra.mxu0 %v4292
    %5926 = vmatprep.mubr.bf16.mxu0 %v965
    %5927 = vmatmul.mubr.bf16.gmra.mxu0 %v964
    %v5928 = vpop.f32.mrf.mxu0
    %v5929 = vadd.f32 %v5886, %v5928
    %v5930 = vpop.f32.mrf.mxu0
    %v5931 = vadd.f32 %v5888, %v5930
    %v5932 = vpop.f32.mrf.mxu0
    %v5933 = vadd.f32 %v5890, %v5932
    %v5934 = vpop.f32.mrf.mxu0
    %v5935 = vadd.f32 %v5892, %v5934
    %5936 = vdwg.mxu0
    %5937 = vmatprep.subr.bf16.mxu0 %v3701
    %5938 = vmatpush1.bf16.msra.mxu0 %v3700
    %5939 = vmatprep.subr.bf16.mxu0 %v3683
    %5940 = vmatpush1.bf16.msra.mxu0 %v3682
    %5941 = vmatprep.subr.bf16.mxu0 %v3665
    %5942 = vmatpush1.bf16.msra.mxu0 %v3664
    %5943 = vmatprep.subr.bf16.mxu0 %v3647
    %5944 = vmatpush1.bf16.msra.mxu0 %v3646
    %5945 = vmatprep.subr.bf16.mxu0 %v3629
    %5946 = vmatpush1.bf16.msra.mxu0 %v3628
    %5947 = vmatprep.subr.bf16.mxu0 %v3611
    %5948 = vmatpush1.bf16.msra.mxu0 %v3610
    %5949 = vmatprep.subr.bf16.mxu0 %v3593
    %5950 = vmatpush1.bf16.msra.mxu0 %v3592
    %5951 = vmatprep.subr.bf16.mxu0 %v3575
    %5952 = vmatpush1.bf16.msra.mxu0 %v3574
    %5953 = vmatprep.subr.bf16.mxu0 %v3845
    %5954 = vmatpush2.bf16.msra.mxu0 %v3844
    %5955 = vmatprep.subr.bf16.mxu0 %v3827
    %5956 = vmatpush2.bf16.msra.mxu0 %v3826
    %5957 = vmatprep.subr.bf16.mxu0 %v3809
    %5958 = vmatpush2.bf16.msra.mxu0 %v3808
    %5959 = vmatprep.subr.bf16.mxu0 %v3791
    %5960 = vmatpush2.bf16.msra.mxu0 %v3790
    %5961 = vmatprep.subr.bf16.mxu0 %v3773
    %5962 = vmatpush2.bf16.msra.mxu0 %v3772
    %5963 = vmatprep.subr.bf16.mxu0 %v3755
    %5964 = vmatpush2.bf16.msra.mxu0 %v3754
    %5965 = vmatprep.subr.bf16.mxu0 %v3737
    %5966 = vmatpush2.bf16.msra.mxu0 %v3736
    %5967 = vmatprep.subr.bf16.mxu0 %v3719
    %5968 = vmatpush2.bf16.msra.mxu0 %v3718
    %5969 = vmatprep.mubr.bf16.mxu0 %v961
    %5970 = vmatmul.mubr.bf16.gmra.mxu0 %v960
    %v5971 = vpop.f32.mrf.mxu0
    %v5972 = vadd.f32 0.0, %v5971
    %v5973 = vpop.f32.mrf.mxu0
    %v5974 = vadd.f32 0.0, %v5973
    %v5975 = vpop.f32.mrf.mxu0
    %v5976 = vadd.f32 0.0, %v5975
    %v5977 = vpop.f32.mrf.mxu0
    %v5978 = vadd.f32 0.0, %v5977
    %5979 = vdwg.mxu0
    %5980 = vmatprep.subr.bf16.mxu0 %v3989
    %5981 = vmatpush1.bf16.msra.mxu0 %v3988
    %5982 = vmatprep.subr.bf16.mxu0 %v3971
    %5983 = vmatpush1.bf16.msra.mxu0 %v3970
    %5984 = vmatprep.subr.bf16.mxu0 %v3953
    %5985 = vmatpush1.bf16.msra.mxu0 %v3952
    %5986 = vmatprep.subr.bf16.mxu0 %v3935
    %5987 = vmatpush1.bf16.msra.mxu0 %v3934
    %5988 = vmatprep.subr.bf16.mxu0 %v3917
    %5989 = vmatpush1.bf16.msra.mxu0 %v3916
    %5990 = vmatprep.subr.bf16.mxu0 %v3899
    %5991 = vmatpush1.bf16.msra.mxu0 %v3898
    %5992 = vmatprep.subr.bf16.mxu0 %v3881
    %5993 = vmatpush1.bf16.msra.mxu0 %v3880
    %5994 = vmatprep.subr.bf16.mxu0 %v3863
    %5995 = vmatpush1.bf16.msra.mxu0 %v3862
    %5996 = vmatprep.subr.bf16.mxu0 %v4133
    %5997 = vmatpush2.bf16.msra.mxu0 %v4132
    %5998 = vmatprep.subr.bf16.mxu0 %v4115
    %5999 = vmatpush2.bf16.msra.mxu0 %v4114
    %6000 = vmatprep.subr.bf16.mxu0 %v4097
    %6001 = vmatpush2.bf16.msra.mxu0 %v4096
    %6002 = vmatprep.subr.bf16.mxu0 %v4079
    %6003 = vmatpush2.bf16.msra.mxu0 %v4078
    %6004 = vmatprep.subr.bf16.mxu0 %v4061
    %6005 = vmatpush2.bf16.msra.mxu0 %v4060
    %6006 = vmatprep.subr.bf16.mxu0 %v4043
    %6007 = vmatpush2.bf16.msra.mxu0 %v4042
    %6008 = vmatprep.subr.bf16.mxu0 %v4025
    %6009 = vmatpush2.bf16.msra.mxu0 %v4024
    %6010 = vmatprep.subr.bf16.mxu0 %v4007
    %6011 = vmatpush2.bf16.msra.mxu0 %v4006
    %6012 = vmatprep.mubr.bf16.mxu0 %v963
    %6013 = vmatmul.mubr.bf16.gmra.mxu0 %v962
    %v6014 = vpop.f32.mrf.mxu0
    %v6015 = vadd.f32 %v5972, %v6014
    %v6016 = vpop.f32.mrf.mxu0
    %v6017 = vadd.f32 %v5974, %v6016
    %v6018 = vpop.f32.mrf.mxu0
    %v6019 = vadd.f32 %v5976, %v6018
    %v6020 = vpop.f32.mrf.mxu0
    %v6021 = vadd.f32 %v5978, %v6020
    %6022 = vdwg.mxu0
    %6023 = vmatprep.subr.bf16.mxu0 %v4277
    %6024 = vmatpush1.bf16.msra.mxu0 %v4276
    %6025 = vmatprep.subr.bf16.mxu0 %v4259
    %6026 = vmatpush1.bf16.msra.mxu0 %v4258
    %6027 = vmatprep.subr.bf16.mxu0 %v4241
    %6028 = vmatpush1.bf16.msra.mxu0 %v4240
    %6029 = vmatprep.subr.bf16.mxu0 %v4223
    %6030 = vmatpush1.bf16.msra.mxu0 %v4222
    %6031 = vmatprep.subr.bf16.mxu0 %v4205
    %6032 = vmatpush1.bf16.msra.mxu0 %v4204
    %6033 = vmatprep.subr.bf16.mxu0 %v4187
    %6034 = vmatpush1.bf16.msra.mxu0 %v4186
    %6035 = vmatprep.subr.bf16.mxu0 %v4169
    %6036 = vmatpush1.bf16.msra.mxu0 %v4168
    %6037 = vmatprep.subr.bf16.mxu0 %v4151
    %6038 = vmatpush1.bf16.msra.mxu0 %v4150
    %6039 = vmatprep.subr.bf16.mxu0 %v4421
    %6040 = vmatpush2.bf16.msra.mxu0 %v4420
    %6041 = vmatprep.subr.bf16.mxu0 %v4403
    %6042 = vmatpush2.bf16.msra.mxu0 %v4402
    %6043 = vmatprep.subr.bf16.mxu0 %v4385
    %6044 = vmatpush2.bf16.msra.mxu0 %v4384
    %6045 = vmatprep.subr.bf16.mxu0 %v4367
    %6046 = vmatpush2.bf16.msra.mxu0 %v4366
    %6047 = vmatprep.subr.bf16.mxu0 %v4349
    %6048 = vmatpush2.bf16.msra.mxu0 %v4348
    %6049 = vmatprep.subr.bf16.mxu0 %v4331
    %6050 = vmatpush2.bf16.msra.mxu0 %v4330
    %6051 = vmatprep.subr.bf16.mxu0 %v4313
    %6052 = vmatpush2.bf16.msra.mxu0 %v4312
    %6053 = vmatprep.subr.bf16.mxu0 %v4295
    %6054 = vmatpush2.bf16.msra.mxu0 %v4294
    %6055 = vmatprep.mubr.bf16.mxu0 %v965
    %6056 = vmatmul.mubr.bf16.gmra.mxu0 %v964
    %v6057 = vpop.f32.mrf.mxu0
    %v6058 = vadd.f32 %v6015, %v6057
    %v6059 = vpop.f32.mrf.mxu0
    %v6060 = vadd.f32 %v6017, %v6059
    %v6061 = vpop.f32.mrf.mxu0
    %v6062 = vadd.f32 %v6019, %v6061
    %v6063 = vpop.f32.mrf.mxu0
    %v6064 = vadd.f32 %v6021, %v6063
    %6065 = vdwg.mxu0
    %6066 = vmatprep.subr.bf16.mxu0 %v3703
    %6067 = vmatpush1.bf16.msra.mxu0 %v3702
    %6068 = vmatprep.subr.bf16.mxu0 %v3685
    %6069 = vmatpush1.bf16.msra.mxu0 %v3684
    %6070 = vmatprep.subr.bf16.mxu0 %v3667
    %6071 = vmatpush1.bf16.msra.mxu0 %v3666
    %6072 = vmatprep.subr.bf16.mxu0 %v3649
    %6073 = vmatpush1.bf16.msra.mxu0 %v3648
    %6074 = vmatprep.subr.bf16.mxu0 %v3631
    %6075 = vmatpush1.bf16.msra.mxu0 %v3630
    %6076 = vmatprep.subr.bf16.mxu0 %v3613
    %6077 = vmatpush1.bf16.msra.mxu0 %v3612
    %6078 = vmatprep.subr.bf16.mxu0 %v3595
    %6079 = vmatpush1.bf16.msra.mxu0 %v3594
    %6080 = vmatprep.subr.bf16.mxu0 %v3577
    %6081 = vmatpush1.bf16.msra.mxu0 %v3576
    %6082 = vmatprep.subr.bf16.mxu0 %v3847
    %6083 = vmatpush2.bf16.msra.mxu0 %v3846
    %6084 = vmatprep.subr.bf16.mxu0 %v3829
    %6085 = vmatpush2.bf16.msra.mxu0 %v3828
    %6086 = vmatprep.subr.bf16.mxu0 %v3811
    %6087 = vmatpush2.bf16.msra.mxu0 %v3810
    %6088 = vmatprep.subr.bf16.mxu0 %v3793
    %6089 = vmatpush2.bf16.msra.mxu0 %v3792
    %6090 = vmatprep.subr.bf16.mxu0 %v3775
    %6091 = vmatpush2.bf16.msra.mxu0 %v3774
    %6092 = vmatprep.subr.bf16.mxu0 %v3757
    %6093 = vmatpush2.bf16.msra.mxu0 %v3756
    %6094 = vmatprep.subr.bf16.mxu0 %v3739
    %6095 = vmatpush2.bf16.msra.mxu0 %v3738
    %6096 = vmatprep.subr.bf16.mxu0 %v3721
    %6097 = vmatpush2.bf16.msra.mxu0 %v3720
    %6098 = vmatprep.mubr.bf16.mxu0 %v961
    %6099 = vmatmul.mubr.bf16.gmra.mxu0 %v960
    %v6100 = vpop.f32.mrf.mxu0
    %v6101 = vadd.f32 0.0, %v6100
    %v6102 = vpop.f32.mrf.mxu0
    %v6103 = vadd.f32 0.0, %v6102
    %v6104 = vpop.f32.mrf.mxu0
    %v6105 = vadd.f32 0.0, %v6104
    %v6106 = vpop.f32.mrf.mxu0
    %v6107 = vadd.f32 0.0, %v6106
    %6108 = vdwg.mxu0
    %6109 = vmatprep.subr.bf16.mxu0 %v3991
    %6110 = vmatpush1.bf16.msra.mxu0 %v3990
    %6111 = vmatprep.subr.bf16.mxu0 %v3973
    %6112 = vmatpush1.bf16.msra.mxu0 %v3972
    %6113 = vmatprep.subr.bf16.mxu0 %v3955
    %6114 = vmatpush1.bf16.msra.mxu0 %v3954
    %6115 = vmatprep.subr.bf16.mxu0 %v3937
    %6116 = vmatpush1.bf16.msra.mxu0 %v3936
    %6117 = vmatprep.subr.bf16.mxu0 %v3919
    %6118 = vmatpush1.bf16.msra.mxu0 %v3918
    %6119 = vmatprep.subr.bf16.mxu0 %v3901
    %6120 = vmatpush1.bf16.msra.mxu0 %v3900
    %6121 = vmatprep.subr.bf16.mxu0 %v3883
    %6122 = vmatpush1.bf16.msra.mxu0 %v3882
    %6123 = vmatprep.subr.bf16.mxu0 %v3865
    %6124 = vmatpush1.bf16.msra.mxu0 %v3864
    %6125 = vmatprep.subr.bf16.mxu0 %v4135
    %6126 = vmatpush2.bf16.msra.mxu0 %v4134
    %6127 = vmatprep.subr.bf16.mxu0 %v4117
    %6128 = vmatpush2.bf16.msra.mxu0 %v4116
    %6129 = vmatprep.subr.bf16.mxu0 %v4099
    %6130 = vmatpush2.bf16.msra.mxu0 %v4098
    %6131 = vmatprep.subr.bf16.mxu0 %v4081
    %6132 = vmatpush2.bf16.msra.mxu0 %v4080
    %6133 = vmatprep.subr.bf16.mxu0 %v4063
    %6134 = vmatpush2.bf16.msra.mxu0 %v4062
    %6135 = vmatprep.subr.bf16.mxu0 %v4045
    %6136 = vmatpush2.bf16.msra.mxu0 %v4044
    %6137 = vmatprep.subr.bf16.mxu0 %v4027
    %6138 = vmatpush2.bf16.msra.mxu0 %v4026
    %6139 = vmatprep.subr.bf16.mxu0 %v4009
    %6140 = vmatpush2.bf16.msra.mxu0 %v4008
    %6141 = vmatprep.mubr.bf16.mxu0 %v963
    %6142 = vmatmul.mubr.bf16.gmra.mxu0 %v962
    %v6143 = vpop.f32.mrf.mxu0
    %v6144 = vadd.f32 %v6101, %v6143
    %v6145 = vpop.f32.mrf.mxu0
    %v6146 = vadd.f32 %v6103, %v6145
    %v6147 = vpop.f32.mrf.mxu0
    %v6148 = vadd.f32 %v6105, %v6147
    %v6149 = vpop.f32.mrf.mxu0
    %v6150 = vadd.f32 %v6107, %v6149
    %6151 = vdwg.mxu0
    %6152 = vmatprep.subr.bf16.mxu0 %v4279
    %6153 = vmatpush1.bf16.msra.mxu0 %v4278
    %6154 = vmatprep.subr.bf16.mxu0 %v4261
    %6155 = vmatpush1.bf16.msra.mxu0 %v4260
    %6156 = vmatprep.subr.bf16.mxu0 %v4243
    %6157 = vmatpush1.bf16.msra.mxu0 %v4242
    %6158 = vmatprep.subr.bf16.mxu0 %v4225
    %6159 = vmatpush1.bf16.msra.mxu0 %v4224
    %6160 = vmatprep.subr.bf16.mxu0 %v4207
    %6161 = vmatpush1.bf16.msra.mxu0 %v4206
    %6162 = vmatprep.subr.bf16.mxu0 %v4189
    %6163 = vmatpush1.bf16.msra.mxu0 %v4188
    %6164 = vmatprep.subr.bf16.mxu0 %v4171
    %6165 = vmatpush1.bf16.msra.mxu0 %v4170
    %6166 = vmatprep.subr.bf16.mxu0 %v4153
    %6167 = vmatpush1.bf16.msra.mxu0 %v4152
    %6168 = vmatprep.subr.bf16.mxu0 %v4423
    %6169 = vmatpush2.bf16.msra.mxu0 %v4422
    %6170 = vmatprep.subr.bf16.mxu0 %v4405
    %6171 = vmatpush2.bf16.msra.mxu0 %v4404
    %6172 = vmatprep.subr.bf16.mxu0 %v4387
    %6173 = vmatpush2.bf16.msra.mxu0 %v4386
    %6174 = vmatprep.subr.bf16.mxu0 %v4369
    %6175 = vmatpush2.bf16.msra.mxu0 %v4368
    %6176 = vmatprep.subr.bf16.mxu0 %v4351
    %6177 = vmatpush2.bf16.msra.mxu0 %v4350
    %6178 = vmatprep.subr.bf16.mxu0 %v4333
    %6179 = vmatpush2.bf16.msra.mxu0 %v4332
    %6180 = vmatprep.subr.bf16.mxu0 %v4315
    %6181 = vmatpush2.bf16.msra.mxu0 %v4314
    %6182 = vmatprep.subr.bf16.mxu0 %v4297
    %6183 = vmatpush2.bf16.msra.mxu0 %v4296
    %6184 = vmatprep.mubr.bf16.mxu0 %v965
    %6185 = vmatmul.mubr.bf16.gmra.mxu0 %v964
    %v6186 = vpop.f32.mrf.mxu0
    %v6187 = vadd.f32 %v6144, %v6186
    %v6188 = vpop.f32.mrf.mxu0
    %v6189 = vadd.f32 %v6146, %v6188
    %v6190 = vpop.f32.mrf.mxu0
    %v6191 = vadd.f32 %v6148, %v6190
    %v6192 = vpop.f32.mrf.mxu0
    %v6193 = vadd.f32 %v6150, %v6192
    %6194 = vdwg.mxu0
    %6195 = vmatprep.subr.bf16.mxu0 %v3705
    %6196 = vmatpush1.bf16.msra.mxu0 %v3704
    %6197 = vmatprep.subr.bf16.mxu0 %v3687
    %6198 = vmatpush1.bf16.msra.mxu0 %v3686
    %6199 = vmatprep.subr.bf16.mxu0 %v3669
    %6200 = vmatpush1.bf16.msra.mxu0 %v3668
    %6201 = vmatprep.subr.bf16.mxu0 %v3651
    %6202 = vmatpush1.bf16.msra.mxu0 %v3650
    %6203 = vmatprep.subr.bf16.mxu0 %v3633
    %6204 = vmatpush1.bf16.msra.mxu0 %v3632
    %6205 = vmatprep.subr.bf16.mxu0 %v3615
    %6206 = vmatpush1.bf16.msra.mxu0 %v3614
    %6207 = vmatprep.subr.bf16.mxu0 %v3597
    %6208 = vmatpush1.bf16.msra.mxu0 %v3596
    %6209 = vmatprep.subr.bf16.mxu0 %v3579
    %6210 = vmatpush1.bf16.msra.mxu0 %v3578
    %6211 = vmatprep.subr.bf16.mxu0 %v3849
    %6212 = vmatpush2.bf16.msra.mxu0 %v3848
    %6213 = vmatprep.subr.bf16.mxu0 %v3831
    %6214 = vmatpush2.bf16.msra.mxu0 %v3830
    %6215 = vmatprep.subr.bf16.mxu0 %v3813
    %6216 = vmatpush2.bf16.msra.mxu0 %v3812
    %6217 = vmatprep.subr.bf16.mxu0 %v3795
    %6218 = vmatpush2.bf16.msra.mxu0 %v3794
    %6219 = vmatprep.subr.bf16.mxu0 %v3777
    %6220 = vmatpush2.bf16.msra.mxu0 %v3776
    %6221 = vmatprep.subr.bf16.mxu0 %v3759
    %6222 = vmatpush2.bf16.msra.mxu0 %v3758
    %6223 = vmatprep.subr.bf16.mxu0 %v3741
    %6224 = vmatpush2.bf16.msra.mxu0 %v3740
    %6225 = vmatprep.subr.bf16.mxu0 %v3723
    %6226 = vmatpush2.bf16.msra.mxu0 %v3722
    %6227 = vmatprep.mubr.bf16.mxu0 %v961
    %6228 = vmatmul.mubr.bf16.gmra.mxu0 %v960
    %v6229 = vpop.f32.mrf.mxu0
    %v6230 = vadd.f32 0.0, %v6229
    %v6231 = vpop.f32.mrf.mxu0
    %v6232 = vadd.f32 0.0, %v6231
    %v6233 = vpop.f32.mrf.mxu0
    %v6234 = vadd.f32 0.0, %v6233
    %v6235 = vpop.f32.mrf.mxu0
    %v6236 = vadd.f32 0.0, %v6235
    %6237 = vdwg.mxu0
    %6238 = vmatprep.subr.bf16.mxu0 %v3993
    %6239 = vmatpush1.bf16.msra.mxu0 %v3992
    %6240 = vmatprep.subr.bf16.mxu0 %v3975
    %6241 = vmatpush1.bf16.msra.mxu0 %v3974
    %6242 = vmatprep.subr.bf16.mxu0 %v3957
    %6243 = vmatpush1.bf16.msra.mxu0 %v3956
    %6244 = vmatprep.subr.bf16.mxu0 %v3939
    %6245 = vmatpush1.bf16.msra.mxu0 %v3938
    %6246 = vmatprep.subr.bf16.mxu0 %v3921
    %6247 = vmatpush1.bf16.msra.mxu0 %v3920
    %6248 = vmatprep.subr.bf16.mxu0 %v3903
    %6249 = vmatpush1.bf16.msra.mxu0 %v3902
    %6250 = vmatprep.subr.bf16.mxu0 %v3885
    %6251 = vmatpush1.bf16.msra.mxu0 %v3884
    %6252 = vmatprep.subr.bf16.mxu0 %v3867
    %6253 = vmatpush1.bf16.msra.mxu0 %v3866
    %6254 = vmatprep.subr.bf16.mxu0 %v4137
    %6255 = vmatpush2.bf16.msra.mxu0 %v4136
    %6256 = vmatprep.subr.bf16.mxu0 %v4119
    %6257 = vmatpush2.bf16.msra.mxu0 %v4118
    %6258 = vmatprep.subr.bf16.mxu0 %v4101
    %6259 = vmatpush2.bf16.msra.mxu0 %v4100
    %6260 = vmatprep.subr.bf16.mxu0 %v4083
    %6261 = vmatpush2.bf16.msra.mxu0 %v4082
    %6262 = vmatprep.subr.bf16.mxu0 %v4065
    %6263 = vmatpush2.bf16.msra.mxu0 %v4064
    %6264 = vmatprep.subr.bf16.mxu0 %v4047
    %6265 = vmatpush2.bf16.msra.mxu0 %v4046
    %6266 = vmatprep.subr.bf16.mxu0 %v4029
    %6267 = vmatpush2.bf16.msra.mxu0 %v4028
    %6268 = vmatprep.subr.bf16.mxu0 %v4011
    %6269 = vmatpush2.bf16.msra.mxu0 %v4010
    %6270 = vmatprep.mubr.bf16.mxu0 %v963
    %6271 = vmatmul.mubr.bf16.gmra.mxu0 %v962
    %v6272 = vpop.f32.mrf.mxu0
    %v6273 = vadd.f32 %v6230, %v6272
    %v6274 = vpop.f32.mrf.mxu0
    %v6275 = vadd.f32 %v6232, %v6274
    %v6276 = vpop.f32.mrf.mxu0
    %v6277 = vadd.f32 %v6234, %v6276
    %v6278 = vpop.f32.mrf.mxu0
    %v6279 = vadd.f32 %v6236, %v6278
    %6280 = vdwg.mxu0
    %6281 = vmatprep.subr.bf16.mxu0 %v4281
    %6282 = vmatpush1.bf16.msra.mxu0 %v4280
    %6283 = vmatprep.subr.bf16.mxu0 %v4263
    %6284 = vmatpush1.bf16.msra.mxu0 %v4262
    %6285 = vmatprep.subr.bf16.mxu0 %v4245
    %6286 = vmatpush1.bf16.msra.mxu0 %v4244
    %6287 = vmatprep.subr.bf16.mxu0 %v4227
    %6288 = vmatpush1.bf16.msra.mxu0 %v4226
    %6289 = vmatprep.subr.bf16.mxu0 %v4209
    %6290 = vmatpush1.bf16.msra.mxu0 %v4208
    %6291 = vmatprep.subr.bf16.mxu0 %v4191
    %6292 = vmatpush1.bf16.msra.mxu0 %v4190
    %6293 = vmatprep.subr.bf16.mxu0 %v4173
    %6294 = vmatpush1.bf16.msra.mxu0 %v4172
    %6295 = vmatprep.subr.bf16.mxu0 %v4155
    %6296 = vmatpush1.bf16.msra.mxu0 %v4154
    %6297 = vmatprep.subr.bf16.mxu0 %v4425
    %6298 = vmatpush2.bf16.msra.mxu0 %v4424
    %6299 = vmatprep.subr.bf16.mxu0 %v4407
    %6300 = vmatpush2.bf16.msra.mxu0 %v4406
    %6301 = vmatprep.subr.bf16.mxu0 %v4389
    %6302 = vmatpush2.bf16.msra.mxu0 %v4388
    %6303 = vmatprep.subr.bf16.mxu0 %v4371
    %6304 = vmatpush2.bf16.msra.mxu0 %v4370
    %6305 = vmatprep.subr.bf16.mxu0 %v4353
    %6306 = vmatpush2.bf16.msra.mxu0 %v4352
    %6307 = vmatprep.subr.bf16.mxu0 %v4335
    %6308 = vmatpush2.bf16.msra.mxu0 %v4334
    %6309 = vmatprep.subr.bf16.mxu0 %v4317
    %6310 = vmatpush2.bf16.msra.mxu0 %v4316
    %6311 = vmatprep.subr.bf16.mxu0 %v4299
    %6312 = vmatpush2.bf16.msra.mxu0 %v4298
    %6313 = vmatprep.mubr.bf16.mxu0 %v965
    %6314 = vmatmul.mubr.bf16.gmra.mxu0 %v964
    %v6315 = vpop.f32.mrf.mxu0
    %v6316 = vadd.f32 %v6273, %v6315
    %v6317 = vpop.f32.mrf.mxu0
    %v6318 = vadd.f32 %v6275, %v6317
    %v6319 = vpop.f32.mrf.mxu0
    %v6320 = vadd.f32 %v6277, %v6319
    %v6321 = vpop.f32.mrf.mxu0
    %v6322 = vadd.f32 %v6279, %v6321
    %6323 = vdwg.mxu0
    %6324 = vmatprep.subr.bf16.mxu0 %v3707
    %6325 = vmatpush1.bf16.msra.mxu0 %v3706
    %6326 = vmatprep.subr.bf16.mxu0 %v3689
    %6327 = vmatpush1.bf16.msra.mxu0 %v3688
    %6328 = vmatprep.subr.bf16.mxu0 %v3671
    %6329 = vmatpush1.bf16.msra.mxu0 %v3670
    %6330 = vmatprep.subr.bf16.mxu0 %v3653
    %6331 = vmatpush1.bf16.msra.mxu0 %v3652
    %6332 = vmatprep.subr.bf16.mxu0 %v3635
    %6333 = vmatpush1.bf16.msra.mxu0 %v3634
    %6334 = vmatprep.subr.bf16.mxu0 %v3617
    %6335 = vmatpush1.bf16.msra.mxu0 %v3616
    %6336 = vmatprep.subr.bf16.mxu0 %v3599
    %6337 = vmatpush1.bf16.msra.mxu0 %v3598
    %6338 = vmatprep.subr.bf16.mxu0 %v3581
    %6339 = vmatpush1.bf16.msra.mxu0 %v3580
    %6340 = vmatprep.subr.bf16.mxu0 %v3851
    %6341 = vmatpush2.bf16.msra.mxu0 %v3850
    %6342 = vmatprep.subr.bf16.mxu0 %v3833
    %6343 = vmatpush2.bf16.msra.mxu0 %v3832
    %6344 = vmatprep.subr.bf16.mxu0 %v3815
    %6345 = vmatpush2.bf16.msra.mxu0 %v3814
    %6346 = vmatprep.subr.bf16.mxu0 %v3797
    %6347 = vmatpush2.bf16.msra.mxu0 %v3796
    %6348 = vmatprep.subr.bf16.mxu0 %v3779
    %6349 = vmatpush2.bf16.msra.mxu0 %v3778
    %6350 = vmatprep.subr.bf16.mxu0 %v3761
    %6351 = vmatpush2.bf16.msra.mxu0 %v3760
    %6352 = vmatprep.subr.bf16.mxu0 %v3743
    %6353 = vmatpush2.bf16.msra.mxu0 %v3742
    %6354 = vmatprep.subr.bf16.mxu0 %v3725
    %6355 = vmatpush2.bf16.msra.mxu0 %v3724
    %6356 = vmatprep.mubr.bf16.mxu0 %v961
    %6357 = vmatmul.mubr.bf16.gmra.mxu0 %v960
    %v6358 = vpop.f32.mrf.mxu0
    %v6359 = vadd.f32 0.0, %v6358
    %v6360 = vpop.f32.mrf.mxu0
    %v6361 = vadd.f32 0.0, %v6360
    %v6362 = vpop.f32.mrf.mxu0
    %v6363 = vadd.f32 0.0, %v6362
    %v6364 = vpop.f32.mrf.mxu0
    %v6365 = vadd.f32 0.0, %v6364
    %6366 = vdwg.mxu0
    %6367 = vmatprep.subr.bf16.mxu0 %v3995
    %6368 = vmatpush1.bf16.msra.mxu0 %v3994
    %6369 = vmatprep.subr.bf16.mxu0 %v3977
    %6370 = vmatpush1.bf16.msra.mxu0 %v3976
    %6371 = vmatprep.subr.bf16.mxu0 %v3959
    %6372 = vmatpush1.bf16.msra.mxu0 %v3958
    %6373 = vmatprep.subr.bf16.mxu0 %v3941
    %6374 = vmatpush1.bf16.msra.mxu0 %v3940
    %6375 = vmatprep.subr.bf16.mxu0 %v3923
    %6376 = vmatpush1.bf16.msra.mxu0 %v3922
    %6377 = vmatprep.subr.bf16.mxu0 %v3905
    %6378 = vmatpush1.bf16.msra.mxu0 %v3904
    %6379 = vmatprep.subr.bf16.mxu0 %v3887
    %6380 = vmatpush1.bf16.msra.mxu0 %v3886
    %6381 = vmatprep.subr.bf16.mxu0 %v3869
    %6382 = vmatpush1.bf16.msra.mxu0 %v3868
    %6383 = vmatprep.subr.bf16.mxu0 %v4139
    %6384 = vmatpush2.bf16.msra.mxu0 %v4138
    %6385 = vmatprep.subr.bf16.mxu0 %v4121
    %6386 = vmatpush2.bf16.msra.mxu0 %v4120
    %6387 = vmatprep.subr.bf16.mxu0 %v4103
    %6388 = vmatpush2.bf16.msra.mxu0 %v4102
    %6389 = vmatprep.subr.bf16.mxu0 %v4085
    %6390 = vmatpush2.bf16.msra.mxu0 %v4084
    %6391 = vmatprep.subr.bf16.mxu0 %v4067
    %6392 = vmatpush2.bf16.msra.mxu0 %v4066
    %6393 = vmatprep.subr.bf16.mxu0 %v4049
    %6394 = vmatpush2.bf16.msra.mxu0 %v4048
    %6395 = vmatprep.subr.bf16.mxu0 %v4031
    %6396 = vmatpush2.bf16.msra.mxu0 %v4030
    %6397 = vmatprep.subr.bf16.mxu0 %v4013
    %6398 = vmatpush2.bf16.msra.mxu0 %v4012
    %6399 = vmatprep.mubr.bf16.mxu0 %v963
    %6400 = vmatmul.mubr.bf16.gmra.mxu0 %v962
    %v6401 = vpop.f32.mrf.mxu0
    %v6402 = vadd.f32 %v6359, %v6401
    %v6403 = vpop.f32.mrf.mxu0
    %v6404 = vadd.f32 %v6361, %v6403
    %v6405 = vpop.f32.mrf.mxu0
    %v6406 = vadd.f32 %v6363, %v6405
    %v6407 = vpop.f32.mrf.mxu0
    %v6408 = vadd.f32 %v6365, %v6407
    %6409 = vdwg.mxu0
    %6410 = vmatprep.subr.bf16.mxu0 %v4283
    %6411 = vmatpush1.bf16.msra.mxu0 %v4282
    %6412 = vmatprep.subr.bf16.mxu0 %v4265
    %6413 = vmatpush1.bf16.msra.mxu0 %v4264
    %6414 = vmatprep.subr.bf16.mxu0 %v4247
    %6415 = vmatpush1.bf16.msra.mxu0 %v4246
    %6416 = vmatprep.subr.bf16.mxu0 %v4229
    %6417 = vmatpush1.bf16.msra.mxu0 %v4228
    %6418 = vmatprep.subr.bf16.mxu0 %v4211
    %6419 = vmatpush1.bf16.msra.mxu0 %v4210
    %6420 = vmatprep.subr.bf16.mxu0 %v4193
    %6421 = vmatpush1.bf16.msra.mxu0 %v4192
    %6422 = vmatprep.subr.bf16.mxu0 %v4175
    %6423 = vmatpush1.bf16.msra.mxu0 %v4174
    %6424 = vmatprep.subr.bf16.mxu0 %v4157
    %6425 = vmatpush1.bf16.msra.mxu0 %v4156
    %6426 = vmatprep.subr.bf16.mxu0 %v4427
    %6427 = vmatpush2.bf16.msra.mxu0 %v4426
    %6428 = vmatprep.subr.bf16.mxu0 %v4409
    %6429 = vmatpush2.bf16.msra.mxu0 %v4408
    %6430 = vmatprep.subr.bf16.mxu0 %v4391
    %6431 = vmatpush2.bf16.msra.mxu0 %v4390
    %6432 = vmatprep.subr.bf16.mxu0 %v4373
    %6433 = vmatpush2.bf16.msra.mxu0 %v4372
    %6434 = vmatprep.subr.bf16.mxu0 %v4355
    %6435 = vmatpush2.bf16.msra.mxu0 %v4354
    %6436 = vmatprep.subr.bf16.mxu0 %v4337
    %6437 = vmatpush2.bf16.msra.mxu0 %v4336
    %6438 = vmatprep.subr.bf16.mxu0 %v4319
    %6439 = vmatpush2.bf16.msra.mxu0 %v4318
    %6440 = vmatprep.subr.bf16.mxu0 %v4301
    %6441 = vmatpush2.bf16.msra.mxu0 %v4300
    %6442 = vmatprep.mubr.bf16.mxu0 %v965
    %6443 = vmatmul.mubr.bf16.gmra.mxu0 %v964
    %v6444 = vpop.f32.mrf.mxu0
    %v6445 = vadd.f32 %v6402, %v6444
    %v6446 = vpop.f32.mrf.mxu0
    %v6447 = vadd.f32 %v6404, %v6446
    %v6448 = vpop.f32.mrf.mxu0
    %v6449 = vadd.f32 %v6406, %v6448
    %v6450 = vpop.f32.mrf.mxu0
    %v6451 = vadd.f32 %v6408, %v6450
    %6452 = vdwg.mxu0
    %v6453 = vld [vmem:[#allocation7] sm:$0x3f]
    %v6454 = vld [vmem:[%s3] sm:$0xff]
    %v6455 = vld [vmem:[%s3 + $0x8] sm:$0xff]
    %v6456 = vld [vmem:[%s3 + $0x10] sm:$0xff]
    %v6457 = vld [vmem:[%s3 + $0x18] sm:$0xff]
    %v6458 = vld [vmem:[%s3 + $0x20] sm:$0xff]
    %v6459 = vld [vmem:[%s3 + $0x28] sm:$0xff]
    %v6460 = vld [vmem:[%s3 + $0x30] sm:$0xff]
    %v6461 = vld [vmem:[%s3 + $0x38] sm:$0xff]
    %v6462 = vld [vmem:[%s3 + $0x40] sm:$0xff]
    %v6463 = vld [vmem:[%s3 + $0x48] sm:$0xff]
    %v6464 = vld [vmem:[%s3 + $0x50] sm:$0xff]
    %v6465 = vld [vmem:[%s3 + $0x58] sm:$0xff]
    %v6466 = vld [vmem:[%s3 + $0x60] sm:$0xff]
    %v6467 = vld [vmem:[%s3 + $0x68] sm:$0xff]
    %v6468 = vld [vmem:[%s3 + $0x70] sm:$0xff]
    %v6469 = vld [vmem:[%s3 + $0x78] sm:$0xff]
    %v6470 = vld [vmem:[%s3 + $0x80] sm:$0xff]
    %v6471 = vld [vmem:[%s3 + $0x88] sm:$0xff]
    %v6472 = vld [vmem:[%s3 + $0x90] sm:$0xff]
    %v6473 = vld [vmem:[%s3 + $0x98] sm:$0xff]
    %v6474 = vld [vmem:[%s3 + $0xa0] sm:$0xff]
    %v6475 = vld [vmem:[%s3 + $0xa8] sm:$0xff]
    %v6476 = vld [vmem:[%s3 + $0xb0] sm:$0xff]
    %v6477 = vld [vmem:[%s3 + $0xb8] sm:$0xff]
    %v6478 = vld [vmem:[%s3 + $0xc0] sm:$0xff]
    %v6479 = vld [vmem:[%s3 + $0xc8] sm:$0xff]
    %v6480 = vld [vmem:[%s3 + $0xd0] sm:$0xff]
    %v6481 = vld [vmem:[%s3 + $0xd8] sm:$0xff]
    %v6482 = vld [vmem:[%s3 + $0xe0] sm:$0xff]
    %v6483 = vld [vmem:[%s3 + $0xe8] sm:$0xff]
    %v6484 = vld [vmem:[%s3 + $0xf0] sm:$0xff]
    %v6485 = vld [vmem:[%s3 + $0xf8] sm:$0xff]
    %v6486 = vld [vmem:[%s3 + $0x100] sm:$0xff]
    %v6487 = vld [vmem:[%s3 + $0x108] sm:$0xff]
    %v6488 = vld [vmem:[%s3 + $0x110] sm:$0xff]
    %v6489 = vld [vmem:[%s3 + $0x118] sm:$0xff]
    %v6490 = vld [vmem:[%s3 + $0x120] sm:$0xff]
    %v6491 = vld [vmem:[%s3 + $0x128] sm:$0xff]
    %v6492 = vld [vmem:[%s3 + $0x130] sm:$0xff]
    %v6493 = vld [vmem:[%s3 + $0x138] sm:$0xff]
    %v6494 = vld [vmem:[%s3 + $0x140] sm:$0xff]
    %v6495 = vld [vmem:[%s3 + $0x148] sm:$0xff]
    %v6496 = vld [vmem:[%s3 + $0x150] sm:$0xff]
    %v6497 = vld [vmem:[%s3 + $0x158] sm:$0xff]
    %v6498 = vld [vmem:[%s3 + $0x160] sm:$0xff]
    %v6499 = vld [vmem:[%s3 + $0x168] sm:$0xff]
    %v6500 = vld [vmem:[%s3 + $0x170] sm:$0xff]
    %v6501 = vld [vmem:[%s3 + $0x178] sm:$0xff]
    %v6502 = vld [vmem:[%s3 + $0x180] sm:$0xff]
    %v6503 = vld [vmem:[%s3 + $0x188] sm:$0xff]
    %v6504 = vld [vmem:[%s3 + $0x190] sm:$0xff]
    %v6505 = vld [vmem:[%s3 + $0x198] sm:$0xff]
    %v6506 = vld [vmem:[%s3 + $0x1a0] sm:$0xff]
    %v6507 = vld [vmem:[%s3 + $0x1a8] sm:$0xff]
    %v6508 = vld [vmem:[%s3 + $0x1b0] sm:$0xff]
    %v6509 = vld [vmem:[%s3 + $0x1b8] sm:$0xff]
    %v6510 = vld [vmem:[%s3 + $0x1c0] sm:$0xff]
    %v6511 = vld [vmem:[%s3 + $0x1c8] sm:$0xff]
    %v6512 = vld [vmem:[%s3 + $0x1d0] sm:$0xff]
    %v6513 = vld [vmem:[%s3 + $0x1d8] sm:$0xff]
    %v6514 = vld [vmem:[%s3 + $0x1e0] sm:$0xff]
    %v6515 = vld [vmem:[%s3 + $0x1e8] sm:$0xff]
    %v6516 = vld [vmem:[%s3 + $0x1f0] sm:$0xff]
    %v6517 = vld [vmem:[%s3 + $0x1f8] sm:$0xff]
    %v6518 = vld [vmem:[%s3 + $0x200] sm:$0xff]
    %v6519 = vld [vmem:[%s3 + $0x208] sm:$0xff]
    %v6520 = vld [vmem:[%s3 + $0x210] sm:$0xff]
    %v6521 = vld [vmem:[%s3 + $0x218] sm:$0xff]
    %v6522 = vld [vmem:[%s3 + $0x220] sm:$0xff]
    %v6523 = vld [vmem:[%s3 + $0x228] sm:$0xff]
    %v6524 = vld [vmem:[%s3 + $0x230] sm:$0xff]
    %v6525 = vld [vmem:[%s3 + $0x238] sm:$0xff]
    %v6526 = vld [vmem:[%s3 + $0x240] sm:$0xff]
    %v6527 = vld [vmem:[%s3 + $0x248] sm:$0xff]
    %v6528 = vld [vmem:[%s3 + $0x250] sm:$0xff]
    %v6529 = vld [vmem:[%s3 + $0x258] sm:$0xff]
    %v6530 = vld [vmem:[%s3 + $0x260] sm:$0xff]
    %v6531 = vld [vmem:[%s3 + $0x268] sm:$0xff]
    %v6532 = vld [vmem:[%s3 + $0x270] sm:$0xff]
    %v6533 = vld [vmem:[%s3 + $0x278] sm:$0xff]
    %v6534 = vld [vmem:[%s3 + $0x280] sm:$0xff]
    %v6535 = vld [vmem:[%s3 + $0x288] sm:$0xff]
    %v6536 = vld [vmem:[%s3 + $0x290] sm:$0xff]
    %v6537 = vld [vmem:[%s3 + $0x298] sm:$0xff]
    %v6538 = vld [vmem:[%s3 + $0x2a0] sm:$0xff]
    %v6539 = vld [vmem:[%s3 + $0x2a8] sm:$0xff]
    %v6540 = vld [vmem:[%s3 + $0x2b0] sm:$0xff]
    %v6541 = vld [vmem:[%s3 + $0x2b8] sm:$0xff]
    %v6542 = vld [vmem:[%s3 + $0x2c0] sm:$0xff]
    %v6543 = vld [vmem:[%s3 + $0x2c8] sm:$0xff]
    %v6544 = vld [vmem:[%s3 + $0x2d0] sm:$0xff]
    %v6545 = vld [vmem:[%s3 + $0x2d8] sm:$0xff]
    %v6546 = vld [vmem:[%s3 + $0x2e0] sm:$0xff]
    %v6547 = vld [vmem:[%s3 + $0x2e8] sm:$0xff]
    %v6548 = vld [vmem:[%s3 + $0x2f0] sm:$0xff]
    %v6549 = vld [vmem:[%s3 + $0x2f8] sm:$0xff]
    %v6550 = vld [vmem:[#allocation8] sm:$0x1]
    %v6555 = vrot.slane %v5542, 1
    %v6556 = vrot.slane %v5544, 1
    %v6557 = vrot.slane %v5546, 1
    %v6558 = vrot.slane %v5548, 1
    %v6563 = vadd.f32 %v5413, %v6555
    %v6564 = vadd.f32 %v5415, %v6556
    %v6565 = vadd.f32 %v5417, %v6557
    %v6566 = vadd.f32 %v5419, %v6558
    %v6568 = vlaneseq
    %v6569 = vshrl.u32 %v6568, 7
    %v6570 = vsub.s32 0, %v6569
    %v6571 = vrot.slane %v6453, %v6570
    %v6572 = vlaneseq
    %v6573 = vshrl.u32 %v6572, 7
    %v6574 = vsub.s32 1, %v6573
    %v6575 = vrot.slane %v6453, %v6574
    %v6578 = vadd.f32 %v6563, %v6571
    %v6579 = vadd.f32 %v6564, %v6575
    %v6580 = vadd.f32 %v6565, %v6571
    %v6581 = vadd.f32 %v6566, %v6575
    %v6582 = vmax.f32 %v6578, 0.0
    %v6583 = vmax.f32 %v6579, 0.0
    %v6584 = vmax.f32 %v6580, 0.0
    %v6585 = vmax.f32 %v6581, 0.0
    %vm6586 = vcmask 1046528
    %v6587 = vsel %vm6586, %v6582, -inf
    %v6588 = vrot.slane %v6587, 4
    %v6589 = vmax.f32 %v6587, %v6588
    %v6590 = vrot.slane %v6589, 2
    %v6591 = vmax.f32 %v6589, %v6590
    %v6592 = vrot.slane %v6591, 1
    %v6593 = vmax.f32 %v6591, %v6592
    %v6594 = vsel %vm6586, %v6583, -inf
    %v6595 = vrot.slane %v6594, 4
    %v6596 = vmax.f32 %v6594, %v6595
    %v6597 = vrot.slane %v6596, 2
    %v6598 = vmax.f32 %v6596, %v6597
    %v6599 = vrot.slane %v6598, 1
    %v6600 = vmax.f32 %v6598, %v6599
    %v6601 = vsel %vm6586, %v6584, -inf
    %v6602 = vrot.slane %v6601, 4
    %v6603 = vmax.f32 %v6601, %v6602
    %v6604 = vrot.slane %v6603, 2
    %v6605 = vmax.f32 %v6603, %v6604
    %v6606 = vrot.slane %v6605, 1
    %v6607 = vmax.f32 %v6605, %v6606
    %v6608 = vsel %vm6586, %v6585, -inf
    %v6609 = vrot.slane %v6608, 4
    %v6610 = vmax.f32 %v6608, %v6609
    %v6611 = vrot.slane %v6610, 2
    %v6612 = vmax.f32 %v6610, %v6611
    %v6613 = vrot.slane %v6612, 1
    %v6614 = vmax.f32 %v6612, %v6613
    %vm6619 = vcmask 1041409
    %v6620 = vsel %vm6619, %v6607, %v6593
    %v6621 = vsel %vm6619, %v6614, %v6600
    %6624 = vmatprep.subr.mxu0 0.0
    %6625 = vmatpush1.msra.mxu0 %v6469
    %6626 = vmatprep.subr.mxu0 0.0
    %6627 = vmatpush1.msra.mxu0 %v6468
    %6628 = vmatprep.subr.mxu0 0.0
    %6629 = vmatpush1.msra.mxu0 %v6467
    %6630 = vmatprep.subr.mxu0 0.0
    %6631 = vmatpush1.msra.mxu0 %v6466
    %6632 = vmatprep.subr.mxu0 0.0
    %6633 = vmatpush1.msra.mxu0 %v6465
    %6634 = vmatprep.subr.mxu0 0.0
    %6635 = vmatpush1.msra.mxu0 %v6464
    %6636 = vmatprep.subr.mxu0 0.0
    %6637 = vmatpush1.msra.mxu0 %v6463
    %6638 = vmatprep.subr.mxu0 0.0
    %6639 = vmatpush1.msra.mxu0 %v6462
    %6640 = vmatprep.subr.mxu0 0.0
    %6641 = vmatpush1.msra.mxu0 %v6461
    %6642 = vmatprep.subr.mxu0 0.0
    %6643 = vmatpush1.msra.mxu0 %v6460
    %6644 = vmatprep.subr.mxu0 0.0
    %6645 = vmatpush1.msra.mxu0 %v6459
    %6646 = vmatprep.subr.mxu0 0.0
    %6647 = vmatpush1.msra.mxu0 %v6458
    %6648 = vmatprep.subr.mxu0 0.0
    %6649 = vmatpush1.msra.mxu0 %v6457
    %6650 = vmatprep.subr.mxu0 0.0
    %6651 = vmatpush1.msra.mxu0 %v6456
    %6652 = vmatprep.subr.mxu0 0.0
    %6653 = vmatpush1.msra.mxu0 %v6455
    %6654 = vmatprep.subr.mxu0 0.0
    %6655 = vmatpush1.msra.mxu0 %v6454
    %6656 = vmatprep.subr.mxu0 0.0
    %6657 = vmatpush2.msra.mxu0 %v6485
    %6658 = vmatprep.subr.mxu0 0.0
    %6659 = vmatpush2.msra.mxu0 %v6484
    %6660 = vmatprep.subr.mxu0 0.0
    %6661 = vmatpush2.msra.mxu0 %v6483
    %6662 = vmatprep.subr.mxu0 0.0
    %6663 = vmatpush2.msra.mxu0 %v6482
    %6664 = vmatprep.subr.mxu0 0.0
    %6665 = vmatpush2.msra.mxu0 %v6481
    %6666 = vmatprep.subr.mxu0 0.0
    %6667 = vmatpush2.msra.mxu0 %v6480
    %6668 = vmatprep.subr.mxu0 0.0
    %6669 = vmatpush2.msra.mxu0 %v6479
    %6670 = vmatprep.subr.mxu0 0.0
    %6671 = vmatpush2.msra.mxu0 %v6478
    %6672 = vmatprep.subr.mxu0 0.0
    %6673 = vmatpush2.msra.mxu0 %v6477
    %6674 = vmatprep.subr.mxu0 0.0
    %6675 = vmatpush2.msra.mxu0 %v6476
    %6676 = vmatprep.subr.mxu0 0.0
    %6677 = vmatpush2.msra.mxu0 %v6475
    %6678 = vmatprep.subr.mxu0 0.0
    %6679 = vmatpush2.msra.mxu0 %v6474
    %6680 = vmatprep.subr.mxu0 0.0
    %6681 = vmatpush2.msra.mxu0 %v6473
    %6682 = vmatprep.subr.mxu0 0.0
    %6683 = vmatpush2.msra.mxu0 %v6472
    %6684 = vmatprep.subr.mxu0 0.0
    %6685 = vmatpush2.msra.mxu0 %v6471
    %6686 = vmatprep.subr.mxu0 0.0
    %6687 = vmatpush2.msra.mxu0 %v6470
    %6688 = vmatprep.mubr.f32.mxu0 %v6621
    %6689 = vmatmul.mubr.f32.gmra.mxu0 %v6620
    %v6690 = vpop.f32.mrf.mxu0
    %v6691 = vadd.f32 0.0, %v6690
    %v6692 = vpop.f32.mrf.mxu0
    %6693 = vdwg.mxu0
    %v6695 = vlaneseq
    %v6696 = vshrl.u32 %v6695, 7
    %v6697 = vsub.s32 0, %v6696
    %v6698 = vrot.slane %v6550, %v6697
    %v6700 = vadd.f32 %v6698, %v6691
    %v6705 = vrot.slane %v5800, 1
    %v6706 = vrot.slane %v5802, 1
    %v6707 = vrot.slane %v5804, 1
    %v6708 = vrot.slane %v5806, 1
    %v6713 = vadd.f32 %v5671, %v6705
    %v6714 = vadd.f32 %v5673, %v6706
    %v6715 = vadd.f32 %v5675, %v6707
    %v6716 = vadd.f32 %v5677, %v6708
    %v6721 = vrot.slane %v5929, 2
    %v6722 = vrot.slane %v5931, 2
    %v6723 = vrot.slane %v5933, 2
    %v6724 = vrot.slane %v5935, 2
    %v6729 = vadd.f32 %v6713, %v6721
    %v6730 = vadd.f32 %v6714, %v6722
    %v6731 = vadd.f32 %v6715, %v6723
    %v6732 = vadd.f32 %v6716, %v6724
    %v6733 = vrot.slane %v6453, 2
    %v6734 = vlaneseq
    %v6735 = vshrl.u32 %v6734, 7
    %v6736 = vsub.s32 0, %v6735
    %v6737 = vrot.slane %v6733, %v6736
    %v6738 = vlaneseq
    %v6739 = vshrl.u32 %v6738, 7
    %v6740 = vsub.s32 1, %v6739
    %v6741 = vrot.slane %v6733, %v6740
    %v6744 = vadd.f32 %v6729, %v6737
    %v6745 = vadd.f32 %v6730, %v6741
    %v6746 = vadd.f32 %v6731, %v6737
    %v6747 = vadd.f32 %v6732, %v6741
    %v6748 = vmax.f32 %v6744, 0.0
    %v6749 = vmax.f32 %v6745, 0.0
    %v6750 = vmax.f32 %v6746, 0.0
    %v6751 = vmax.f32 %v6747, 0.0
    %vm6752 = vcmask 1045504
    %v6753 = vsel %vm6752, %v6748, -inf
    %v6754 = vrot.slane %v6753, 4
    %v6755 = vmax.f32 %v6753, %v6754
    %v6756 = vrot.slane %v6755, 2
    %v6757 = vmax.f32 %v6755, %v6756
    %v6758 = vrot.slane %v6757, 1
    %v6759 = vmax.f32 %v6757, %v6758
    %v6760 = vsel %vm6752, %v6749, -inf
    %v6761 = vrot.slane %v6760, 4
    %v6762 = vmax.f32 %v6760, %v6761
    %v6763 = vrot.slane %v6762, 2
    %v6764 = vmax.f32 %v6762, %v6763
    %v6765 = vrot.slane %v6764, 1
    %v6766 = vmax.f32 %v6764, %v6765
    %v6767 = vsel %vm6752, %v6750, -inf
    %v6768 = vrot.slane %v6767, 4
    %v6769 = vmax.f32 %v6767, %v6768
    %v6770 = vrot.slane %v6769, 2
    %v6771 = vmax.f32 %v6769, %v6770
    %v6772 = vrot.slane %v6771, 1
    %v6773 = vmax.f32 %v6771, %v6772
    %v6774 = vsel %vm6752, %v6751, -inf
    %v6775 = vrot.slane %v6774, 4
    %v6776 = vmax.f32 %v6774, %v6775
    %v6777 = vrot.slane %v6776, 2
    %v6778 = vmax.f32 %v6776, %v6777
    %v6779 = vrot.slane %v6778, 1
    %v6780 = vmax.f32 %v6778, %v6779
    %v6785 = vsel %vm6619, %v6773, %v6759
    %v6786 = vsel %vm6619, %v6780, %v6766
    %6789 = vmatprep.subr.mxu0 0.0
    %6790 = vmatpush1.msra.mxu0 %v6501
    %6791 = vmatprep.subr.mxu0 0.0
    %6792 = vmatpush1.msra.mxu0 %v6500
    %6793 = vmatprep.subr.mxu0 0.0
    %6794 = vmatpush1.msra.mxu0 %v6499
    %6795 = vmatprep.subr.mxu0 0.0
    %6796 = vmatpush1.msra.mxu0 %v6498
    %6797 = vmatprep.subr.mxu0 0.0
    %6798 = vmatpush1.msra.mxu0 %v6497
    %6799 = vmatprep.subr.mxu0 0.0
    %6800 = vmatpush1.msra.mxu0 %v6496
    %6801 = vmatprep.subr.mxu0 0.0
    %6802 = vmatpush1.msra.mxu0 %v6495
    %6803 = vmatprep.subr.mxu0 0.0
    %6804 = vmatpush1.msra.mxu0 %v6494
    %6805 = vmatprep.subr.mxu0 0.0
    %6806 = vmatpush1.msra.mxu0 %v6493
    %6807 = vmatprep.subr.mxu0 0.0
    %6808 = vmatpush1.msra.mxu0 %v6492
    %6809 = vmatprep.subr.mxu0 0.0
    %6810 = vmatpush1.msra.mxu0 %v6491
    %6811 = vmatprep.subr.mxu0 0.0
    %6812 = vmatpush1.msra.mxu0 %v6490
    %6813 = vmatprep.subr.mxu0 0.0
    %6814 = vmatpush1.msra.mxu0 %v6489
    %6815 = vmatprep.subr.mxu0 0.0
    %6816 = vmatpush1.msra.mxu0 %v6488
    %6817 = vmatprep.subr.mxu0 0.0
    %6818 = vmatpush1.msra.mxu0 %v6487
    %6819 = vmatprep.subr.mxu0 0.0
    %6820 = vmatpush1.msra.mxu0 %v6486
    %6821 = vmatprep.subr.mxu0 0.0
    %6822 = vmatpush2.msra.mxu0 %v6517
    %6823 = vmatprep.subr.mxu0 0.0
    %6824 = vmatpush2.msra.mxu0 %v6516
    %6825 = vmatprep.subr.mxu0 0.0
    %6826 = vmatpush2.msra.mxu0 %v6515
    %6827 = vmatprep.subr.mxu0 0.0
    %6828 = vmatpush2.msra.mxu0 %v6514
    %6829 = vmatprep.subr.mxu0 0.0
    %6830 = vmatpush2.msra.mxu0 %v6513
    %6831 = vmatprep.subr.mxu0 0.0
    %6832 = vmatpush2.msra.mxu0 %v6512
    %6833 = vmatprep.subr.mxu0 0.0
    %6834 = vmatpush2.msra.mxu0 %v6511
    %6835 = vmatprep.subr.mxu0 0.0
    %6836 = vmatpush2.msra.mxu0 %v6510
    %6837 = vmatprep.subr.mxu0 0.0
    %6838 = vmatpush2.msra.mxu0 %v6509
    %6839 = vmatprep.subr.mxu0 0.0
    %6840 = vmatpush2.msra.mxu0 %v6508
    %6841 = vmatprep.subr.mxu0 0.0
    %6842 = vmatpush2.msra.mxu0 %v6507
    %6843 = vmatprep.subr.mxu0 0.0
    %6844 = vmatpush2.msra.mxu0 %v6506
    %6845 = vmatprep.subr.mxu0 0.0
    %6846 = vmatpush2.msra.mxu0 %v6505
    %6847 = vmatprep.subr.mxu0 0.0
    %6848 = vmatpush2.msra.mxu0 %v6504
    %6849 = vmatprep.subr.mxu0 0.0
    %6850 = vmatpush2.msra.mxu0 %v6503
    %6851 = vmatprep.subr.mxu0 0.0
    %6852 = vmatpush2.msra.mxu0 %v6502
    %6853 = vmatprep.mubr.f32.mxu0 %v6786
    %6854 = vmatmul.mubr.f32.gmra.mxu0 %v6785
    %v6855 = vpop.f32.mrf.mxu0
    %v6856 = vadd.f32 0.0, %v6855
    %v6857 = vpop.f32.mrf.mxu0
    %6858 = vdwg.mxu0
    %v6859 = vadd.f32 %v6700, %v6856
    %v6864 = vrot.slane %v6187, 1
    %v6865 = vrot.slane %v6189, 1
    %v6866 = vrot.slane %v6191, 1
    %v6867 = vrot.slane %v6193, 1
    %v6872 = vadd.f32 %v6058, %v6864
    %v6873 = vadd.f32 %v6060, %v6865
    %v6874 = vadd.f32 %v6062, %v6866
    %v6875 = vadd.f32 %v6064, %v6867
    %v6880 = vrot.slane %v6316, 2
    %v6881 = vrot.slane %v6318, 2
    %v6882 = vrot.slane %v6320, 2
    %v6883 = vrot.slane %v6322, 2
    %v6888 = vadd.f32 %v6872, %v6880
    %v6889 = vadd.f32 %v6873, %v6881
    %v6890 = vadd.f32 %v6874, %v6882
    %v6891 = vadd.f32 %v6875, %v6883
    %v6896 = vrot.slane %v6445, 3
    %v6897 = vrot.slane %v6447, 3
    %v6898 = vrot.slane %v6449, 3
    %v6899 = vrot.slane %v6451, 3
    %v6904 = vadd.f32 %v6888, %v6896
    %v6905 = vadd.f32 %v6889, %v6897
    %v6906 = vadd.f32 %v6890, %v6898
    %v6907 = vadd.f32 %v6891, %v6899
    %v6908 = vrot.slane %v6453, 4
    %v6909 = vlaneseq
    %v6910 = vshrl.u32 %v6909, 7
    %v6911 = vsub.s32 0, %v6910
    %v6912 = vrot.slane %v6908, %v6911
    %v6913 = vlaneseq
    %v6914 = vshrl.u32 %v6913, 7
    %v6915 = vsub.s32 1, %v6914
    %v6916 = vrot.slane %v6908, %v6915
    %v6919 = vadd.f32 %v6904, %v6912
    %v6920 = vadd.f32 %v6905, %v6916
    %v6921 = vadd.f32 %v6906, %v6912
    %v6922 = vadd.f32 %v6907, %v6916
    %v6923 = vmax.f32 %v6919, 0.0
    %v6924 = vmax.f32 %v6920, 0.0
    %v6925 = vmax.f32 %v6921, 0.0
    %v6926 = vmax.f32 %v6922, 0.0
    %vm6927 = vcmask 1044480
    %v6928 = vsel %vm6927, %v6923, -inf
    %v6929 = vrot.slane %v6928, 4
    %v6930 = vmax.f32 %v6928, %v6929
    %v6931 = vrot.slane %v6930, 2
    %v6932 = vmax.f32 %v6930, %v6931
    %v6933 = vrot.slane %v6932, 1
    %v6934 = vmax.f32 %v6932, %v6933
    %v6935 = vsel %vm6927, %v6924, -inf
    %v6936 = vrot.slane %v6935, 4
    %v6937 = vmax.f32 %v6935, %v6936
    %v6938 = vrot.slane %v6937, 2
    %v6939 = vmax.f32 %v6937, %v6938
    %v6940 = vrot.slane %v6939, 1
    %v6941 = vmax.f32 %v6939, %v6940
    %v6942 = vsel %vm6927, %v6925, -inf
    %v6943 = vrot.slane %v6942, 4
    %v6944 = vmax.f32 %v6942, %v6943
    %v6945 = vrot.slane %v6944, 2
    %v6946 = vmax.f32 %v6944, %v6945
    %v6947 = vrot.slane %v6946, 1
    %v6948 = vmax.f32 %v6946, %v6947
    %v6949 = vsel %vm6927, %v6926, -inf
    %v6950 = vrot.slane %v6949, 4
    %v6951 = vmax.f32 %v6949, %v6950
    %v6952 = vrot.slane %v6951, 2
    %v6953 = vmax.f32 %v6951, %v6952
    %v6954 = vrot.slane %v6953, 1
    %v6955 = vmax.f32 %v6953, %v6954
    %v6960 = vsel %vm6619, %v6948, %v6934
    %v6961 = vsel %vm6619, %v6955, %v6941
    %6964 = vmatprep.subr.mxu0 0.0
    %6965 = vmatpush1.msra.mxu0 %v6533
    %6966 = vmatprep.subr.mxu0 0.0
    %6967 = vmatpush1.msra.mxu0 %v6532
    %6968 = vmatprep.subr.mxu0 0.0
    %6969 = vmatpush1.msra.mxu0 %v6531
    %6970 = vmatprep.subr.mxu0 0.0
    %6971 = vmatpush1.msra.mxu0 %v6530
    %6972 = vmatprep.subr.mxu0 0.0
    %6973 = vmatpush1.msra.mxu0 %v6529
    %6974 = vmatprep.subr.mxu0 0.0
    %6975 = vmatpush1.msra.mxu0 %v6528
    %6976 = vmatprep.subr.mxu0 0.0
    %6977 = vmatpush1.msra.mxu0 %v6527
    %6978 = vmatprep.subr.mxu0 0.0
    %6979 = vmatpush1.msra.mxu0 %v6526
    %6980 = vmatprep.subr.mxu0 0.0
    %6981 = vmatpush1.msra.mxu0 %v6525
    %6982 = vmatprep.subr.mxu0 0.0
    %6983 = vmatpush1.msra.mxu0 %v6524
    %6984 = vmatprep.subr.mxu0 0.0
    %6985 = vmatpush1.msra.mxu0 %v6523
    %6986 = vmatprep.subr.mxu0 0.0
    %6987 = vmatpush1.msra.mxu0 %v6522
    %6988 = vmatprep.subr.mxu0 0.0
    %6989 = vmatpush1.msra.mxu0 %v6521
    %6990 = vmatprep.subr.mxu0 0.0
    %6991 = vmatpush1.msra.mxu0 %v6520
    %6992 = vmatprep.subr.mxu0 0.0
    %6993 = vmatpush1.msra.mxu0 %v6519
    %6994 = vmatprep.subr.mxu0 0.0
    %6995 = vmatpush1.msra.mxu0 %v6518
    %6996 = vmatprep.subr.mxu0 0.0
    %6997 = vmatpush2.msra.mxu0 %v6549
    %6998 = vmatprep.subr.mxu0 0.0
    %6999 = vmatpush2.msra.mxu0 %v6548
    %7000 = vmatprep.subr.mxu0 0.0
    %7001 = vmatpush2.msra.mxu0 %v6547
    %7002 = vmatprep.subr.mxu0 0.0
    %7003 = vmatpush2.msra.mxu0 %v6546
    %7004 = vmatprep.subr.mxu0 0.0
    %7005 = vmatpush2.msra.mxu0 %v6545
    %7006 = vmatprep.subr.mxu0 0.0
    %7007 = vmatpush2.msra.mxu0 %v6544
    %7008 = vmatprep.subr.mxu0 0.0
    %7009 = vmatpush2.msra.mxu0 %v6543
    %7010 = vmatprep.subr.mxu0 0.0
    %7011 = vmatpush2.msra.mxu0 %v6542
    %7012 = vmatprep.subr.mxu0 0.0
    %7013 = vmatpush2.msra.mxu0 %v6541
    %7014 = vmatprep.subr.mxu0 0.0
    %7015 = vmatpush2.msra.mxu0 %v6540
    %7016 = vmatprep.subr.mxu0 0.0
    %7017 = vmatpush2.msra.mxu0 %v6539
    %7018 = vmatprep.subr.mxu0 0.0
    %7019 = vmatpush2.msra.mxu0 %v6538
    %7020 = vmatprep.subr.mxu0 0.0
    %7021 = vmatpush2.msra.mxu0 %v6537
    %7022 = vmatprep.subr.mxu0 0.0
    %7023 = vmatpush2.msra.mxu0 %v6536
    %7024 = vmatprep.subr.mxu0 0.0
    %7025 = vmatpush2.msra.mxu0 %v6535
    %7026 = vmatprep.subr.mxu0 0.0
    %7027 = vmatpush2.msra.mxu0 %v6534
    %7028 = vmatprep.mubr.f32.mxu0 %v6961
    %7029 = vmatmul.mubr.f32.gmra.mxu0 %v6960
    %v7030 = vpop.f32.mrf.mxu0
    %v7031 = vadd.f32 0.0, %v7030
    %v7032 = vpop.f32.mrf.mxu0
    %7033 = vdwg.mxu0
    %v7034 = vadd.f32 %v6859, %v7031
    %vm7035 = vcmask 25600
    %v7036 = vsel %vm7035, %v7034, -inf
    %7037 = vmax.xlane.f32.xlu0 %v7036
    %v7038 = vpop.xlane.xlu0 %7037
    %v7039 = vsub.f32 %v7034, %v7038
    %v7040 = vmul.f32 %v7039, 1.442695
    %v7041 = vpow.pop %v7040
    %v7042 = vsel %vm7035, %v7041, 0.0
    %7043 = vadd.xlane.f32.xlu0 %v7042
    %v7044 = vpop.xlane.xlu0 %7043
    %v7045 = vrcp.pop %v7044
    %v7046 = vmul.f32 %v7041, %v7045
    %7047 = vst.msk [vmem:[#allocation10] sm:$0x3] %vm7035, %v7046
    // Predicated region
    $region38: #{tpu_custom_call.1} parent=1 // pred_check
      _
    $region39: #{tpu_custom_call.1} parent=1 // pred_check_branch
      %7049 = sbr.rel (0) target = $region41
    $region40: #{tpu_custom_call.1} parent=1 // pred_region
      %s7051 = ssub.s32 32, 32
      %7052 = vsyncadd [#allocation4], %s7051
      %s7054 = sshll.u32 [#allocation10], 4
      %s7055 = int_to_ptr.vmem [resolvable:$true] %s7054
      %7057 = dma.vmem_to_hbm [thread:$0]  %s7055, 32, %s5, [#allocation4]
    $region41: #{tpu_custom_call.1} parent=1 // pred_fallthru
      _
    // Predicated region
    $region42: #{tpu_custom_call.1} parent=1 // pred_check
      _
    $region43: #{tpu_custom_call.1} parent=1 // pred_check_branch
      %7059 = sbr.rel (0) target = $region45
    $region44: #{tpu_custom_call.1} parent=1 // pred_region
      %7060 = dma.done [#allocation4], 32
    $region45: #{tpu_custom_call.1} parent=1 // pred_fallthru
      _
    %7061 = vsyncpa [#allocation3], 1
    %7062 = vsyncpa [#allocation6], 1
    %7063 = vsyncpa [#allocation9], 1
    %7064 = vsyncpa [#allocation4], 1

</llo_original>
